<compile_context>
chip_gen: v6e
topology: v6e:2x2x1
jax: 0.10.0
libtpu: 0.0.40
codegen_flags: <defaults>
</compile_context>

<pallas_src>
import jax
import jax.numpy as jnp
from jax import lax
from jax.experimental import pallas as pl
from jax.experimental.pallas import tpu as pltpu

# ---------------- config (small, but structurally identical to the module) ---
TRUNK_DIM = 128
HIDDEN_DIMS = [128, 128, 128, 128]       # analogue of [768, 512, 384, 256]
ACTION_DIM = 4
HEAD_PAD = 128                           # fused mean||log_std head, lane-padded
LOG_STD_MIN = -10.0
LOG_STD_MAX = 2.0
LN_EPS = 1e-5                            # nn.LayerNorm default eps
BATCH = 256
TILE_B = 128                             # batch tile -> grid of 2 parallel steps


def _layer(h_bf16, w_ref, b_ref, g_ref, beta_ref):
    """Linear(bf16 MXU, f32 acc) + LayerNorm(f32) + ReLU(f32) -> bf16."""
    y = jnp.dot(h_bf16, w_ref[...], preferred_element_type=jnp.float32)
    y = y + b_ref[...]
    # Two independent reductions (E[y], E[y^2]) instead of mean-then-centered.
    mu = jnp.mean(y, axis=-1, keepdims=True)
    ms = jnp.mean(y * y, axis=-1, keepdims=True)
    var = jnp.maximum(ms - mu * mu, 0.0)
    y = (y - mu) * lax.rsqrt(var + LN_EPS)
    y = y * g_ref[...] + beta_ref[...]
    y = jnp.maximum(y, 0.0)              # ReLU
    return y.astype(jnp.bfloat16)        # bf16 operand for the next MXU pass


def actor_kernel(x_ref,
                 w0, b0, g0, be0,
                 w1, b1, g1, be1,
                 w2, b2, g2, be2,
                 w3, b3, g3, be3,
                 wh, bh,
                 head_ref):
    h = x_ref[...].astype(jnp.bfloat16)
    for (w, b, g, be) in ((w0, b0, g0, be0),
                          (w1, b1, g1, be1),
                          (w2, b2, g2, be2),
                          (w3, b3, g3, be3)):
        h = _layer(h, w, b, g, be)

    # Fused heads: columns [0:A) = mean, [A:2A) = log_std, rest zero padding.
    out = jnp.dot(h, wh[...], preferred_element_type=jnp.float32) + bh[...]
    lane = lax.broadcasted_iota(jnp.int32, out.shape, 1)
    is_logstd = jnp.logical_and(lane >= ACTION_DIM, lane < 2 * ACTION_DIM)
    out = jnp.where(is_logstd, jnp.clip(out, LOG_STD_MIN, LOG_STD_MAX), out)
    head_ref[...] = out.astype(head_ref.dtype)


def actor_forward(x, kernel_params):
    """kernel_params: [w0,b0,g0,be0, ..., w3,b3,g3,be3, wh,bh] (weights bf16)."""
    B, _ = x.shape
    assert B % TILE_B == 0
    n_grid = B // TILE_B

    # input tile walks over batch; all parameters: full (constant) block.
    in_specs = [pl.BlockSpec((TILE_B, TRUNK_DIM), lambda i: (i, 0))]
    for p in kernel_params:
        assert p.ndim == 2
        in_specs.append(pl.BlockSpec(p.shape, lambda i: (0, 0)))

    out_specs = pl.BlockSpec((TILE_B, HEAD_PAD), lambda i: (i, 0))
    out_shape = jax.ShapeDtypeStruct((B, HEAD_PAD), jnp.float32)

    # Advisory cost estimate so XLA can schedule/overlap this small call.
    mm_dims = [TRUNK_DIM] + HIDDEN_DIMS
    flops = 2 * B * (sum(mm_dims[i] * mm_dims[i + 1]
                         for i in range(len(mm_dims) - 1))
                     + HIDDEN_DIMS[-1] * HEAD_PAD)
    bytes_accessed = (x.size * x.dtype.itemsize
                      + sum(int(p.size) * p.dtype.itemsize for p in kernel_params)
                      + B * HEAD_PAD * 4)
    transcendentals = B * len(HIDDEN_DIMS)   # one rsqrt per row per LN

    head = pl.pallas_call(
        actor_kernel,
        out_shape=out_shape,
        grid_spec=pltpu.PrefetchScalarGridSpec(
            num_scalar_prefetch=0,
            grid=(n_grid,),
            in_specs=in_specs,
            out_specs=out_specs,
        ),
        compiler_params=pltpu.CompilerParams(
            dimension_semantics=("parallel",)),
        cost_estimate=pl.CostEstimate(
            flops=flops,
            transcendentals=transcendentals,
            bytes_accessed=bytes_accessed),
    )(x, *kernel_params)

    mean = head[:, :ACTION_DIM]
    log_std = head[:, ACTION_DIM:2 * ACTION_DIM]
    return mean, log_std


# ----------------------------- parameter helpers -----------------------------
def make_params(key):
    """f32 master parameters (same shapes the PyTorch module would create)."""
    trunk = []
    prev = TRUNK_DIM
    for hdim in HIDDEN_DIMS:
        key, kw = jax.random.split(key)
        w = jax.random.normal(kw, (prev, hdim), jnp.float32) / jnp.sqrt(prev)
        b = jnp.full((1, hdim), 0.01, jnp.float32)
        gamma = jnp.ones((1, hdim), jnp.float32)
        beta = jnp.zeros((1, hdim), jnp.float32)
        trunk.append((w, b, gamma, beta))
        prev = hdim
    key, km = jax.random.split(key)
    wm = jax.random.normal(km, (prev, ACTION_DIM), jnp.float32) / jnp.sqrt(prev)
    bm = jnp.zeros((1, ACTION_DIM), jnp.float32)
    key, ks = jax.random.split(key)
    ws = jax.random.normal(ks, (prev, ACTION_DIM), jnp.float32) / jnp.sqrt(prev)
    bs = jnp.zeros((1, ACTION_DIM), jnp.float32)
    return trunk, (wm, bm), (ws, bs)


def pack_kernel_params(trunk, mean_head, logstd_head):
    """bf16 weights + f32 vectors + fused, lane-padded head for the kernel."""
    kparams = []
    for (w, b, g, be) in trunk:
        kparams += [w.astype(jnp.bfloat16), b, g, be]
    wm, bm = mean_head
    ws, bs = logstd_head
    prev = wm.shape[0]
    wh = jnp.zeros((prev, HEAD_PAD), jnp.float32)
    wh = wh.at[:, :ACTION_DIM].set(wm).at[:, ACTION_DIM:2 * ACTION_DIM].set(ws)
    bh = jnp.zeros((1, HEAD_PAD), jnp.float32)
    bh = bh.at[:, :ACTION_DIM].set(bm).at[:, ACTION_DIM:2 * ACTION_DIM].set(bs)
    kparams += [wh.astype(jnp.bfloat16), bh]
    return kparams


# ----------------------------- pure-JAX references ---------------------------
def actor_ref_f32(x, trunk, mean_head, logstd_head):
    """Exact PyTorch-semantics reference in f32 (loose tolerance vs bf16 MXU)."""
    h = x
    for (w, b, g, be) in trunk:
        h = h @ w + b
        mu = jnp.mean(h, axis=-1, keepdims=True)
        var = jnp.mean((h - mu) ** 2, axis=-1, keepdims=True)
        h = (h - mu) / jnp.sqrt(var + LN_EPS) * g + be
        h = jnp.maximum(h, 0.0)
    wm, bm = mean_head
    ws, bs = logstd_head
    mean = h @ wm + bm
    log_std = jnp.clip(h @ ws + bs, LOG_STD_MIN, LOG_STD_MAX)
    return mean, log_std


def actor_ref_bf16(x, trunk, wh_bf16, bh):
    """Mirror of the kernel math (bf16 MXU operands, f32 LN) for a tight check."""
    h = x.astype(jnp.bfloat16)
    for (w, b, g, be) in trunk:
        y = jnp.dot(h, w.astype(jnp.bfloat16),
                    preferred_element_type=jnp.float32) + b
        mu = jnp.mean(y, axis=-1, keepdims=True)
        var = jnp.maximum(jnp.mean(y * y, axis=-1, keepdims=True) - mu * mu, 0.0)
        y = (y - mu) * lax.rsqrt(var + LN_EPS)
        y = y * g + be
        h = jnp.maximum(y, 0.0).astype(jnp.bfloat16)
    out = jnp.dot(h, wh_bf16, preferred_element_type=jnp.float32) + bh
    mean = out[:, :ACTION_DIM]
    log_std = jnp.clip(out[:, ACTION_DIM:2 * ACTION_DIM], LOG_STD_MIN, LOG_STD_MAX)
    return mean, log_std


# TODO(synk): the dict-observation concat in forward() and the Gaussian
# tanh-squash sampling in Actor.sample() are host-side glue, not part of the
# fused MLP forward, and are left outside the kernel.

if __name__ == "__main__":
    key = jax.random.PRNGKey(0)
    key, kx = jax.random.split(key)
    x = jax.random.normal(kx, (BATCH, TRUNK_DIM), jnp.float32)

    trunk, mean_head, logstd_head = make_params(key)
    kparams = pack_kernel_params(trunk, mean_head, logstd_head)

    mean, log_std = actor_forward(x, kparams)
    jax.block_until_ready((mean, log_std))

    assert mean.shape == (BATCH, ACTION_DIM)
    assert log_std.shape == (BATCH, ACTION_DIM)

    # Tight check against the bf16-MXU mirror reference.
    m_bf, ls_bf = actor_ref_bf16(x, trunk, kparams[-2], kparams[-1])
    assert jnp.allclose(mean, m_bf, atol=2e-3, rtol=2e-3)
    assert jnp.allclose(log_std, ls_bf, atol=2e-3, rtol=2e-3)

    # Loose semantic check against the exact f32 PyTorch-style reference
    # (difference is only bf16 MXU operand rounding).
    m_f32, ls_f32 = actor_ref_f32(x, trunk, mean_head, logstd_head)
    assert jnp.allclose(mean, m_f32, atol=1e-1, rtol=1e-1)
    assert jnp.allclose(log_std, ls_f32, atol=1e-1, rtol=1e-1)

    assert bool(jnp.all(log_std >= LOG_STD_MIN)) and bool(jnp.all(log_std <= LOG_STD_MAX))

    print("KERNEL_OK")
</pallas_src>

<mosaic_0001>
module attributes {stable_mosaic.version = 11 : i64} {
  func.func @actor_kernel(%arg0: i32, %arg1: memref<128x128xf32, #tpu.memory_space<vmem>>, %arg2: memref<128x128xbf16, #tpu.memory_space<vmem>>, %arg3: memref<1x128xf32, #tpu.memory_space<vmem>>, %arg4: memref<1x128xf32, #tpu.memory_space<vmem>>, %arg5: memref<1x128xf32, #tpu.memory_space<vmem>>, %arg6: memref<128x128xbf16, #tpu.memory_space<vmem>>, %arg7: memref<1x128xf32, #tpu.memory_space<vmem>>, %arg8: memref<1x128xf32, #tpu.memory_space<vmem>>, %arg9: memref<1x128xf32, #tpu.memory_space<vmem>>, %arg10: memref<128x128xbf16, #tpu.memory_space<vmem>>, %arg11: memref<1x128xf32, #tpu.memory_space<vmem>>, %arg12: memref<1x128xf32, #tpu.memory_space<vmem>>, %arg13: memref<1x128xf32, #tpu.memory_space<vmem>>, %arg14: memref<128x128xbf16, #tpu.memory_space<vmem>>, %arg15: memref<1x128xf32, #tpu.memory_space<vmem>>, %arg16: memref<1x128xf32, #tpu.memory_space<vmem>>, %arg17: memref<1x128xf32, #tpu.memory_space<vmem>>, %arg18: memref<128x128xbf16, #tpu.memory_space<vmem>>, %arg19: memref<1x128xf32, #tpu.memory_space<vmem>>, %arg20: memref<128x128xf32, #tpu.memory_space<vmem>>) attributes {dimension_semantics = [#tpu.dimension_semantics<parallel>], iteration_bounds = array<i64: 2>, scalar_prefetch = 0 : i64, scratch_operands = 0 : i64, tpu.core_type = #tpu.core_type<tc>, window_params = [{transform_indices = @transform_0, window_bounds = array<i64: 128, 128>}, {pipeline_mode = #tpu.pipeline_mode<synchronous>, transform_indices = @transform_1, window_bounds = array<i64: 128, 128>}, {pipeline_mode = #tpu.pipeline_mode<synchronous>, transform_indices = @transform_2, window_bounds = array<i64: 1, 128>}, {pipeline_mode = #tpu.pipeline_mode<synchronous>, transform_indices = @transform_3, window_bounds = array<i64: 1, 128>}, {pipeline_mode = #tpu.pipeline_mode<synchronous>, transform_indices = @transform_4, window_bounds = array<i64: 1, 128>}, {pipeline_mode = #tpu.pipeline_mode<synchronous>, transform_indices = @transform_5, window_bounds = array<i64: 128, 128>}, {pipeline_mode = #tpu.pipeline_mode<synchronous>, transform_indices = @transform_6, window_bounds = array<i64: 1, 128>}, {pipeline_mode = #tpu.pipeline_mode<synchronous>, transform_indices = @transform_7, window_bounds = array<i64: 1, 128>}, {pipeline_mode = #tpu.pipeline_mode<synchronous>, transform_indices = @transform_8, window_bounds = array<i64: 1, 128>}, {pipeline_mode = #tpu.pipeline_mode<synchronous>, transform_indices = @transform_9, window_bounds = array<i64: 128, 128>}, {pipeline_mode = #tpu.pipeline_mode<synchronous>, transform_indices = @transform_10, window_bounds = array<i64: 1, 128>}, {pipeline_mode = #tpu.pipeline_mode<synchronous>, transform_indices = @transform_11, window_bounds = array<i64: 1, 128>}, {pipeline_mode = #tpu.pipeline_mode<synchronous>, transform_indices = @transform_12, window_bounds = array<i64: 1, 128>}, {pipeline_mode = #tpu.pipeline_mode<synchronous>, transform_indices = @transform_13, window_bounds = array<i64: 128, 128>}, {pipeline_mode = #tpu.pipeline_mode<synchronous>, transform_indices = @transform_14, window_bounds = array<i64: 1, 128>}, {pipeline_mode = #tpu.pipeline_mode<synchronous>, transform_indices = @transform_15, window_bounds = array<i64: 1, 128>}, {pipeline_mode = #tpu.pipeline_mode<synchronous>, transform_indices = @transform_16, window_bounds = array<i64: 1, 128>}, {pipeline_mode = #tpu.pipeline_mode<synchronous>, transform_indices = @transform_17, window_bounds = array<i64: 128, 128>}, {pipeline_mode = #tpu.pipeline_mode<synchronous>, transform_indices = @transform_18, window_bounds = array<i64: 1, 128>}, {transform_indices = @transform_19, window_bounds = array<i64: 128, 128>}]} {
    %c0 = arith.constant 0 : index
    %c0_0 = arith.constant 0 : index
    %0 = vector.load %arg1[%c0, %c0_0] : memref<128x128xf32, #tpu.memory_space<vmem>>, vector<128x128xf32>
    %1 = arith.truncf %0 : vector<128x128xf32> to vector<128x128xbf16>
    %c0_1 = arith.constant 0 : index
    %c0_2 = arith.constant 0 : index
    %2 = vector.load %arg2[%c0_1, %c0_2] : memref<128x128xbf16, #tpu.memory_space<vmem>>, vector<128x128xbf16>
    %cst = arith.constant dense<0.000000e+00> : vector<128x128xf32>
    %3 = tpu.matmul %1, %2, %cst {dimension_numbers = #tpu.dot_dimension_numbers<[1], [0], [0], [1], [0, 0, 1, 1], [], []>} : vector<128x128xbf16>, vector<128x128xbf16>, vector<128x128xf32> -> vector<128x128xf32>
    %c0_3 = arith.constant 0 : index
    %c0_4 = arith.constant 0 : index
    %4 = vector.load %arg3[%c0_3, %c0_4] : memref<1x128xf32, #tpu.memory_space<vmem>>, vector<1x128xf32>
    %5 = vector.broadcast %4 : vector<1x128xf32> to vector<128x128xf32>
    %6 = arith.addf %3, %5 : vector<128x128xf32>
    %cst_5 = arith.constant dense<0.000000e+00> : vector<128xf32>
    %7 = vector.multi_reduction <add>, %6, %cst_5 [1] : vector<128x128xf32> to vector<128xf32>
    %8 = vector.shape_cast %7 : vector<128xf32> to vector<128x1xf32>
    %cst_6 = arith.constant 1.280000e+02 : f32
    %9 = vector.broadcast %cst_6 : f32 to vector<128x1xf32>
    %10 = arith.divf %8, %9 : vector<128x1xf32>
    %11 = arith.mulf %6, %6 : vector<128x128xf32>
    %cst_7 = arith.constant dense<0.000000e+00> : vector<128xf32>
    %12 = vector.multi_reduction <add>, %11, %cst_7 [1] : vector<128x128xf32> to vector<128xf32>
    %13 = vector.shape_cast %12 : vector<128xf32> to vector<128x1xf32>
    %cst_8 = arith.constant 1.280000e+02 : f32
    %14 = vector.broadcast %cst_8 : f32 to vector<128x1xf32>
    %15 = arith.divf %13, %14 : vector<128x1xf32>
    %16 = arith.mulf %10, %10 : vector<128x1xf32>
    %17 = arith.subf %15, %16 : vector<128x1xf32>
    %cst_9 = arith.constant 0.000000e+00 : f32
    %18 = vector.broadcast %cst_9 : f32 to vector<128x1xf32>
    %19 = arith.maximumf %17, %18 : vector<128x1xf32>
    %20 = vector.broadcast %10 : vector<128x1xf32> to vector<128x128xf32>
    %21 = arith.subf %6, %20 : vector<128x128xf32>
    %cst_10 = arith.constant 9.99999974E-6 : f32
    %22 = vector.broadcast %cst_10 : f32 to vector<128x1xf32>
    %23 = arith.addf %19, %22 : vector<128x1xf32>
    %24 = math.rsqrt %23 : vector<128x1xf32>
    %25 = vector.broadcast %24 : vector<128x1xf32> to vector<128x128xf32>
    %26 = arith.mulf %21, %25 : vector<128x128xf32>
    %c0_11 = arith.constant 0 : index
    %c0_12 = arith.constant 0 : index
    %27 = vector.load %arg4[%c0_11, %c0_12] : memref<1x128xf32, #tpu.memory_space<vmem>>, vector<1x128xf32>
    %28 = vector.broadcast %27 : vector<1x128xf32> to vector<128x128xf32>
    %29 = arith.mulf %26, %28 : vector<128x128xf32>
    %c0_13 = arith.constant 0 : index
    %c0_14 = arith.constant 0 : index
    %30 = vector.load %arg5[%c0_13, %c0_14] : memref<1x128xf32, #tpu.memory_space<vmem>>, vector<1x128xf32>
    %31 = vector.broadcast %30 : vector<1x128xf32> to vector<128x128xf32>
    %32 = arith.addf %29, %31 : vector<128x128xf32>
    %cst_15 = arith.constant 0.000000e+00 : f32
    %33 = vector.broadcast %cst_15 : f32 to vector<128x128xf32>
    %34 = arith.maximumf %32, %33 : vector<128x128xf32>
    %35 = arith.truncf %34 : vector<128x128xf32> to vector<128x128xbf16>
    %c0_16 = arith.constant 0 : index
    %c0_17 = arith.constant 0 : index
    %36 = vector.load %arg6[%c0_16, %c0_17] : memref<128x128xbf16, #tpu.memory_space<vmem>>, vector<128x128xbf16>
    %cst_18 = arith.constant dense<0.000000e+00> : vector<128x128xf32>
    %37 = tpu.matmul %35, %36, %cst_18 {dimension_numbers = #tpu.dot_dimension_numbers<[1], [0], [0], [1], [0, 0, 1, 1], [], []>} : vector<128x128xbf16>, vector<128x128xbf16>, vector<128x128xf32> -> vector<128x128xf32>
    %c0_19 = arith.constant 0 : index
    %c0_20 = arith.constant 0 : index
    %38 = vector.load %arg7[%c0_19, %c0_20] : memref<1x128xf32, #tpu.memory_space<vmem>>, vector<1x128xf32>
    %39 = vector.broadcast %38 : vector<1x128xf32> to vector<128x128xf32>
    %40 = arith.addf %37, %39 : vector<128x128xf32>
    %cst_21 = arith.constant dense<0.000000e+00> : vector<128xf32>
    %41 = vector.multi_reduction <add>, %40, %cst_21 [1] : vector<128x128xf32> to vector<128xf32>
    %42 = vector.shape_cast %41 : vector<128xf32> to vector<128x1xf32>
    %cst_22 = arith.constant 1.280000e+02 : f32
    %43 = vector.broadcast %cst_22 : f32 to vector<128x1xf32>
    %44 = arith.divf %42, %43 : vector<128x1xf32>
    %45 = arith.mulf %40, %40 : vector<128x128xf32>
    %cst_23 = arith.constant dense<0.000000e+00> : vector<128xf32>
    %46 = vector.multi_reduction <add>, %45, %cst_23 [1] : vector<128x128xf32> to vector<128xf32>
    %47 = vector.shape_cast %46 : vector<128xf32> to vector<128x1xf32>
    %cst_24 = arith.constant 1.280000e+02 : f32
    %48 = vector.broadcast %cst_24 : f32 to vector<128x1xf32>
    %49 = arith.divf %47, %48 : vector<128x1xf32>
    %50 = arith.mulf %44, %44 : vector<128x1xf32>
    %51 = arith.subf %49, %50 : vector<128x1xf32>
    %cst_25 = arith.constant 0.000000e+00 : f32
    %52 = vector.broadcast %cst_25 : f32 to vector<128x1xf32>
    %53 = arith.maximumf %51, %52 : vector<128x1xf32>
    %54 = vector.broadcast %44 : vector<128x1xf32> to vector<128x128xf32>
    %55 = arith.subf %40, %54 : vector<128x128xf32>
    %cst_26 = arith.constant 9.99999974E-6 : f32
    %56 = vector.broadcast %cst_26 : f32 to vector<128x1xf32>
    %57 = arith.addf %53, %56 : vector<128x1xf32>
    %58 = math.rsqrt %57 : vector<128x1xf32>
    %59 = vector.broadcast %58 : vector<128x1xf32> to vector<128x128xf32>
    %60 = arith.mulf %55, %59 : vector<128x128xf32>
    %c0_27 = arith.constant 0 : index
    %c0_28 = arith.constant 0 : index
    %61 = vector.load %arg8[%c0_27, %c0_28] : memref<1x128xf32, #tpu.memory_space<vmem>>, vector<1x128xf32>
    %62 = vector.broadcast %61 : vector<1x128xf32> to vector<128x128xf32>
    %63 = arith.mulf %60, %62 : vector<128x128xf32>
    %c0_29 = arith.constant 0 : index
    %c0_30 = arith.constant 0 : index
    %64 = vector.load %arg9[%c0_29, %c0_30] : memref<1x128xf32, #tpu.memory_space<vmem>>, vector<1x128xf32>
    %65 = vector.broadcast %64 : vector<1x128xf32> to vector<128x128xf32>
    %66 = arith.addf %63, %65 : vector<128x128xf32>
    %cst_31 = arith.constant 0.000000e+00 : f32
    %67 = vector.broadcast %cst_31 : f32 to vector<128x128xf32>
    %68 = arith.maximumf %66, %67 : vector<128x128xf32>
    %69 = arith.truncf %68 : vector<128x128xf32> to vector<128x128xbf16>
    %c0_32 = arith.constant 0 : index
    %c0_33 = arith.constant 0 : index
    %70 = vector.load %arg10[%c0_32, %c0_33] : memref<128x128xbf16, #tpu.memory_space<vmem>>, vector<128x128xbf16>
    %cst_34 = arith.constant dense<0.000000e+00> : vector<128x128xf32>
    %71 = tpu.matmul %69, %70, %cst_34 {dimension_numbers = #tpu.dot_dimension_numbers<[1], [0], [0], [1], [0, 0, 1, 1], [], []>} : vector<128x128xbf16>, vector<128x128xbf16>, vector<128x128xf32> -> vector<128x128xf32>
    %c0_35 = arith.constant 0 : index
    %c0_36 = arith.constant 0 : index
    %72 = vector.load %arg11[%c0_35, %c0_36] : memref<1x128xf32, #tpu.memory_space<vmem>>, vector<1x128xf32>
    %73 = vector.broadcast %72 : vector<1x128xf32> to vector<128x128xf32>
    %74 = arith.addf %71, %73 : vector<128x128xf32>
    %cst_37 = arith.constant dense<0.000000e+00> : vector<128xf32>
    %75 = vector.multi_reduction <add>, %74, %cst_37 [1] : vector<128x128xf32> to vector<128xf32>
    %76 = vector.shape_cast %75 : vector<128xf32> to vector<128x1xf32>
    %cst_38 = arith.constant 1.280000e+02 : f32
    %77 = vector.broadcast %cst_38 : f32 to vector<128x1xf32>
    %78 = arith.divf %76, %77 : vector<128x1xf32>
    %79 = arith.mulf %74, %74 : vector<128x128xf32>
    %cst_39 = arith.constant dense<0.000000e+00> : vector<128xf32>
    %80 = vector.multi_reduction <add>, %79, %cst_39 [1] : vector<128x128xf32> to vector<128xf32>
    %81 = vector.shape_cast %80 : vector<128xf32> to vector<128x1xf32>
    %cst_40 = arith.constant 1.280000e+02 : f32
    %82 = vector.broadcast %cst_40 : f32 to vector<128x1xf32>
    %83 = arith.divf %81, %82 : vector<128x1xf32>
    %84 = arith.mulf %78, %78 : vector<128x1xf32>
    %85 = arith.subf %83, %84 : vector<128x1xf32>
    %cst_41 = arith.constant 0.000000e+00 : f32
    %86 = vector.broadcast %cst_41 : f32 to vector<128x1xf32>
    %87 = arith.maximumf %85, %86 : vector<128x1xf32>
    %88 = vector.broadcast %78 : vector<128x1xf32> to vector<128x128xf32>
    %89 = arith.subf %74, %88 : vector<128x128xf32>
    %cst_42 = arith.constant 9.99999974E-6 : f32
    %90 = vector.broadcast %cst_42 : f32 to vector<128x1xf32>
    %91 = arith.addf %87, %90 : vector<128x1xf32>
    %92 = math.rsqrt %91 : vector<128x1xf32>
    %93 = vector.broadcast %92 : vector<128x1xf32> to vector<128x128xf32>
    %94 = arith.mulf %89, %93 : vector<128x128xf32>
    %c0_43 = arith.constant 0 : index
    %c0_44 = arith.constant 0 : index
    %95 = vector.load %arg12[%c0_43, %c0_44] : memref<1x128xf32, #tpu.memory_space<vmem>>, vector<1x128xf32>
    %96 = vector.broadcast %95 : vector<1x128xf32> to vector<128x128xf32>
    %97 = arith.mulf %94, %96 : vector<128x128xf32>
    %c0_45 = arith.constant 0 : index
    %c0_46 = arith.constant 0 : index
    %98 = vector.load %arg13[%c0_45, %c0_46] : memref<1x128xf32, #tpu.memory_space<vmem>>, vector<1x128xf32>
    %99 = vector.broadcast %98 : vector<1x128xf32> to vector<128x128xf32>
    %100 = arith.addf %97, %99 : vector<128x128xf32>
    %cst_47 = arith.constant 0.000000e+00 : f32
    %101 = vector.broadcast %cst_47 : f32 to vector<128x128xf32>
    %102 = arith.maximumf %100, %101 : vector<128x128xf32>
    %103 = arith.truncf %102 : vector<128x128xf32> to vector<128x128xbf16>
    %c0_48 = arith.constant 0 : index
    %c0_49 = arith.constant 0 : index
    %104 = vector.load %arg14[%c0_48, %c0_49] : memref<128x128xbf16, #tpu.memory_space<vmem>>, vector<128x128xbf16>
    %cst_50 = arith.constant dense<0.000000e+00> : vector<128x128xf32>
    %105 = tpu.matmul %103, %104, %cst_50 {dimension_numbers = #tpu.dot_dimension_numbers<[1], [0], [0], [1], [0, 0, 1, 1], [], []>} : vector<128x128xbf16>, vector<128x128xbf16>, vector<128x128xf32> -> vector<128x128xf32>
    %c0_51 = arith.constant 0 : index
    %c0_52 = arith.constant 0 : index
    %106 = vector.load %arg15[%c0_51, %c0_52] : memref<1x128xf32, #tpu.memory_space<vmem>>, vector<1x128xf32>
    %107 = vector.broadcast %106 : vector<1x128xf32> to vector<128x128xf32>
    %108 = arith.addf %105, %107 : vector<128x128xf32>
    %cst_53 = arith.constant dense<0.000000e+00> : vector<128xf32>
    %109 = vector.multi_reduction <add>, %108, %cst_53 [1] : vector<128x128xf32> to vector<128xf32>
    %110 = vector.shape_cast %109 : vector<128xf32> to vector<128x1xf32>
    %cst_54 = arith.constant 1.280000e+02 : f32
    %111 = vector.broadcast %cst_54 : f32 to vector<128x1xf32>
    %112 = arith.divf %110, %111 : vector<128x1xf32>
    %113 = arith.mulf %108, %108 : vector<128x128xf32>
    %cst_55 = arith.constant dense<0.000000e+00> : vector<128xf32>
    %114 = vector.multi_reduction <add>, %113, %cst_55 [1] : vector<128x128xf32> to vector<128xf32>
    %115 = vector.shape_cast %114 : vector<128xf32> to vector<128x1xf32>
    %cst_56 = arith.constant 1.280000e+02 : f32
    %116 = vector.broadcast %cst_56 : f32 to vector<128x1xf32>
    %117 = arith.divf %115, %116 : vector<128x1xf32>
    %118 = arith.mulf %112, %112 : vector<128x1xf32>
    %119 = arith.subf %117, %118 : vector<128x1xf32>
    %cst_57 = arith.constant 0.000000e+00 : f32
    %120 = vector.broadcast %cst_57 : f32 to vector<128x1xf32>
    %121 = arith.maximumf %119, %120 : vector<128x1xf32>
    %122 = vector.broadcast %112 : vector<128x1xf32> to vector<128x128xf32>
    %123 = arith.subf %108, %122 : vector<128x128xf32>
    %cst_58 = arith.constant 9.99999974E-6 : f32
    %124 = vector.broadcast %cst_58 : f32 to vector<128x1xf32>
    %125 = arith.addf %121, %124 : vector<128x1xf32>
    %126 = math.rsqrt %125 : vector<128x1xf32>
    %127 = vector.broadcast %126 : vector<128x1xf32> to vector<128x128xf32>
    %128 = arith.mulf %123, %127 : vector<128x128xf32>
    %c0_59 = arith.constant 0 : index
    %c0_60 = arith.constant 0 : index
    %129 = vector.load %arg16[%c0_59, %c0_60] : memref<1x128xf32, #tpu.memory_space<vmem>>, vector<1x128xf32>
    %130 = vector.broadcast %129 : vector<1x128xf32> to vector<128x128xf32>
    %131 = arith.mulf %128, %130 : vector<128x128xf32>
    %c0_61 = arith.constant 0 : index
    %c0_62 = arith.constant 0 : index
    %132 = vector.load %arg17[%c0_61, %c0_62] : memref<1x128xf32, #tpu.memory_space<vmem>>, vector<1x128xf32>
    %133 = vector.broadcast %132 : vector<1x128xf32> to vector<128x128xf32>
    %134 = arith.addf %131, %133 : vector<128x128xf32>
    %cst_63 = arith.constant 0.000000e+00 : f32
    %135 = vector.broadcast %cst_63 : f32 to vector<128x128xf32>
    %136 = arith.maximumf %134, %135 : vector<128x128xf32>
    %137 = arith.truncf %136 : vector<128x128xf32> to vector<128x128xbf16>
    %c0_64 = arith.constant 0 : index
    %c0_65 = arith.constant 0 : index
    %138 = vector.load %arg18[%c0_64, %c0_65] : memref<128x128xbf16, #tpu.memory_space<vmem>>, vector<128x128xbf16>
    %cst_66 = arith.constant dense<0.000000e+00> : vector<128x128xf32>
    %139 = tpu.matmul %137, %138, %cst_66 {dimension_numbers = #tpu.dot_dimension_numbers<[1], [0], [0], [1], [0, 0, 1, 1], [], []>} : vector<128x128xbf16>, vector<128x128xbf16>, vector<128x128xf32> -> vector<128x128xf32>
    %c0_67 = arith.constant 0 : index
    %c0_68 = arith.constant 0 : index
    %140 = vector.load %arg19[%c0_67, %c0_68] : memref<1x128xf32, #tpu.memory_space<vmem>>, vector<1x128xf32>
    %141 = vector.broadcast %140 : vector<1x128xf32> to vector<128x128xf32>
    %142 = arith.addf %139, %141 : vector<128x128xf32>
    %143 = tpu.iota {dimensions = array<i32: 1>} : vector<128x128xi32>
    %c4_i32 = arith.constant 4 : i32
    %144 = vector.broadcast %c4_i32 : i32 to vector<128x128xi32>
    %145 = arith.cmpi sge, %143, %144 : vector<128x128xi32>
    %c8_i32 = arith.constant 8 : i32
    %146 = vector.broadcast %c8_i32 : i32 to vector<128x128xi32>
    %147 = arith.cmpi slt, %143, %146 : vector<128x128xi32>
    %148 = arith.andi %145, %147 : vector<128x128xi1>
    %cst_69 = arith.constant -1.000000e+01 : f32
    %cst_70 = arith.constant 2.000000e+00 : f32
    %149 = vector.broadcast %cst_69 : f32 to vector<128x128xf32>
    %150 = arith.maximumf %149, %142 : vector<128x128xf32>
    %151 = vector.broadcast %cst_70 : f32 to vector<128x128xf32>
    %152 = arith.minimumf %151, %150 : vector<128x128xf32>
    %153 = arith.select %148, %152, %142 : vector<128x128xi1>, vector<128x128xf32>
    %c0_71 = arith.constant 0 : index
    %c0_72 = arith.constant 0 : index
    %154 = vector.load %arg20[%c0_71, %c0_72] : memref<128x128xf32, #tpu.memory_space<vmem>>, vector<128x128xf32>
    tpu.vector_store %arg20[%c0_71, %c0_72], %153 {strides = array<i32>} : memref<128x128xf32, #tpu.memory_space<vmem>>, vector<128x128xf32>,
    return
  }
  func.func @transform_0(%arg0: i32) -> (i32, i32) {
    %c0_i32 = arith.constant 0 : i32
    %c0_i32_0 = arith.constant 0 : i32
    return %arg0, %c0_i32 : i32, i32
  }
  func.func @transform_1(%arg0: i32) -> (i32, i32) {
    %c0_i32 = arith.constant 0 : i32
    %c0_i32_0 = arith.constant 0 : i32
    %c0_i32_1 = arith.constant 0 : i32
    return %c0_i32, %c0_i32_0 : i32, i32
  }
  func.func @transform_2(%arg0: i32) -> (i32, i32) {
    %c0_i32 = arith.constant 0 : i32
    %c0_i32_0 = arith.constant 0 : i32
    %c0_i32_1 = arith.constant 0 : i32
    return %c0_i32, %c0_i32_0 : i32, i32
  }
  func.func @transform_3(%arg0: i32) -> (i32, i32) {
    %c0_i32 = arith.constant 0 : i32
    %c0_i32_0 = arith.constant 0 : i32
    %c0_i32_1 = arith.constant 0 : i32
    return %c0_i32, %c0_i32_0 : i32, i32
  }
  func.func @transform_4(%arg0: i32) -> (i32, i32) {
    %c0_i32 = arith.constant 0 : i32
    %c0_i32_0 = arith.constant 0 : i32
    %c0_i32_1 = arith.constant 0 : i32
    return %c0_i32, %c0_i32_0 : i32, i32
  }
  func.func @transform_5(%arg0: i32) -> (i32, i32) {
    %c0_i32 = arith.constant 0 : i32
    %c0_i32_0 = arith.constant 0 : i32
    %c0_i32_1 = arith.constant 0 : i32
    return %c0_i32, %c0_i32_0 : i32, i32
  }
  func.func @transform_6(%arg0: i32) -> (i32, i32) {
    %c0_i32 = arith.constant 0 : i32
    %c0_i32_0 = arith.constant 0 : i32
    %c0_i32_1 = arith.constant 0 : i32
    return %c0_i32, %c0_i32_0 : i32, i32
  }
  func.func @transform_7(%arg0: i32) -> (i32, i32) {
    %c0_i32 = arith.constant 0 : i32
    %c0_i32_0 = arith.constant 0 : i32
    %c0_i32_1 = arith.constant 0 : i32
    return %c0_i32, %c0_i32_0 : i32, i32
  }
  func.func @transform_8(%arg0: i32) -> (i32, i32) {
    %c0_i32 = arith.constant 0 : i32
    %c0_i32_0 = arith.constant 0 : i32
    %c0_i32_1 = arith.constant 0 : i32
    return %c0_i32, %c0_i32_0 : i32, i32
  }
  func.func @transform_9(%arg0: i32) -> (i32, i32) {
    %c0_i32 = arith.constant 0 : i32
    %c0_i32_0 = arith.constant 0 : i32
    %c0_i32_1 = arith.constant 0 : i32
    return %c0_i32, %c0_i32_0 : i32, i32
  }
  func.func @transform_10(%arg0: i32) -> (i32, i32) {
    %c0_i32 = arith.constant 0 : i32
    %c0_i32_0 = arith.constant 0 : i32
    %c0_i32_1 = arith.constant 0 : i32
    return %c0_i32, %c0_i32_0 : i32, i32
  }
  func.func @transform_11(%arg0: i32) -> (i32, i32) {
    %c0_i32 = arith.constant 0 : i32
    %c0_i32_0 = arith.constant 0 : i32
    %c0_i32_1 = arith.constant 0 : i32
    return %c0_i32, %c0_i32_0 : i32, i32
  }
  func.func @transform_12(%arg0: i32) -> (i32, i32) {
    %c0_i32 = arith.constant 0 : i32
    %c0_i32_0 = arith.constant 0 : i32
    %c0_i32_1 = arith.constant 0 : i32
    return %c0_i32, %c0_i32_0 : i32, i32
  }
  func.func @transform_13(%arg0: i32) -> (i32, i32) {
    %c0_i32 = arith.constant 0 : i32
    %c0_i32_0 = arith.constant 0 : i32
    %c0_i32_1 = arith.constant 0 : i32
    return %c0_i32, %c0_i32_0 : i32, i32
  }
  func.func @transform_14(%arg0: i32) -> (i32, i32) {
    %c0_i32 = arith.constant 0 : i32
    %c0_i32_0 = arith.constant 0 : i32
    %c0_i32_1 = arith.constant 0 : i32
    return %c0_i32, %c0_i32_0 : i32, i32
  }
  func.func @transform_15(%arg0: i32) -> (i32, i32) {
    %c0_i32 = arith.constant 0 : i32
    %c0_i32_0 = arith.constant 0 : i32
    %c0_i32_1 = arith.constant 0 : i32
    return %c0_i32, %c0_i32_0 : i32, i32
  }
  func.func @transform_16(%arg0: i32) -> (i32, i32) {
    %c0_i32 = arith.constant 0 : i32
    %c0_i32_0 = arith.constant 0 : i32
    %c0_i32_1 = arith.constant 0 : i32
    return %c0_i32, %c0_i32_0 : i32, i32
  }
  func.func @transform_17(%arg0: i32) -> (i32, i32) {
    %c0_i32 = arith.constant 0 : i32
    %c0_i32_0 = arith.constant 0 : i32
    %c0_i32_1 = arith.constant 0 : i32
    return %c0_i32, %c0_i32_0 : i32, i32
  }
  func.func @transform_18(%arg0: i32) -> (i32, i32) {
    %c0_i32 = arith.constant 0 : i32
    %c0_i32_0 = arith.constant 0 : i32
    %c0_i32_1 = arith.constant 0 : i32
    return %c0_i32, %c0_i32_0 : i32, i32
  }
  func.func @transform_19(%arg0: i32) -> (i32, i32) {
    %c0_i32 = arith.constant 0 : i32
    %c0_i32_0 = arith.constant 0 : i32
    return %arg0, %c0_i32 : i32, i32
  }
}

</mosaic_0001>

<llo_original>
// kernel: tpu_custom_call.1
$region0: #{tpu_custom_call.1}
  #allocation0 [shape = 'u32[]', space=smem, size = 0x4, offset = 0x4, fixed_abs, tag = 'smem constant byte address 0x4 - core index']
  #allocation1 [shape = 'u32[144,128]{1,0:T(1,128)}', space=vmem, size = 0x12000, scoped, tag = 'internal scratch']
  %s0 = inlined_call_operand.hbm [shape: f32[256,128], index: 0, kind: input, shape index: {}]
  %s1 = inlined_call_operand.hbm [shape: bf16[128,128], index: 1, kind: input, shape index: {}]
  %s2 = inlined_call_operand.vmem [shape: f32[1,128], index: 2, kind: input, shape index: {}]
  %s3 = inlined_call_operand.vmem [shape: f32[1,128], index: 3, kind: input, shape index: {}]
  %s4 = inlined_call_operand.vmem [shape: f32[1,128], index: 4, kind: input, shape index: {}]
  %s5 = inlined_call_operand.hbm [shape: bf16[128,128], index: 5, kind: input, shape index: {}]
  %s6 = inlined_call_operand.vmem [shape: f32[1,128], index: 6, kind: input, shape index: {}]
  %s7 = inlined_call_operand.vmem [shape: f32[1,128], index: 7, kind: input, shape index: {}]
  %s8 = inlined_call_operand.vmem [shape: f32[1,128], index: 8, kind: input, shape index: {}]
  %s9 = inlined_call_operand.hbm [shape: bf16[128,128], index: 9, kind: input, shape index: {}]
  %s10 = inlined_call_operand.vmem [shape: f32[1,128], index: 10, kind: input, shape index: {}]
  %s11 = inlined_call_operand.vmem [shape: f32[1,128], index: 11, kind: input, shape index: {}]
  %s12 = inlined_call_operand.vmem [shape: f32[1,128], index: 12, kind: input, shape index: {}]
  %s13 = inlined_call_operand.hbm [shape: bf16[128,128], index: 13, kind: input, shape index: {}]
  %s14 = inlined_call_operand.vmem [shape: f32[1,128], index: 14, kind: input, shape index: {}]
  %s15 = inlined_call_operand.vmem [shape: f32[1,128], index: 15, kind: input, shape index: {}]
  %s16 = inlined_call_operand.vmem [shape: f32[1,128], index: 16, kind: input, shape index: {}]
  %s17 = inlined_call_operand.hbm [shape: bf16[128,128], index: 17, kind: input, shape index: {}]
  %s18 = inlined_call_operand.vmem [shape: f32[1,128], index: 18, kind: input, shape index: {}]
  %s19 = inlined_call_operand.hbm [shape: f32[256,128], index: 19, kind: output, shape index: {}]
  %s20 = sld [smem:[#allocation0]]
  $region133: #{tpu_custom_call.1} parent=0
    _
  %s22 = ssub.s32 1, %s20
  %s23 = scalar_select 0, %s22, %s20
  $region1: #{tpu_custom_call.1} parent=0
    #allocation2 [shape = 'u8[131072]{0}', space=vmem, size = 0x20000, scoped, tag = 'input window, operand 0']
    #allocation3 [shape = 's32[2]{0}', space=sflag, size = 0x8, scoped, tag = 'scoped memory for tpu_custom_call.1']
    #allocation4 [shape = 's32[2]{0}', space=sflag, size = 0x8, scoped, tag = 'scoped memory for tpu_custom_call.1']
    #allocation5 [shape = 'u8[32768]{0}', space=vmem, size = 0x8000, scoped, tag = 'input window, operand 1, single buffered']
    #allocation6 [shape = 's32[1]{0}', space=sflag, size = 0x4, scoped, tag = 'scoped memory for tpu_custom_call.1']
    #allocation7 [shape = 'u8[32768]{0}', space=vmem, size = 0x8000, scoped, tag = 'input window, operand 5, single buffered']
    #allocation8 [shape = 'u8[32768]{0}', space=vmem, size = 0x8000, scoped, tag = 'input window, operand 9, single buffered']
    #allocation9 [shape = 's32[1]{0}', space=sflag, size = 0x4, scoped, tag = 'scoped memory for tpu_custom_call.1']
    #allocation10 [shape = 'u8[32768]{0}', space=vmem, size = 0x8000, scoped, tag = 'input window, operand 13, single buffered']
    #allocation11 [shape = 'u8[32768]{0}', space=vmem, size = 0x8000, scoped, tag = 'input window, operand 17, single buffered']
    #allocation12 [shape = 's32[1]{0}', space=sflag, size = 0x4, scoped, tag = 'scoped memory for tpu_custom_call.1']
    #allocation13 [shape = 'u8[131072]{0}', space=vmem, size = 0x20000, scoped, tag = 'output window, operand 0']
    %24 = vsyncpa [#allocation3], 0
    %s25 = scalar_lea.sflag [#allocation3], 1
    %26 = vsyncpa %s25, 0
    %27 = vsyncpa [#allocation6], 0
    %28 = vsyncpa [#allocation9], 0
    %29 = vsyncpa [#allocation12], 0
    %30 = vsyncpa [#allocation4], 0
    %s31 = scalar_lea.sflag [#allocation4], 1
    %32 = vsyncpa %s31, 0
    loop: start=0, step=1, limit=4
    $region2: #{tpu_custom_call.1} parent=1 // loop_pre_header
      _
    $region3: #{tpu_custom_call.1} parent=1 // loop_header
      %s34 = sphi 0, %s38
      %p35 = scmp.ge.s32.totalorder %s34, 4
      %s44 = sphi 0, %s46
      %s47 = sphi 0, %s44
      %s48 = sphi 0, %s47
      %s64 = sphi 0, %s48
      %s68 = sphi 0, %s68
      %s70 = sphi 0, %s68
      %s71 = sphi 0, %s70
      %s85 = sphi 0, %s71
      %s89 = sphi 0, %s89
      %s91 = sphi 0, %s89
      %s92 = sphi 0, %s91
      %s106 = sphi 0, %s92
      %s110 = sphi 0, %s110
      %s112 = sphi 0, %s110
      %s113 = sphi 0, %s112
      %s127 = sphi 0, %s113
      %s131 = sphi 0, %s131
      %s133 = sphi 0, %s131
      %s134 = sphi 0, %s133
      %s148 = sphi 0, %s134
      %s152 = sphi 0, %s152
      %s154 = sphi 0, %s152
      %s155 = sphi 0, %s154
      %s169 = sphi 0, %s155
      %s173 = sphi 0, %s173
      %s175 = sphi 0, %s173
      %s176 = sphi 0, %s175
      %s190 = sphi 0, %s176
      %s194 = sphi 0, %s194
      %s196 = sphi 0, %s194
      %s197 = sphi 0, %s196
      %s211 = sphi 0, %s197
      %s215 = sphi 0, %s215
      %s217 = sphi 0, %s215
      %s218 = sphi 0, %s217
      %s232 = sphi 0, %s218
      %s236 = sphi 0, %s236
      %s238 = sphi 0, %s236
      %s239 = sphi 0, %s238
      %s253 = sphi 0, %s239
      %s257 = sphi 0, %s257
      %s259 = sphi 0, %s257
      %s260 = sphi 0, %s259
      %s274 = sphi 0, %s260
      %s278 = sphi 0, %s278
      %s280 = sphi 0, %s278
      %s281 = sphi 0, %s280
      %s295 = sphi 0, %s281
      %s299 = sphi 0, %s299
      %s301 = sphi 0, %s299
      %s302 = sphi 0, %s301
      %s316 = sphi 0, %s302
      %s320 = sphi 0, %s320
      %s322 = sphi 0, %s320
      %s323 = sphi 0, %s322
      %s337 = sphi 0, %s323
      %s341 = sphi 0, %s341
      %s343 = sphi 0, %s341
      %s344 = sphi 0, %s343
      %s358 = sphi 0, %s344
      %s362 = sphi 0, %s362
      %s364 = sphi 0, %s362
      %s365 = sphi 0, %s364
      %s379 = sphi 0, %s365
      %s383 = sphi 0, %s383
      %s385 = sphi 0, %s383
      %s386 = sphi 0, %s385
      %s400 = sphi 0, %s386
      %s404 = sphi 0, %s404
      %s406 = sphi 0, %s404
      %s407 = sphi 0, %s406
      %s421 = sphi 0, %s407
      %s425 = sphi 0, %s425
      %s427 = sphi 0, %s425
      %s428 = sphi 0, %s427
      %s442 = sphi 0, %s428
      %s448 = sphi 0, %s450
      %s451 = sphi 0, %s448
      %s452 = sphi 0, %s451
      %s468 = sphi 0, %s452
    $region4: #{tpu_custom_call.1} parent=1 // loop_header_branch
      %37 = sbr.rel (%p35) target = $region8
    $region5: #{tpu_custom_call.1} parent=1 // loop_body
      %s39 = ssub.s32 %s34, 1
      %s40 = ssub.s32 %s34, 2
      %s41 = sadd.s32 %s34, 1
      %s42 = ssub.s32 %s34, %s41
      %p43 = scmp.eq.s32.totalorder %s42, 0
      %s45 = sadd.s32 %s44, 1
      %s46 = scalar_select %p43, %s44, %s45
      %p49 = pneg %p43
      %p50 = scmp.eq.s32.totalorder %s34, 1
      %p51 = por %p49, %p50
      %p52 = scmp.ne.s32.totalorder %s44, %s47
      %p53 = scmp.eq.s32.totalorder %s34, 0
      %p54 = por %p52, %p53
      %p55 = scmp.ne.s32.totalorder %s44, %s47
      %p56 = scmp.eq.s32.totalorder %s39, 1
      %p57 = por %p55, %p56
      %p58 = scmp.ne.s32.totalorder %s47, %s48
      %p59 = scmp.eq.s32.totalorder %s39, 0
      %p60 = por %p58, %p59
      %p61 = scmp.ne.s32.totalorder %s47, %s48
      %p62 = scmp.eq.s32.totalorder %s40, 1
      %p63 = por %p61, %p62
      %p65 = scmp.ne.s32.totalorder %s48, %s64
      %p66 = scmp.eq.s32.totalorder %s40, 0
      %p67 = por %p65, %p66
      %s69 = sadd.s32 %s68, 1
      %p72 = scmp.eq.s32.totalorder %s34, 1
      %p73 = scmp.ne.s32.totalorder %s68, %s70
      %p74 = scmp.eq.s32.totalorder %s34, 0
      %p75 = por %p73, %p74
      %p76 = scmp.ne.s32.totalorder %s68, %s70
      %p77 = scmp.eq.s32.totalorder %s39, 1
      %p78 = por %p76, %p77
      %p79 = scmp.ne.s32.totalorder %s70, %s71
      %p80 = scmp.eq.s32.totalorder %s39, 0
      %p81 = por %p79, %p80
      %p82 = scmp.ne.s32.totalorder %s70, %s71
      %p83 = scmp.eq.s32.totalorder %s40, 1
      %p84 = por %p82, %p83
      %p86 = scmp.ne.s32.totalorder %s71, %s85
      %p87 = scmp.eq.s32.totalorder %s40, 0
      %p88 = por %p86, %p87
      %s90 = sadd.s32 %s89, 1
      %p93 = scmp.eq.s32.totalorder %s34, 1
      %p94 = scmp.ne.s32.totalorder %s89, %s91
      %p95 = scmp.eq.s32.totalorder %s34, 0
      %p96 = por %p94, %p95
      %p97 = scmp.ne.s32.totalorder %s89, %s91
      %p98 = scmp.eq.s32.totalorder %s39, 1
      %p99 = por %p97, %p98
      %p100 = scmp.ne.s32.totalorder %s91, %s92
      %p101 = scmp.eq.s32.totalorder %s39, 0
      %p102 = por %p100, %p101
      %p103 = scmp.ne.s32.totalorder %s91, %s92
      %p104 = scmp.eq.s32.totalorder %s40, 1
      %p105 = por %p103, %p104
      %p107 = scmp.ne.s32.totalorder %s92, %s106
      %p108 = scmp.eq.s32.totalorder %s40, 0
      %p109 = por %p107, %p108
      %s111 = sadd.s32 %s110, 1
      %p114 = scmp.eq.s32.totalorder %s34, 1
      %p115 = scmp.ne.s32.totalorder %s110, %s112
      %p116 = scmp.eq.s32.totalorder %s34, 0
      %p117 = por %p115, %p116
      %p118 = scmp.ne.s32.totalorder %s110, %s112
      %p119 = scmp.eq.s32.totalorder %s39, 1
      %p120 = por %p118, %p119
      %p121 = scmp.ne.s32.totalorder %s112, %s113
      %p122 = scmp.eq.s32.totalorder %s39, 0
      %p123 = por %p121, %p122
      %p124 = scmp.ne.s32.totalorder %s112, %s113
      %p125 = scmp.eq.s32.totalorder %s40, 1
      %p126 = por %p124, %p125
      %p128 = scmp.ne.s32.totalorder %s113, %s127
      %p129 = scmp.eq.s32.totalorder %s40, 0
      %p130 = por %p128, %p129
      %s132 = sadd.s32 %s131, 1
      %p135 = scmp.eq.s32.totalorder %s34, 1
      %p136 = scmp.ne.s32.totalorder %s131, %s133
      %p137 = scmp.eq.s32.totalorder %s34, 0
      %p138 = por %p136, %p137
      %p139 = scmp.ne.s32.totalorder %s131, %s133
      %p140 = scmp.eq.s32.totalorder %s39, 1
      %p141 = por %p139, %p140
      %p142 = scmp.ne.s32.totalorder %s133, %s134
      %p143 = scmp.eq.s32.totalorder %s39, 0
      %p144 = por %p142, %p143
      %p145 = scmp.ne.s32.totalorder %s133, %s134
      %p146 = scmp.eq.s32.totalorder %s40, 1
      %p147 = por %p145, %p146
      %p149 = scmp.ne.s32.totalorder %s134, %s148
      %p150 = scmp.eq.s32.totalorder %s40, 0
      %p151 = por %p149, %p150
      %s153 = sadd.s32 %s152, 1
      %p156 = scmp.eq.s32.totalorder %s34, 1
      %p157 = scmp.ne.s32.totalorder %s152, %s154
      %p158 = scmp.eq.s32.totalorder %s34, 0
      %p159 = por %p157, %p158
      %p160 = scmp.ne.s32.totalorder %s152, %s154
      %p161 = scmp.eq.s32.totalorder %s39, 1
      %p162 = por %p160, %p161
      %p163 = scmp.ne.s32.totalorder %s154, %s155
      %p164 = scmp.eq.s32.totalorder %s39, 0
      %p165 = por %p163, %p164
      %p166 = scmp.ne.s32.totalorder %s154, %s155
      %p167 = scmp.eq.s32.totalorder %s40, 1
      %p168 = por %p166, %p167
      %p170 = scmp.ne.s32.totalorder %s155, %s169
      %p171 = scmp.eq.s32.totalorder %s40, 0
      %p172 = por %p170, %p171
      %s174 = sadd.s32 %s173, 1
      %p177 = scmp.eq.s32.totalorder %s34, 1
      %p178 = scmp.ne.s32.totalorder %s173, %s175
      %p179 = scmp.eq.s32.totalorder %s34, 0
      %p180 = por %p178, %p179
      %p181 = scmp.ne.s32.totalorder %s173, %s175
      %p182 = scmp.eq.s32.totalorder %s39, 1
      %p183 = por %p181, %p182
      %p184 = scmp.ne.s32.totalorder %s175, %s176
      %p185 = scmp.eq.s32.totalorder %s39, 0
      %p186 = por %p184, %p185
      %p187 = scmp.ne.s32.totalorder %s175, %s176
      %p188 = scmp.eq.s32.totalorder %s40, 1
      %p189 = por %p187, %p188
      %p191 = scmp.ne.s32.totalorder %s176, %s190
      %p192 = scmp.eq.s32.totalorder %s40, 0
      %p193 = por %p191, %p192
      %s195 = sadd.s32 %s194, 1
      %p198 = scmp.eq.s32.totalorder %s34, 1
      %p199 = scmp.ne.s32.totalorder %s194, %s196
      %p200 = scmp.eq.s32.totalorder %s34, 0
      %p201 = por %p199, %p200
      %p202 = scmp.ne.s32.totalorder %s194, %s196
      %p203 = scmp.eq.s32.totalorder %s39, 1
      %p204 = por %p202, %p203
      %p205 = scmp.ne.s32.totalorder %s196, %s197
      %p206 = scmp.eq.s32.totalorder %s39, 0
      %p207 = por %p205, %p206
      %p208 = scmp.ne.s32.totalorder %s196, %s197
      %p209 = scmp.eq.s32.totalorder %s40, 1
      %p210 = por %p208, %p209
      %p212 = scmp.ne.s32.totalorder %s197, %s211
      %p213 = scmp.eq.s32.totalorder %s40, 0
      %p214 = por %p212, %p213
      %s216 = sadd.s32 %s215, 1
      %p219 = scmp.eq.s32.totalorder %s34, 1
      %p220 = scmp.ne.s32.totalorder %s215, %s217
      %p221 = scmp.eq.s32.totalorder %s34, 0
      %p222 = por %p220, %p221
      %p223 = scmp.ne.s32.totalorder %s215, %s217
      %p224 = scmp.eq.s32.totalorder %s39, 1
      %p225 = por %p223, %p224
      %p226 = scmp.ne.s32.totalorder %s217, %s218
      %p227 = scmp.eq.s32.totalorder %s39, 0
      %p228 = por %p226, %p227
      %p229 = scmp.ne.s32.totalorder %s217, %s218
      %p230 = scmp.eq.s32.totalorder %s40, 1
      %p231 = por %p229, %p230
      %p233 = scmp.ne.s32.totalorder %s218, %s232
      %p234 = scmp.eq.s32.totalorder %s40, 0
      %p235 = por %p233, %p234
      %s237 = sadd.s32 %s236, 1
      %p240 = scmp.eq.s32.totalorder %s34, 1
      %p241 = scmp.ne.s32.totalorder %s236, %s238
      %p242 = scmp.eq.s32.totalorder %s34, 0
      %p243 = por %p241, %p242
      %p244 = scmp.ne.s32.totalorder %s236, %s238
      %p245 = scmp.eq.s32.totalorder %s39, 1
      %p246 = por %p244, %p245
      %p247 = scmp.ne.s32.totalorder %s238, %s239
      %p248 = scmp.eq.s32.totalorder %s39, 0
      %p249 = por %p247, %p248
      %p250 = scmp.ne.s32.totalorder %s238, %s239
      %p251 = scmp.eq.s32.totalorder %s40, 1
      %p252 = por %p250, %p251
      %p254 = scmp.ne.s32.totalorder %s239, %s253
      %p255 = scmp.eq.s32.totalorder %s40, 0
      %p256 = por %p254, %p255
      %s258 = sadd.s32 %s257, 1
      %p261 = scmp.eq.s32.totalorder %s34, 1
      %p262 = scmp.ne.s32.totalorder %s257, %s259
      %p263 = scmp.eq.s32.totalorder %s34, 0
      %p264 = por %p262, %p263
      %p265 = scmp.ne.s32.totalorder %s257, %s259
      %p266 = scmp.eq.s32.totalorder %s39, 1
      %p267 = por %p265, %p266
      %p268 = scmp.ne.s32.totalorder %s259, %s260
      %p269 = scmp.eq.s32.totalorder %s39, 0
      %p270 = por %p268, %p269
      %p271 = scmp.ne.s32.totalorder %s259, %s260
      %p272 = scmp.eq.s32.totalorder %s40, 1
      %p273 = por %p271, %p272
      %p275 = scmp.ne.s32.totalorder %s260, %s274
      %p276 = scmp.eq.s32.totalorder %s40, 0
      %p277 = por %p275, %p276
      %s279 = sadd.s32 %s278, 1
      %p282 = scmp.eq.s32.totalorder %s34, 1
      %p283 = scmp.ne.s32.totalorder %s278, %s280
      %p284 = scmp.eq.s32.totalorder %s34, 0
      %p285 = por %p283, %p284
      %p286 = scmp.ne.s32.totalorder %s278, %s280
      %p287 = scmp.eq.s32.totalorder %s39, 1
      %p288 = por %p286, %p287
      %p289 = scmp.ne.s32.totalorder %s280, %s281
      %p290 = scmp.eq.s32.totalorder %s39, 0
      %p291 = por %p289, %p290
      %p292 = scmp.ne.s32.totalorder %s280, %s281
      %p293 = scmp.eq.s32.totalorder %s40, 1
      %p294 = por %p292, %p293
      %p296 = scmp.ne.s32.totalorder %s281, %s295
      %p297 = scmp.eq.s32.totalorder %s40, 0
      %p298 = por %p296, %p297
      %s300 = sadd.s32 %s299, 1
      %p303 = scmp.eq.s32.totalorder %s34, 1
      %p304 = scmp.ne.s32.totalorder %s299, %s301
      %p305 = scmp.eq.s32.totalorder %s34, 0
      %p306 = por %p304, %p305
      %p307 = scmp.ne.s32.totalorder %s299, %s301
      %p308 = scmp.eq.s32.totalorder %s39, 1
      %p309 = por %p307, %p308
      %p310 = scmp.ne.s32.totalorder %s301, %s302
      %p311 = scmp.eq.s32.totalorder %s39, 0
      %p312 = por %p310, %p311
      %p313 = scmp.ne.s32.totalorder %s301, %s302
      %p314 = scmp.eq.s32.totalorder %s40, 1
      %p315 = por %p313, %p314
      %p317 = scmp.ne.s32.totalorder %s302, %s316
      %p318 = scmp.eq.s32.totalorder %s40, 0
      %p319 = por %p317, %p318
      %s321 = sadd.s32 %s320, 1
      %p324 = scmp.eq.s32.totalorder %s34, 1
      %p325 = scmp.ne.s32.totalorder %s320, %s322
      %p326 = scmp.eq.s32.totalorder %s34, 0
      %p327 = por %p325, %p326
      %p328 = scmp.ne.s32.totalorder %s320, %s322
      %p329 = scmp.eq.s32.totalorder %s39, 1
      %p330 = por %p328, %p329
      %p331 = scmp.ne.s32.totalorder %s322, %s323
      %p332 = scmp.eq.s32.totalorder %s39, 0
      %p333 = por %p331, %p332
      %p334 = scmp.ne.s32.totalorder %s322, %s323
      %p335 = scmp.eq.s32.totalorder %s40, 1
      %p336 = por %p334, %p335
      %p338 = scmp.ne.s32.totalorder %s323, %s337
      %p339 = scmp.eq.s32.totalorder %s40, 0
      %p340 = por %p338, %p339
      %s342 = sadd.s32 %s341, 1
      %p345 = scmp.eq.s32.totalorder %s34, 1
      %p346 = scmp.ne.s32.totalorder %s341, %s343
      %p347 = scmp.eq.s32.totalorder %s34, 0
      %p348 = por %p346, %p347
      %p349 = scmp.ne.s32.totalorder %s341, %s343
      %p350 = scmp.eq.s32.totalorder %s39, 1
      %p351 = por %p349, %p350
      %p352 = scmp.ne.s32.totalorder %s343, %s344
      %p353 = scmp.eq.s32.totalorder %s39, 0
      %p354 = por %p352, %p353
      %p355 = scmp.ne.s32.totalorder %s343, %s344
      %p356 = scmp.eq.s32.totalorder %s40, 1
      %p357 = por %p355, %p356
      %p359 = scmp.ne.s32.totalorder %s344, %s358
      %p360 = scmp.eq.s32.totalorder %s40, 0
      %p361 = por %p359, %p360
      %s363 = sadd.s32 %s362, 1
      %p366 = scmp.eq.s32.totalorder %s34, 1
      %p367 = scmp.ne.s32.totalorder %s362, %s364
      %p368 = scmp.eq.s32.totalorder %s34, 0
      %p369 = por %p367, %p368
      %p370 = scmp.ne.s32.totalorder %s362, %s364
      %p371 = scmp.eq.s32.totalorder %s39, 1
      %p372 = por %p370, %p371
      %p373 = scmp.ne.s32.totalorder %s364, %s365
      %p374 = scmp.eq.s32.totalorder %s39, 0
      %p375 = por %p373, %p374
      %p376 = scmp.ne.s32.totalorder %s364, %s365
      %p377 = scmp.eq.s32.totalorder %s40, 1
      %p378 = por %p376, %p377
      %p380 = scmp.ne.s32.totalorder %s365, %s379
      %p381 = scmp.eq.s32.totalorder %s40, 0
      %p382 = por %p380, %p381
      %s384 = sadd.s32 %s383, 1
      %p387 = scmp.eq.s32.totalorder %s34, 1
      %p388 = scmp.ne.s32.totalorder %s383, %s385
      %p389 = scmp.eq.s32.totalorder %s34, 0
      %p390 = por %p388, %p389
      %p391 = scmp.ne.s32.totalorder %s383, %s385
      %p392 = scmp.eq.s32.totalorder %s39, 1
      %p393 = por %p391, %p392
      %p394 = scmp.ne.s32.totalorder %s385, %s386
      %p395 = scmp.eq.s32.totalorder %s39, 0
      %p396 = por %p394, %p395
      %p397 = scmp.ne.s32.totalorder %s385, %s386
      %p398 = scmp.eq.s32.totalorder %s40, 1
      %p399 = por %p397, %p398
      %p401 = scmp.ne.s32.totalorder %s386, %s400
      %p402 = scmp.eq.s32.totalorder %s40, 0
      %p403 = por %p401, %p402
      %s405 = sadd.s32 %s404, 1
      %p408 = scmp.eq.s32.totalorder %s34, 1
      %p409 = scmp.ne.s32.totalorder %s404, %s406
      %p410 = scmp.eq.s32.totalorder %s34, 0
      %p411 = por %p409, %p410
      %p412 = scmp.ne.s32.totalorder %s404, %s406
      %p413 = scmp.eq.s32.totalorder %s39, 1
      %p414 = por %p412, %p413
      %p415 = scmp.ne.s32.totalorder %s406, %s407
      %p416 = scmp.eq.s32.totalorder %s39, 0
      %p417 = por %p415, %p416
      %p418 = scmp.ne.s32.totalorder %s406, %s407
      %p419 = scmp.eq.s32.totalorder %s40, 1
      %p420 = por %p418, %p419
      %p422 = scmp.ne.s32.totalorder %s407, %s421
      %p423 = scmp.eq.s32.totalorder %s40, 0
      %p424 = por %p422, %p423
      %s426 = sadd.s32 %s425, 1
      %p429 = scmp.eq.s32.totalorder %s34, 1
      %p430 = scmp.ne.s32.totalorder %s425, %s427
      %p431 = scmp.eq.s32.totalorder %s34, 0
      %p432 = por %p430, %p431
      %p433 = scmp.ne.s32.totalorder %s425, %s427
      %p434 = scmp.eq.s32.totalorder %s39, 1
      %p435 = por %p433, %p434
      %p436 = scmp.ne.s32.totalorder %s427, %s428
      %p437 = scmp.eq.s32.totalorder %s39, 0
      %p438 = por %p436, %p437
      %p439 = scmp.ne.s32.totalorder %s427, %s428
      %p440 = scmp.eq.s32.totalorder %s40, 1
      %p441 = por %p439, %p440
      %p443 = scmp.ne.s32.totalorder %s428, %s442
      %p444 = scmp.eq.s32.totalorder %s40, 0
      %p445 = por %p443, %p444
      %s446 = ssub.s32 %s34, %s41
      %p447 = scmp.eq.s32.totalorder %s446, 0
      %s449 = sadd.s32 %s448, 1
      %s450 = scalar_select %p447, %s448, %s449
      %p453 = pneg %p447
      %p454 = scmp.eq.s32.totalorder %s34, 1
      %p455 = por %p453, %p454
      %p456 = scmp.ne.s32.totalorder %s448, %s451
      %p457 = scmp.eq.s32.totalorder %s34, 0
      %p458 = por %p456, %p457
      %p459 = scmp.ne.s32.totalorder %s448, %s451
      %p460 = scmp.eq.s32.totalorder %s39, 1
      %p461 = por %p459, %p460
      %p462 = scmp.ne.s32.totalorder %s451, %s452
      %p463 = scmp.eq.s32.totalorder %s39, 0
      %p464 = por %p462, %p463
      %p465 = scmp.ne.s32.totalorder %s451, %s452
      %p466 = scmp.eq.s32.totalorder %s40, 1
      %p467 = por %p465, %p466
      %p469 = scmp.ne.s32.totalorder %s452, %s468
      %p470 = scmp.eq.s32.totalorder %s40, 0
      %p471 = por %p469, %p470
      %p472 = scmp.le.s32.totalorder 1, %s34
      %p473 = scmp.lt.s32.totalorder %s34, 3
      %p474 = pnand %p472, %p473
      %p475 = pneg %p474
      // Predicated region
      $region9: #{tpu_custom_call.1} parent=5 // pred_check
        _
      $region10: #{tpu_custom_call.1} parent=5 // pred_check_branch
        %477 = sbr.rel (%p474) target = $region12
      $region11: #{tpu_custom_call.1} parent=5 // pred_region
        %s478 = ssub.s32 %s34, 1
        // Predicated region
        $region13: #{tpu_custom_call.1} parent=11 // pred_check
          %p479 = pneg %p81
        $region14: #{tpu_custom_call.1} parent=11 // pred_check_branch
          %481 = sbr.rel (%p479) target = $region16
        $region15: #{tpu_custom_call.1} parent=11 // pred_region
          %s483 = ssub.s32 1024, 1024
          %484 = vsyncadd [#allocation6], %s483
          %s485 = sshll.u32 [#allocation5], 4
          %s486 = int_to_ptr.vmem [resolvable:$true] %s485
          %491 = dma.hbm_to_vmem [thread:$0]  %s1, 1024, %s486, [#allocation6], 64, 64, 4
        $region16: #{tpu_custom_call.1} parent=11 // pred_fallthru
          _
        // Predicated region
        $region17: #{tpu_custom_call.1} parent=11 // pred_check
          %p492 = pneg %p102
        $region18: #{tpu_custom_call.1} parent=11 // pred_check_branch
          %494 = sbr.rel (%p492) target = $region20
        $region19: #{tpu_custom_call.1} parent=11 // pred_region
          _
        $region20: #{tpu_custom_call.1} parent=11 // pred_fallthru
          _
        // Predicated region
        $region21: #{tpu_custom_call.1} parent=11 // pred_check
          %p495 = pneg %p123
        $region22: #{tpu_custom_call.1} parent=11 // pred_check_branch
          %497 = sbr.rel (%p495) target = $region24
        $region23: #{tpu_custom_call.1} parent=11 // pred_region
          _
        $region24: #{tpu_custom_call.1} parent=11 // pred_fallthru
          _
        // Predicated region
        $region25: #{tpu_custom_call.1} parent=11 // pred_check
          %p498 = pneg %p144
        $region26: #{tpu_custom_call.1} parent=11 // pred_check_branch
          %500 = sbr.rel (%p498) target = $region28
        $region27: #{tpu_custom_call.1} parent=11 // pred_region
          _
        $region28: #{tpu_custom_call.1} parent=11 // pred_fallthru
          _
        // Predicated region
        $region29: #{tpu_custom_call.1} parent=11 // pred_check
          %p501 = pneg %p165
        $region30: #{tpu_custom_call.1} parent=11 // pred_check_branch
          %503 = sbr.rel (%p501) target = $region32
        $region31: #{tpu_custom_call.1} parent=11 // pred_region
          %s505 = ssub.s32 1024, 1024
          %506 = vsyncadd [#allocation6], %s505
          %s507 = sshll.u32 [#allocation7], 4
          %s508 = int_to_ptr.vmem [resolvable:$true] %s507
          %513 = dma.hbm_to_vmem [thread:$0]  %s5, 1024, %s508, [#allocation6], 64, 64, 4
        $region32: #{tpu_custom_call.1} parent=11 // pred_fallthru
          _
        // Predicated region
        $region33: #{tpu_custom_call.1} parent=11 // pred_check
          %p514 = pneg %p186
        $region34: #{tpu_custom_call.1} parent=11 // pred_check_branch
          %516 = sbr.rel (%p514) target = $region36
        $region35: #{tpu_custom_call.1} parent=11 // pred_region
          _
        $region36: #{tpu_custom_call.1} parent=11 // pred_fallthru
          _
        // Predicated region
        $region37: #{tpu_custom_call.1} parent=11 // pred_check
          %p517 = pneg %p207
        $region38: #{tpu_custom_call.1} parent=11 // pred_check_branch
          %519 = sbr.rel (%p517) target = $region40
        $region39: #{tpu_custom_call.1} parent=11 // pred_region
          _
        $region40: #{tpu_custom_call.1} parent=11 // pred_fallthru
          _
        // Predicated region
        $region41: #{tpu_custom_call.1} parent=11 // pred_check
          %p520 = pneg %p228
        $region42: #{tpu_custom_call.1} parent=11 // pred_check_branch
          %522 = sbr.rel (%p520) target = $region44
        $region43: #{tpu_custom_call.1} parent=11 // pred_region
          _
        $region44: #{tpu_custom_call.1} parent=11 // pred_fallthru
          _
        // Predicated region
        $region45: #{tpu_custom_call.1} parent=11 // pred_check
          %p523 = pneg %p249
        $region46: #{tpu_custom_call.1} parent=11 // pred_check_branch
          %525 = sbr.rel (%p523) target = $region48
        $region47: #{tpu_custom_call.1} parent=11 // pred_region
          %s527 = ssub.s32 1024, 1024
          %528 = vsyncadd [#allocation9], %s527
          %s529 = sshll.u32 [#allocation8], 4
          %s530 = int_to_ptr.vmem [resolvable:$true] %s529
          %535 = dma.hbm_to_vmem [thread:$0]  %s9, 1024, %s530, [#allocation9], 64, 64, 4
        $region48: #{tpu_custom_call.1} parent=11 // pred_fallthru
          _
        // Predicated region
        $region49: #{tpu_custom_call.1} parent=11 // pred_check
          %p536 = pneg %p270
        $region50: #{tpu_custom_call.1} parent=11 // pred_check_branch
          %538 = sbr.rel (%p536) target = $region52
        $region51: #{tpu_custom_call.1} parent=11 // pred_region
          _
        $region52: #{tpu_custom_call.1} parent=11 // pred_fallthru
          _
        // Predicated region
        $region53: #{tpu_custom_call.1} parent=11 // pred_check
          %p539 = pneg %p291
        $region54: #{tpu_custom_call.1} parent=11 // pred_check_branch
          %541 = sbr.rel (%p539) target = $region56
        $region55: #{tpu_custom_call.1} parent=11 // pred_region
          _
        $region56: #{tpu_custom_call.1} parent=11 // pred_fallthru
          _
        // Predicated region
        $region57: #{tpu_custom_call.1} parent=11 // pred_check
          %p542 = pneg %p312
        $region58: #{tpu_custom_call.1} parent=11 // pred_check_branch
          %544 = sbr.rel (%p542) target = $region60
        $region59: #{tpu_custom_call.1} parent=11 // pred_region
          _
        $region60: #{tpu_custom_call.1} parent=11 // pred_fallthru
          _
        // Predicated region
        $region61: #{tpu_custom_call.1} parent=11 // pred_check
          %p545 = pneg %p333
        $region62: #{tpu_custom_call.1} parent=11 // pred_check_branch
          %547 = sbr.rel (%p545) target = $region64
        $region63: #{tpu_custom_call.1} parent=11 // pred_region
          %s549 = ssub.s32 1024, 1024
          %550 = vsyncadd [#allocation9], %s549
          %s551 = sshll.u32 [#allocation10], 4
          %s552 = int_to_ptr.vmem [resolvable:$true] %s551
          %557 = dma.hbm_to_vmem [thread:$0]  %s13, 1024, %s552, [#allocation9], 64, 64, 4
        $region64: #{tpu_custom_call.1} parent=11 // pred_fallthru
          _
        // Predicated region
        $region65: #{tpu_custom_call.1} parent=11 // pred_check
          %p558 = pneg %p354
        $region66: #{tpu_custom_call.1} parent=11 // pred_check_branch
          %560 = sbr.rel (%p558) target = $region68
        $region67: #{tpu_custom_call.1} parent=11 // pred_region
          _
        $region68: #{tpu_custom_call.1} parent=11 // pred_fallthru
          _
        // Predicated region
        $region69: #{tpu_custom_call.1} parent=11 // pred_check
          %p561 = pneg %p375
        $region70: #{tpu_custom_call.1} parent=11 // pred_check_branch
          %563 = sbr.rel (%p561) target = $region72
        $region71: #{tpu_custom_call.1} parent=11 // pred_region
          _
        $region72: #{tpu_custom_call.1} parent=11 // pred_fallthru
          _
        // Predicated region
        $region73: #{tpu_custom_call.1} parent=11 // pred_check
          %p564 = pneg %p396
        $region74: #{tpu_custom_call.1} parent=11 // pred_check_branch
          %566 = sbr.rel (%p564) target = $region76
        $region75: #{tpu_custom_call.1} parent=11 // pred_region
          _
        $region76: #{tpu_custom_call.1} parent=11 // pred_fallthru
          _
        // Predicated region
        $region77: #{tpu_custom_call.1} parent=11 // pred_check
          %p567 = pneg %p417
        $region78: #{tpu_custom_call.1} parent=11 // pred_check_branch
          %569 = sbr.rel (%p567) target = $region80
        $region79: #{tpu_custom_call.1} parent=11 // pred_region
          %s571 = ssub.s32 1024, 1024
          %572 = vsyncadd [#allocation12], %s571
          %s573 = sshll.u32 [#allocation11], 4
          %s574 = int_to_ptr.vmem [resolvable:$true] %s573
          %579 = dma.hbm_to_vmem [thread:$0]  %s17, 1024, %s574, [#allocation12], 64, 64, 4
        $region80: #{tpu_custom_call.1} parent=11 // pred_fallthru
          _
        // Predicated region
        $region81: #{tpu_custom_call.1} parent=11 // pred_check
          %p580 = pneg %p438
        $region82: #{tpu_custom_call.1} parent=11 // pred_check_branch
          %582 = sbr.rel (%p580) target = $region84
        $region83: #{tpu_custom_call.1} parent=11 // pred_region
          _
        $region84: #{tpu_custom_call.1} parent=11 // pred_fallthru
          _
      $region12: #{tpu_custom_call.1} parent=5 // pred_fallthru
        _
      %p583 = scmp.lt.s32.totalorder %s34, 2
      // Predicated region
      $region85: #{tpu_custom_call.1} parent=5 // pred_check
        %p584 = pneg %p583
      $region86: #{tpu_custom_call.1} parent=5 // pred_check_branch
        %586 = sbr.rel (%p584) target = $region88
      $region87: #{tpu_custom_call.1} parent=5 // pred_region
        // Predicated region
        $region89: #{tpu_custom_call.1} parent=87 // pred_check
          %p587 = pneg %p54
        $region90: #{tpu_custom_call.1} parent=87 // pred_check_branch
          %589 = sbr.rel (%p587) target = $region92
        $region91: #{tpu_custom_call.1} parent=87 // pred_region
          %s590 = sand.u32 %s44, 1
          %s591 = scalar_lea.sflag [#allocation3], %s590
          %s592 = sand.u32 %s44, 1
          %s593 = smul.addr %s592, 128
          %s594 = scalar_lea.vmem [#allocation2], %s593
          %s595 = smul.u32 16, %s34
          %s597 = ssub.s32 2048, 2048
          %598 = vsyncadd %s591, %s597
          %s599 = smul.addr %s595, 128
          %s600 = scalar_lea.hbm %s0, %s599
          %s601 = sshll.u32 %s594, 4
          %s602 = int_to_ptr.vmem [resolvable:$true] %s601
          %607 = dma.hbm_to_vmem [thread:$0]  %s600, 2048, %s602, %s591, 128, 128, 8
        $region92: #{tpu_custom_call.1} parent=87 // pred_fallthru
          _
      $region88: #{tpu_custom_call.1} parent=5 // pred_fallthru
        _
      %p608 = scmp.le.s32.totalorder 1, %s34
      %p609 = scmp.lt.s32.totalorder %s34, 3
      %p610 = pnand %p608, %p609
      %p611 = pneg %p610
      // Predicated region
      $region93: #{tpu_custom_call.1} parent=5 // pred_check
        _
      $region94: #{tpu_custom_call.1} parent=5 // pred_check_branch
        %613 = sbr.rel (%p610) target = $region96
      $region95: #{tpu_custom_call.1} parent=5 // pred_region
        %s614 = ssub.s32 %s34, 1
        %s615 = sand.u32 %s47, 1
        %s616 = scalar_lea.sflag [#allocation3], %s615
        %s617 = sand.u32 %s47, 1
        %s618 = smul.addr %s617, 128
        %s619 = scalar_lea.vmem [#allocation2], %s618
        // Predicated region
        $region97: #{tpu_custom_call.1} parent=95 // pred_check
          %p620 = pneg %p60
        $region98: #{tpu_custom_call.1} parent=95 // pred_check_branch
          %622 = sbr.rel (%p620) target = $region100
        $region99: #{tpu_custom_call.1} parent=95 // pred_region
          %623 = dma.done %s616, 2048
        $region100: #{tpu_custom_call.1} parent=95 // pred_fallthru
          _
        // Predicated region
        $region101: #{tpu_custom_call.1} parent=95 // pred_check
          %p624 = pneg %p81
        $region102: #{tpu_custom_call.1} parent=95 // pred_check_branch
          %626 = sbr.rel (%p624) target = $region104
        $region103: #{tpu_custom_call.1} parent=95 // pred_region
          %627 = dma.done [#allocation6], 1024
        $region104: #{tpu_custom_call.1} parent=95 // pred_fallthru
          _
        // Predicated region
        $region105: #{tpu_custom_call.1} parent=95 // pred_check
          %p628 = pneg %p165
        $region106: #{tpu_custom_call.1} parent=95 // pred_check_branch
          %630 = sbr.rel (%p628) target = $region108
        $region107: #{tpu_custom_call.1} parent=95 // pred_region
          %631 = dma.done [#allocation6], 1024
        $region108: #{tpu_custom_call.1} parent=95 // pred_fallthru
          _
        // Predicated region
        $region109: #{tpu_custom_call.1} parent=95 // pred_check
          %p632 = pneg %p249
        $region110: #{tpu_custom_call.1} parent=95 // pred_check_branch
          %634 = sbr.rel (%p632) target = $region112
        $region111: #{tpu_custom_call.1} parent=95 // pred_region
          %635 = dma.done [#allocation9], 1024
        $region112: #{tpu_custom_call.1} parent=95 // pred_fallthru
          _
        // Predicated region
        $region113: #{tpu_custom_call.1} parent=95 // pred_check
          %p636 = pneg %p333
        $region114: #{tpu_custom_call.1} parent=95 // pred_check_branch
          %638 = sbr.rel (%p636) target = $region116
        $region115: #{tpu_custom_call.1} parent=95 // pred_region
          %639 = dma.done [#allocation9], 1024
        $region116: #{tpu_custom_call.1} parent=95 // pred_fallthru
          _
        // Predicated region
        $region117: #{tpu_custom_call.1} parent=95 // pred_check
          %p640 = pneg %p417
        $region118: #{tpu_custom_call.1} parent=95 // pred_check_branch
          %642 = sbr.rel (%p640) target = $region120
        $region119: #{tpu_custom_call.1} parent=95 // pred_region
          %643 = dma.done [#allocation12], 1024
        $region120: #{tpu_custom_call.1} parent=95 // pred_fallthru
          _
        %s644 = sand.u32 %s47, 1
        %s645 = scalar_lea.sflag [#allocation3], %s644
        %s646 = sand.u32 %s47, 1
        %s647 = smul.addr %s646, 128
        %s648 = scalar_lea.vmem [#allocation2], %s647
        %p649 = pneg %p60
        %p650 = pneg %p57
        %p651 = pneg %p81
        %p652 = pneg %p78
        %p653 = pneg %p102
        %p654 = pneg %p99
        %p655 = pneg %p123
        %p656 = pneg %p120
        %p657 = pneg %p144
        %p658 = pneg %p141
        %p659 = pneg %p165
        %p660 = pneg %p162
        %p661 = pneg %p186
        %p662 = pneg %p183
        %p663 = pneg %p207
        %p664 = pneg %p204
        %p665 = pneg %p228
        %p666 = pneg %p225
        %p667 = pneg %p249
        %p668 = pneg %p246
        %p669 = pneg %p270
        %p670 = pneg %p267
        %p671 = pneg %p291
        %p672 = pneg %p288
        %p673 = pneg %p312
        %p674 = pneg %p309
        %p675 = pneg %p333
        %p676 = pneg %p330
        %p677 = pneg %p354
        %p678 = pneg %p351
        %p679 = pneg %p375
        %p680 = pneg %p372
        %p681 = pneg %p396
        %p682 = pneg %p393
        %p683 = pneg %p417
        %p684 = pneg %p414
        %p685 = pneg %p438
        %p686 = pneg %p435
        %p687 = pneg %p464
        %p688 = pneg %p461
        %s689 = sand.u32 %s451, 1
        %s690 = scalar_lea.sflag [#allocation4], %s689
        %s691 = sand.u32 %s451, 1
        %s692 = smul.addr %s691, 128
        %s693 = scalar_lea.vmem [#allocation13], %s692
        %s694 = smul.u32 16, %s39
        %s695 = smul.u32 16, %s39
        %v697 = vld [vmem:[%s619] sm:$0xff]
        %v698 = vld [vmem:[%s619 + $0x8] sm:$0xff]
        %v699 = vld [vmem:[%s619 + $0x10] sm:$0xff]
        %v700 = vld [vmem:[%s619 + $0x18] sm:$0xff]
        %v701 = vld [vmem:[%s619 + $0x20] sm:$0xff]
        %v702 = vld [vmem:[%s619 + $0x28] sm:$0xff]
        %v703 = vld [vmem:[%s619 + $0x30] sm:$0xff]
        %v704 = vld [vmem:[%s619 + $0x38] sm:$0xff]
        %v705 = vld [vmem:[%s619 + $0x40] sm:$0xff]
        %v706 = vld [vmem:[%s619 + $0x48] sm:$0xff]
        %v707 = vld [vmem:[%s619 + $0x50] sm:$0xff]
        %v708 = vld [vmem:[%s619 + $0x58] sm:$0xff]
        %v709 = vld [vmem:[%s619 + $0x60] sm:$0xff]
        %v710 = vld [vmem:[%s619 + $0x68] sm:$0xff]
        %v711 = vld [vmem:[%s619 + $0x70] sm:$0xff]
        %v712 = vld [vmem:[%s619 + $0x78] sm:$0xff]
        %v713 = vpack.c.bf16 %v698, %v697
        %v714 = vpack.c.bf16 %v700, %v699
        %v715 = vpack.c.bf16 %v702, %v701
        %v716 = vpack.c.bf16 %v704, %v703
        %v717 = vpack.c.bf16 %v706, %v705
        %v718 = vpack.c.bf16 %v708, %v707
        %v719 = vpack.c.bf16 %v710, %v709
        %v720 = vpack.c.bf16 %v712, %v711
        %v721 = vld [vmem:[#allocation5] sm:$0xf]
        %v722 = vld [vmem:[#allocation5 + $0x4] sm:$0xf]
        %v723 = vld [vmem:[#allocation5 + $0x8] sm:$0xf]
        %v724 = vld [vmem:[#allocation5 + $0xc] sm:$0xf]
        %v725 = vld [vmem:[#allocation5 + $0x10] sm:$0xf]
        %v726 = vld [vmem:[#allocation5 + $0x14] sm:$0xf]
        %v727 = vld [vmem:[#allocation5 + $0x18] sm:$0xf]
        %v728 = vld [vmem:[#allocation5 + $0x1c] sm:$0xf]
        %v729 = vld [vmem:[#allocation5 + $0x20] sm:$0xf]
        %v730 = vld [vmem:[#allocation5 + $0x24] sm:$0xf]
        %v731 = vld [vmem:[#allocation5 + $0x28] sm:$0xf]
        %v732 = vld [vmem:[#allocation5 + $0x2c] sm:$0xf]
        %v733 = vld [vmem:[#allocation5 + $0x30] sm:$0xf]
        %v734 = vld [vmem:[#allocation5 + $0x34] sm:$0xf]
        %v735 = vld [vmem:[#allocation5 + $0x38] sm:$0xf]
        %v736 = vld [vmem:[#allocation5 + $0x3c] sm:$0xf]
        %v737 = vld [vmem:[%s2] sm:$0x1]
        %v739 = vlaneseq
        %v740 = vshrl.u32 %v739, 7
        %v741 = vsub.s32 0, %v740
        %v742 = vrot.slane %v737, %v741
        %v760 = vunpack.c.l.b16 %v721
        %v761 = vunpack.c.l.b16 %v722
        %v762 = vunpack.c.l.b16 %v723
        %v763 = vunpack.c.l.b16 %v724
        %v764 = vunpack.c.l.b16 %v725
        %v765 = vunpack.c.l.b16 %v726
        %v766 = vunpack.c.l.b16 %v727
        %v767 = vunpack.c.l.b16 %v728
        %v768 = vunpack.c.l.b16 %v729
        %v769 = vunpack.c.l.b16 %v730
        %v770 = vunpack.c.l.b16 %v731
        %v771 = vunpack.c.l.b16 %v732
        %v772 = vunpack.c.l.b16 %v733
        %v773 = vunpack.c.l.b16 %v734
        %v774 = vunpack.c.l.b16 %v735
        %v775 = vunpack.c.l.b16 %v736
        %v776 = vpack.c.b16 %v761, %v760
        %v777 = vpack.c.b16 %v763, %v762
        %v778 = vpack.c.b16 %v765, %v764
        %v779 = vpack.c.b16 %v767, %v766
        %v780 = vpack.c.b16 %v769, %v768
        %v781 = vpack.c.b16 %v771, %v770
        %v782 = vpack.c.b16 %v773, %v772
        %v783 = vpack.c.b16 %v775, %v774
        %792 = vmatprep.subr.bf16.mxu0 0
        %793 = vmatpush1.bf16.msra.mxu0 %v783
        %794 = vmatprep.subr.bf16.mxu0 0
        %795 = vmatpush1.bf16.msra.mxu0 %v782
        %796 = vmatprep.subr.bf16.mxu0 0
        %797 = vmatpush1.bf16.msra.mxu0 %v781
        %798 = vmatprep.subr.bf16.mxu0 0
        %799 = vmatpush1.bf16.msra.mxu0 %v780
        %800 = vmatprep.subr.bf16.mxu0 0
        %801 = vmatpush1.bf16.msra.mxu0 %v779
        %802 = vmatprep.subr.bf16.mxu0 0
        %803 = vmatpush1.bf16.msra.mxu0 %v778
        %804 = vmatprep.subr.bf16.mxu0 0
        %805 = vmatpush1.bf16.msra.mxu0 %v777
        %806 = vmatprep.subr.bf16.mxu0 0
        %807 = vmatpush1.bf16.msra.mxu0 %v776
        %808 = vmatprep.subr.bf16.mxu0 0
        %809 = vmatpush2.bf16.msra.mxu0 0
        %810 = vmatprep.subr.bf16.mxu0 0
        %811 = vmatpush2.bf16.msra.mxu0 0
        %812 = vmatprep.subr.bf16.mxu0 0
        %813 = vmatpush2.bf16.msra.mxu0 0
        %814 = vmatprep.subr.bf16.mxu0 0
        %815 = vmatpush2.bf16.msra.mxu0 0
        %816 = vmatprep.subr.bf16.mxu0 0
        %817 = vmatpush2.bf16.msra.mxu0 0
        %818 = vmatprep.subr.bf16.mxu0 0
        %819 = vmatpush2.bf16.msra.mxu0 0
        %820 = vmatprep.subr.bf16.mxu0 0
        %821 = vmatpush2.bf16.msra.mxu0 0
        %822 = vmatprep.subr.bf16.mxu0 0
        %823 = vmatpush2.bf16.msra.mxu0 0
        %824 = vmatprep.mubr.bf16.mxu0 0
        %825 = vmatmul.mubr.bf16.gmra.mxu0 %v713
        %v826 = vpop.f32.mrf.mxu0
        %v827 = vadd.f32 %v742, %v826
        %v828 = vpop.f32.mrf.mxu0
        %v829 = vpop.f32.mrf.mxu0
        %v830 = vadd.f32 %v742, %v829
        %v831 = vpop.f32.mrf.mxu0
        %832 = vmatprep.mubr.bf16.mxu0 0
        %833 = vmatmul.mubr.bf16.gmra.mxu0 %v714
        %v834 = vpop.f32.mrf.mxu0
        %v835 = vadd.f32 %v742, %v834
        %v836 = vpop.f32.mrf.mxu0
        %v837 = vpop.f32.mrf.mxu0
        %v838 = vadd.f32 %v742, %v837
        %v839 = vpop.f32.mrf.mxu0
        %840 = vmatprep.mubr.bf16.mxu0 0
        %841 = vmatmul.mubr.bf16.gmra.mxu0 %v715
        %v842 = vpop.f32.mrf.mxu0
        %v843 = vadd.f32 %v742, %v842
        %v844 = vpop.f32.mrf.mxu0
        %v845 = vpop.f32.mrf.mxu0
        %v846 = vadd.f32 %v742, %v845
        %v847 = vpop.f32.mrf.mxu0
        %848 = vmatprep.mubr.bf16.mxu0 0
        %849 = vmatmul.mubr.bf16.gmra.mxu0 %v716
        %v850 = vpop.f32.mrf.mxu0
        %v851 = vadd.f32 %v742, %v850
        %v852 = vpop.f32.mrf.mxu0
        %v853 = vpop.f32.mrf.mxu0
        %v854 = vadd.f32 %v742, %v853
        %v855 = vpop.f32.mrf.mxu0
        %856 = vmatprep.mubr.bf16.mxu0 0
        %857 = vmatmul.mubr.bf16.gmra.mxu0 %v717
        %v858 = vpop.f32.mrf.mxu0
        %v859 = vadd.f32 %v742, %v858
        %v860 = vpop.f32.mrf.mxu0
        %v861 = vpop.f32.mrf.mxu0
        %v862 = vadd.f32 %v742, %v861
        %v863 = vpop.f32.mrf.mxu0
        %864 = vmatprep.mubr.bf16.mxu0 0
        %865 = vmatmul.mubr.bf16.gmra.mxu0 %v718
        %v866 = vpop.f32.mrf.mxu0
        %v867 = vadd.f32 %v742, %v866
        %v868 = vpop.f32.mrf.mxu0
        %v869 = vpop.f32.mrf.mxu0
        %v870 = vadd.f32 %v742, %v869
        %v871 = vpop.f32.mrf.mxu0
        %872 = vmatprep.mubr.bf16.mxu0 0
        %873 = vmatmul.mubr.bf16.gmra.mxu0 %v719
        %v874 = vpop.f32.mrf.mxu0
        %v875 = vadd.f32 %v742, %v874
        %v876 = vpop.f32.mrf.mxu0
        %v877 = vpop.f32.mrf.mxu0
        %v878 = vadd.f32 %v742, %v877
        %v879 = vpop.f32.mrf.mxu0
        %880 = vmatprep.mubr.bf16.mxu0 0
        %881 = vmatmul.mubr.bf16.gmra.mxu0 %v720
        %v882 = vpop.f32.mrf.mxu0
        %v883 = vadd.f32 %v742, %v882
        %v884 = vpop.f32.mrf.mxu0
        %v885 = vpop.f32.mrf.mxu0
        %v886 = vadd.f32 %v742, %v885
        %v887 = vpop.f32.mrf.mxu0
        %888 = vdwg.mxu0
        %889 = vadd.xlane.f32.xlu0 %v827
        %v890 = vpop.xlane.xlu0 %889
        %891 = vadd.xlane.f32.xlu0 %v830
        %v892 = vpop.xlane.xlu0 %891
        %893 = vadd.xlane.f32.xlu0 %v835
        %v894 = vpop.xlane.xlu0 %893
        %895 = vadd.xlane.f32.xlu0 %v838
        %v896 = vpop.xlane.xlu0 %895
        %897 = vadd.xlane.f32.xlu0 %v843
        %v898 = vpop.xlane.xlu0 %897
        %899 = vadd.xlane.f32.xlu0 %v846
        %v900 = vpop.xlane.xlu0 %899
        %901 = vadd.xlane.f32.xlu0 %v851
        %v902 = vpop.xlane.xlu0 %901
        %903 = vadd.xlane.f32.xlu0 %v854
        %v904 = vpop.xlane.xlu0 %903
        %905 = vadd.xlane.f32.xlu0 %v859
        %v906 = vpop.xlane.xlu0 %905
        %907 = vadd.xlane.f32.xlu0 %v862
        %v908 = vpop.xlane.xlu0 %907
        %909 = vadd.xlane.f32.xlu0 %v867
        %v910 = vpop.xlane.xlu0 %909
        %911 = vadd.xlane.f32.xlu0 %v870
        %v912 = vpop.xlane.xlu0 %911
        %913 = vadd.xlane.f32.xlu0 %v875
        %v914 = vpop.xlane.xlu0 %913
        %915 = vadd.xlane.f32.xlu0 %v878
        %v916 = vpop.xlane.xlu0 %915
        %917 = vadd.xlane.f32.xlu0 %v883
        %v918 = vpop.xlane.xlu0 %917
        %919 = vadd.xlane.f32.xlu0 %v886
        %v920 = vpop.xlane.xlu0 %919
        %v921 = vrcp.pop 128.0
        %v922 = vmul.f32 %v890, %v921
        %v923 = vmul.f32 %v892, %v921
        %v924 = vmul.f32 %v894, %v921
        %v925 = vmul.f32 %v896, %v921
        %v926 = vmul.f32 %v898, %v921
        %v927 = vmul.f32 %v900, %v921
        %v928 = vmul.f32 %v902, %v921
        %v929 = vmul.f32 %v904, %v921
        %v930 = vmul.f32 %v906, %v921
        %v931 = vmul.f32 %v908, %v921
        %v932 = vmul.f32 %v910, %v921
        %v933 = vmul.f32 %v912, %v921
        %v934 = vmul.f32 %v914, %v921
        %v935 = vmul.f32 %v916, %v921
        %v936 = vmul.f32 %v918, %v921
        %v937 = vmul.f32 %v920, %v921
        %v938 = vmul.f32 %v827, %v827
        %v939 = vmul.f32 %v830, %v830
        %v940 = vmul.f32 %v835, %v835
        %v941 = vmul.f32 %v838, %v838
        %v942 = vmul.f32 %v843, %v843
        %v943 = vmul.f32 %v846, %v846
        %v944 = vmul.f32 %v851, %v851
        %v945 = vmul.f32 %v854, %v854
        %v946 = vmul.f32 %v859, %v859
        %v947 = vmul.f32 %v862, %v862
        %v948 = vmul.f32 %v867, %v867
        %v949 = vmul.f32 %v870, %v870
        %v950 = vmul.f32 %v875, %v875
        %v951 = vmul.f32 %v878, %v878
        %v952 = vmul.f32 %v883, %v883
        %v953 = vmul.f32 %v886, %v886
        %954 = vadd.xlane.f32.xlu0 %v938
        %v955 = vpop.xlane.xlu0 %954
        %956 = vadd.xlane.f32.xlu0 %v939
        %v957 = vpop.xlane.xlu0 %956
        %958 = vadd.xlane.f32.xlu0 %v940
        %v959 = vpop.xlane.xlu0 %958
        %960 = vadd.xlane.f32.xlu0 %v941
        %v961 = vpop.xlane.xlu0 %960
        %962 = vadd.xlane.f32.xlu0 %v942
        %v963 = vpop.xlane.xlu0 %962
        %964 = vadd.xlane.f32.xlu0 %v943
        %v965 = vpop.xlane.xlu0 %964
        %966 = vadd.xlane.f32.xlu0 %v944
        %v967 = vpop.xlane.xlu0 %966
        %968 = vadd.xlane.f32.xlu0 %v945
        %v969 = vpop.xlane.xlu0 %968
        %970 = vadd.xlane.f32.xlu0 %v946
        %v971 = vpop.xlane.xlu0 %970
        %972 = vadd.xlane.f32.xlu0 %v947
        %v973 = vpop.xlane.xlu0 %972
        %974 = vadd.xlane.f32.xlu0 %v948
        %v975 = vpop.xlane.xlu0 %974
        %976 = vadd.xlane.f32.xlu0 %v949
        %v977 = vpop.xlane.xlu0 %976
        %978 = vadd.xlane.f32.xlu0 %v950
        %v979 = vpop.xlane.xlu0 %978
        %980 = vadd.xlane.f32.xlu0 %v951
        %v981 = vpop.xlane.xlu0 %980
        %982 = vadd.xlane.f32.xlu0 %v952
        %v983 = vpop.xlane.xlu0 %982
        %984 = vadd.xlane.f32.xlu0 %v953
        %v985 = vpop.xlane.xlu0 %984
        %v986 = vmul.f32 %v955, %v921
        %v987 = vmul.f32 %v957, %v921
        %v988 = vmul.f32 %v959, %v921
        %v989 = vmul.f32 %v961, %v921
        %v990 = vmul.f32 %v963, %v921
        %v991 = vmul.f32 %v965, %v921
        %v992 = vmul.f32 %v967, %v921
        %v993 = vmul.f32 %v969, %v921
        %v994 = vmul.f32 %v971, %v921
        %v995 = vmul.f32 %v973, %v921
        %v996 = vmul.f32 %v975, %v921
        %v997 = vmul.f32 %v977, %v921
        %v998 = vmul.f32 %v979, %v921
        %v999 = vmul.f32 %v981, %v921
        %v1000 = vmul.f32 %v983, %v921
        %v1001 = vmul.f32 %v985, %v921
        %v1002 = vmul.f32 %v922, %v922
        %v1003 = vmul.f32 %v923, %v923
        %v1004 = vmul.f32 %v924, %v924
        %v1005 = vmul.f32 %v925, %v925
        %v1006 = vmul.f32 %v926, %v926
        %v1007 = vmul.f32 %v927, %v927
        %v1008 = vmul.f32 %v928, %v928
        %v1009 = vmul.f32 %v929, %v929
        %v1010 = vmul.f32 %v930, %v930
        %v1011 = vmul.f32 %v931, %v931
        %v1012 = vmul.f32 %v932, %v932
        %v1013 = vmul.f32 %v933, %v933
        %v1014 = vmul.f32 %v934, %v934
        %v1015 = vmul.f32 %v935, %v935
        %v1016 = vmul.f32 %v936, %v936
        %v1017 = vmul.f32 %v937, %v937
        %v1018 = vsub.f32 %v986, %v1002
        %v1019 = vsub.f32 %v987, %v1003
        %v1020 = vsub.f32 %v988, %v1004
        %v1021 = vsub.f32 %v989, %v1005
        %v1022 = vsub.f32 %v990, %v1006
        %v1023 = vsub.f32 %v991, %v1007
        %v1024 = vsub.f32 %v992, %v1008
        %v1025 = vsub.f32 %v993, %v1009
        %v1026 = vsub.f32 %v994, %v1010
        %v1027 = vsub.f32 %v995, %v1011
        %v1028 = vsub.f32 %v996, %v1012
        %v1029 = vsub.f32 %v997, %v1013
        %v1030 = vsub.f32 %v998, %v1014
        %v1031 = vsub.f32 %v999, %v1015
        %v1032 = vsub.f32 %v1000, %v1016
        %v1033 = vsub.f32 %v1001, %v1017
        %v1034 = vmax.f32 %v1018, 0.0
        %v1035 = vmax.f32 %v1019, 0.0
        %v1036 = vmax.f32 %v1020, 0.0
        %v1037 = vmax.f32 %v1021, 0.0
        %v1038 = vmax.f32 %v1022, 0.0
        %v1039 = vmax.f32 %v1023, 0.0
        %v1040 = vmax.f32 %v1024, 0.0
        %v1041 = vmax.f32 %v1025, 0.0
        %v1042 = vmax.f32 %v1026, 0.0
        %v1043 = vmax.f32 %v1027, 0.0
        %v1044 = vmax.f32 %v1028, 0.0
        %v1045 = vmax.f32 %v1029, 0.0
        %v1046 = vmax.f32 %v1030, 0.0
        %v1047 = vmax.f32 %v1031, 0.0
        %v1048 = vmax.f32 %v1032, 0.0
        %v1049 = vmax.f32 %v1033, 0.0
        %v1050 = vsub.f32 %v827, %v922
        %v1051 = vsub.f32 %v830, %v923
        %v1052 = vsub.f32 %v835, %v924
        %v1053 = vsub.f32 %v838, %v925
        %v1054 = vsub.f32 %v843, %v926
        %v1055 = vsub.f32 %v846, %v927
        %v1056 = vsub.f32 %v851, %v928
        %v1057 = vsub.f32 %v854, %v929
        %v1058 = vsub.f32 %v859, %v930
        %v1059 = vsub.f32 %v862, %v931
        %v1060 = vsub.f32 %v867, %v932
        %v1061 = vsub.f32 %v870, %v933
        %v1062 = vsub.f32 %v875, %v934
        %v1063 = vsub.f32 %v878, %v935
        %v1064 = vsub.f32 %v883, %v936
        %v1065 = vsub.f32 %v886, %v937
        %v1066 = vadd.f32 %v1034, 1e-05
        %v1067 = vadd.f32 %v1035, 1e-05
        %v1068 = vadd.f32 %v1036, 1e-05
        %v1069 = vadd.f32 %v1037, 1e-05
        %v1070 = vadd.f32 %v1038, 1e-05
        %v1071 = vadd.f32 %v1039, 1e-05
        %v1072 = vadd.f32 %v1040, 1e-05
        %v1073 = vadd.f32 %v1041, 1e-05
        %v1074 = vadd.f32 %v1042, 1e-05
        %v1075 = vadd.f32 %v1043, 1e-05
        %v1076 = vadd.f32 %v1044, 1e-05
        %v1077 = vadd.f32 %v1045, 1e-05
        %v1078 = vadd.f32 %v1046, 1e-05
        %v1079 = vadd.f32 %v1047, 1e-05
        %v1080 = vadd.f32 %v1048, 1e-05
        %v1081 = vadd.f32 %v1049, 1e-05
        %v1082 = vrsqrt.pop %v1066
        %v1083 = vrsqrt.pop %v1067
        %v1084 = vrsqrt.pop %v1068
        %v1085 = vrsqrt.pop %v1069
        %v1086 = vrsqrt.pop %v1070
        %v1087 = vrsqrt.pop %v1071
        %v1088 = vrsqrt.pop %v1072
        %v1089 = vrsqrt.pop %v1073
        %v1090 = vrsqrt.pop %v1074
        %v1091 = vrsqrt.pop %v1075
        %v1092 = vrsqrt.pop %v1076
        %v1093 = vrsqrt.pop %v1077
        %v1094 = vrsqrt.pop %v1078
        %v1095 = vrsqrt.pop %v1079
        %v1096 = vrsqrt.pop %v1080
        %v1097 = vrsqrt.pop %v1081
        %v1098 = vmul.f32 %v1050, %v1082
        %v1099 = vmul.f32 %v1051, %v1083
        %v1100 = vmul.f32 %v1052, %v1084
        %v1101 = vmul.f32 %v1053, %v1085
        %v1102 = vmul.f32 %v1054, %v1086
        %v1103 = vmul.f32 %v1055, %v1087
        %v1104 = vmul.f32 %v1056, %v1088
        %v1105 = vmul.f32 %v1057, %v1089
        %v1106 = vmul.f32 %v1058, %v1090
        %v1107 = vmul.f32 %v1059, %v1091
        %v1108 = vmul.f32 %v1060, %v1092
        %v1109 = vmul.f32 %v1061, %v1093
        %v1110 = vmul.f32 %v1062, %v1094
        %v1111 = vmul.f32 %v1063, %v1095
        %v1112 = vmul.f32 %v1064, %v1096
        %v1113 = vmul.f32 %v1065, %v1097
        %v1114 = vld [vmem:[%s3] sm:$0x1]
        %v1116 = vlaneseq
        %v1117 = vshrl.u32 %v1116, 7
        %v1118 = vsub.s32 0, %v1117
        %v1119 = vrot.slane %v1114, %v1118
        %v1121 = vmul.f32 %v1098, %v1119
        %v1122 = vmul.f32 %v1099, %v1119
        %v1123 = vmul.f32 %v1100, %v1119
        %v1124 = vmul.f32 %v1101, %v1119
        %v1125 = vmul.f32 %v1102, %v1119
        %v1126 = vmul.f32 %v1103, %v1119
        %v1127 = vmul.f32 %v1104, %v1119
        %v1128 = vmul.f32 %v1105, %v1119
        %v1129 = vmul.f32 %v1106, %v1119
        %v1130 = vmul.f32 %v1107, %v1119
        %v1131 = vmul.f32 %v1108, %v1119
        %v1132 = vmul.f32 %v1109, %v1119
        %v1133 = vmul.f32 %v1110, %v1119
        %v1134 = vmul.f32 %v1111, %v1119
        %v1135 = vmul.f32 %v1112, %v1119
        %v1136 = vmul.f32 %v1113, %v1119
        %v1137 = vld [vmem:[%s4] sm:$0x1]
        %v1139 = vlaneseq
        %v1140 = vshrl.u32 %v1139, 7
        %v1141 = vsub.s32 0, %v1140
        %v1142 = vrot.slane %v1137, %v1141
        %v1144 = vadd.f32 %v1121, %v1142
        %v1145 = vadd.f32 %v1122, %v1142
        %v1146 = vadd.f32 %v1123, %v1142
        %v1147 = vadd.f32 %v1124, %v1142
        %v1148 = vadd.f32 %v1125, %v1142
        %v1149 = vadd.f32 %v1126, %v1142
        %v1150 = vadd.f32 %v1127, %v1142
        %v1151 = vadd.f32 %v1128, %v1142
        %v1152 = vadd.f32 %v1129, %v1142
        %v1153 = vadd.f32 %v1130, %v1142
        %v1154 = vadd.f32 %v1131, %v1142
        %v1155 = vadd.f32 %v1132, %v1142
        %v1156 = vadd.f32 %v1133, %v1142
        %v1157 = vadd.f32 %v1134, %v1142
        %v1158 = vadd.f32 %v1135, %v1142
        %v1159 = vadd.f32 %v1136, %v1142
        %v1160 = vmax.f32 %v1144, 0.0
        %v1161 = vmax.f32 %v1145, 0.0
        %v1162 = vmax.f32 %v1146, 0.0
        %v1163 = vmax.f32 %v1147, 0.0
        %v1164 = vmax.f32 %v1148, 0.0
        %v1165 = vmax.f32 %v1149, 0.0
        %v1166 = vmax.f32 %v1150, 0.0
        %v1167 = vmax.f32 %v1151, 0.0
        %v1168 = vmax.f32 %v1152, 0.0
        %v1169 = vmax.f32 %v1153, 0.0
        %v1170 = vmax.f32 %v1154, 0.0
        %v1171 = vmax.f32 %v1155, 0.0
        %v1172 = vmax.f32 %v1156, 0.0
        %v1173 = vmax.f32 %v1157, 0.0
        %v1174 = vmax.f32 %v1158, 0.0
        %v1175 = vmax.f32 %v1159, 0.0
        %v1176 = vpack.c.bf16 %v1161, %v1160
        %v1177 = vpack.c.bf16 %v1163, %v1162
        %v1178 = vpack.c.bf16 %v1165, %v1164
        %v1179 = vpack.c.bf16 %v1167, %v1166
        %v1180 = vpack.c.bf16 %v1169, %v1168
        %v1181 = vpack.c.bf16 %v1171, %v1170
        %v1182 = vpack.c.bf16 %v1173, %v1172
        %v1183 = vpack.c.bf16 %v1175, %v1174
        %v1184 = vld [vmem:[#allocation7] sm:$0xf]
        %v1185 = vld [vmem:[#allocation7 + $0x4] sm:$0xf]
        %v1186 = vld [vmem:[#allocation7 + $0x8] sm:$0xf]
        %v1187 = vld [vmem:[#allocation7 + $0xc] sm:$0xf]
        %v1188 = vld [vmem:[#allocation7 + $0x10] sm:$0xf]
        %v1189 = vld [vmem:[#allocation7 + $0x14] sm:$0xf]
        %v1190 = vld [vmem:[#allocation7 + $0x18] sm:$0xf]
        %v1191 = vld [vmem:[#allocation7 + $0x1c] sm:$0xf]
        %v1192 = vld [vmem:[#allocation7 + $0x20] sm:$0xf]
        %v1193 = vld [vmem:[#allocation7 + $0x24] sm:$0xf]
        %v1194 = vld [vmem:[#allocation7 + $0x28] sm:$0xf]
        %v1195 = vld [vmem:[#allocation7 + $0x2c] sm:$0xf]
        %v1196 = vld [vmem:[#allocation7 + $0x30] sm:$0xf]
        %v1197 = vld [vmem:[#allocation7 + $0x34] sm:$0xf]
        %v1198 = vld [vmem:[#allocation7 + $0x38] sm:$0xf]
        %v1199 = vld [vmem:[#allocation7 + $0x3c] sm:$0xf]
        %v1200 = vld [vmem:[%s6] sm:$0x1]
        %v1202 = vlaneseq
        %v1203 = vshrl.u32 %v1202, 7
        %v1204 = vsub.s32 0, %v1203
        %v1205 = vrot.slane %v1200, %v1204
        %v1223 = vunpack.c.l.b16 %v1184
        %v1224 = vunpack.c.l.b16 %v1185
        %v1225 = vunpack.c.l.b16 %v1186
        %v1226 = vunpack.c.l.b16 %v1187
        %v1227 = vunpack.c.l.b16 %v1188
        %v1228 = vunpack.c.l.b16 %v1189
        %v1229 = vunpack.c.l.b16 %v1190
        %v1230 = vunpack.c.l.b16 %v1191
        %v1231 = vunpack.c.l.b16 %v1192
        %v1232 = vunpack.c.l.b16 %v1193
        %v1233 = vunpack.c.l.b16 %v1194
        %v1234 = vunpack.c.l.b16 %v1195
        %v1235 = vunpack.c.l.b16 %v1196
        %v1236 = vunpack.c.l.b16 %v1197
        %v1237 = vunpack.c.l.b16 %v1198
        %v1238 = vunpack.c.l.b16 %v1199
        %v1239 = vpack.c.b16 %v1224, %v1223
        %v1240 = vpack.c.b16 %v1226, %v1225
        %v1241 = vpack.c.b16 %v1228, %v1227
        %v1242 = vpack.c.b16 %v1230, %v1229
        %v1243 = vpack.c.b16 %v1232, %v1231
        %v1244 = vpack.c.b16 %v1234, %v1233
        %v1245 = vpack.c.b16 %v1236, %v1235
        %v1246 = vpack.c.b16 %v1238, %v1237
        %1255 = vmatprep.subr.bf16.mxu0 0
        %1256 = vmatpush1.bf16.msra.mxu0 %v1246
        %1257 = vmatprep.subr.bf16.mxu0 0
        %1258 = vmatpush1.bf16.msra.mxu0 %v1245
        %1259 = vmatprep.subr.bf16.mxu0 0
        %1260 = vmatpush1.bf16.msra.mxu0 %v1244
        %1261 = vmatprep.subr.bf16.mxu0 0
        %1262 = vmatpush1.bf16.msra.mxu0 %v1243
        %1263 = vmatprep.subr.bf16.mxu0 0
        %1264 = vmatpush1.bf16.msra.mxu0 %v1242
        %1265 = vmatprep.subr.bf16.mxu0 0
        %1266 = vmatpush1.bf16.msra.mxu0 %v1241
        %1267 = vmatprep.subr.bf16.mxu0 0
        %1268 = vmatpush1.bf16.msra.mxu0 %v1240
        %1269 = vmatprep.subr.bf16.mxu0 0
        %1270 = vmatpush1.bf16.msra.mxu0 %v1239
        %1271 = vmatprep.subr.bf16.mxu0 0
        %1272 = vmatpush2.bf16.msra.mxu0 0
        %1273 = vmatprep.subr.bf16.mxu0 0
        %1274 = vmatpush2.bf16.msra.mxu0 0
        %1275 = vmatprep.subr.bf16.mxu0 0
        %1276 = vmatpush2.bf16.msra.mxu0 0
        %1277 = vmatprep.subr.bf16.mxu0 0
        %1278 = vmatpush2.bf16.msra.mxu0 0
        %1279 = vmatprep.subr.bf16.mxu0 0
        %1280 = vmatpush2.bf16.msra.mxu0 0
        %1281 = vmatprep.subr.bf16.mxu0 0
        %1282 = vmatpush2.bf16.msra.mxu0 0
        %1283 = vmatprep.subr.bf16.mxu0 0
        %1284 = vmatpush2.bf16.msra.mxu0 0
        %1285 = vmatprep.subr.bf16.mxu0 0
        %1286 = vmatpush2.bf16.msra.mxu0 0
        %1287 = vmatprep.mubr.bf16.mxu0 0
        %1288 = vmatmul.mubr.bf16.gmra.mxu0 %v1176
        %v1289 = vpop.f32.mrf.mxu0
        %v1290 = vadd.f32 %v1205, %v1289
        %v1291 = vpop.f32.mrf.mxu0
        %v1292 = vpop.f32.mrf.mxu0
        %v1293 = vadd.f32 %v1205, %v1292
        %v1294 = vpop.f32.mrf.mxu0
        %1295 = vmatprep.mubr.bf16.mxu0 0
        %1296 = vmatmul.mubr.bf16.gmra.mxu0 %v1177
        %v1297 = vpop.f32.mrf.mxu0
        %v1298 = vadd.f32 %v1205, %v1297
        %v1299 = vpop.f32.mrf.mxu0
        %v1300 = vpop.f32.mrf.mxu0
        %v1301 = vadd.f32 %v1205, %v1300
        %v1302 = vpop.f32.mrf.mxu0
        %1303 = vmatprep.mubr.bf16.mxu0 0
        %1304 = vmatmul.mubr.bf16.gmra.mxu0 %v1178
        %v1305 = vpop.f32.mrf.mxu0
        %v1306 = vadd.f32 %v1205, %v1305
        %v1307 = vpop.f32.mrf.mxu0
        %v1308 = vpop.f32.mrf.mxu0
        %v1309 = vadd.f32 %v1205, %v1308
        %v1310 = vpop.f32.mrf.mxu0
        %1311 = vmatprep.mubr.bf16.mxu0 0
        %1312 = vmatmul.mubr.bf16.gmra.mxu0 %v1179
        %v1313 = vpop.f32.mrf.mxu0
        %v1314 = vadd.f32 %v1205, %v1313
        %v1315 = vpop.f32.mrf.mxu0
        %v1316 = vpop.f32.mrf.mxu0
        %v1317 = vadd.f32 %v1205, %v1316
        %v1318 = vpop.f32.mrf.mxu0
        %1319 = vmatprep.mubr.bf16.mxu0 0
        %1320 = vmatmul.mubr.bf16.gmra.mxu0 %v1180
        %v1321 = vpop.f32.mrf.mxu0
        %v1322 = vadd.f32 %v1205, %v1321
        %v1323 = vpop.f32.mrf.mxu0
        %v1324 = vpop.f32.mrf.mxu0
        %v1325 = vadd.f32 %v1205, %v1324
        %v1326 = vpop.f32.mrf.mxu0
        %1327 = vmatprep.mubr.bf16.mxu0 0
        %1328 = vmatmul.mubr.bf16.gmra.mxu0 %v1181
        %v1329 = vpop.f32.mrf.mxu0
        %v1330 = vadd.f32 %v1205, %v1329
        %v1331 = vpop.f32.mrf.mxu0
        %v1332 = vpop.f32.mrf.mxu0
        %v1333 = vadd.f32 %v1205, %v1332
        %v1334 = vpop.f32.mrf.mxu0
        %1335 = vmatprep.mubr.bf16.mxu0 0
        %1336 = vmatmul.mubr.bf16.gmra.mxu0 %v1182
        %v1337 = vpop.f32.mrf.mxu0
        %v1338 = vadd.f32 %v1205, %v1337
        %v1339 = vpop.f32.mrf.mxu0
        %v1340 = vpop.f32.mrf.mxu0
        %v1341 = vadd.f32 %v1205, %v1340
        %v1342 = vpop.f32.mrf.mxu0
        %1343 = vmatprep.mubr.bf16.mxu0 0
        %1344 = vmatmul.mubr.bf16.gmra.mxu0 %v1183
        %v1345 = vpop.f32.mrf.mxu0
        %v1346 = vadd.f32 %v1205, %v1345
        %v1347 = vpop.f32.mrf.mxu0
        %v1348 = vpop.f32.mrf.mxu0
        %v1349 = vadd.f32 %v1205, %v1348
        %v1350 = vpop.f32.mrf.mxu0
        %1351 = vdwg.mxu0
        %1352 = vadd.xlane.f32.xlu0 %v1290
        %v1353 = vpop.xlane.xlu0 %1352
        %1354 = vadd.xlane.f32.xlu0 %v1293
        %v1355 = vpop.xlane.xlu0 %1354
        %1356 = vadd.xlane.f32.xlu0 %v1298
        %v1357 = vpop.xlane.xlu0 %1356
        %1358 = vadd.xlane.f32.xlu0 %v1301
        %v1359 = vpop.xlane.xlu0 %1358
        %1360 = vadd.xlane.f32.xlu0 %v1306
        %v1361 = vpop.xlane.xlu0 %1360
        %1362 = vadd.xlane.f32.xlu0 %v1309
        %v1363 = vpop.xlane.xlu0 %1362
        %1364 = vadd.xlane.f32.xlu0 %v1314
        %v1365 = vpop.xlane.xlu0 %1364
        %1366 = vadd.xlane.f32.xlu0 %v1317
        %v1367 = vpop.xlane.xlu0 %1366
        %1368 = vadd.xlane.f32.xlu0 %v1322
        %v1369 = vpop.xlane.xlu0 %1368
        %1370 = vadd.xlane.f32.xlu0 %v1325
        %v1371 = vpop.xlane.xlu0 %1370
        %1372 = vadd.xlane.f32.xlu0 %v1330
        %v1373 = vpop.xlane.xlu0 %1372
        %1374 = vadd.xlane.f32.xlu0 %v1333
        %v1375 = vpop.xlane.xlu0 %1374
        %1376 = vadd.xlane.f32.xlu0 %v1338
        %v1377 = vpop.xlane.xlu0 %1376
        %1378 = vadd.xlane.f32.xlu0 %v1341
        %v1379 = vpop.xlane.xlu0 %1378
        %1380 = vadd.xlane.f32.xlu0 %v1346
        %v1381 = vpop.xlane.xlu0 %1380
        %1382 = vadd.xlane.f32.xlu0 %v1349
        %v1383 = vpop.xlane.xlu0 %1382
        %v1384 = vmul.f32 %v1353, %v921
        %v1385 = vmul.f32 %v1355, %v921
        %v1386 = vmul.f32 %v1357, %v921
        %v1387 = vmul.f32 %v1359, %v921
        %v1388 = vmul.f32 %v1361, %v921
        %v1389 = vmul.f32 %v1363, %v921
        %v1390 = vmul.f32 %v1365, %v921
        %v1391 = vmul.f32 %v1367, %v921
        %v1392 = vmul.f32 %v1369, %v921
        %v1393 = vmul.f32 %v1371, %v921
        %v1394 = vmul.f32 %v1373, %v921
        %v1395 = vmul.f32 %v1375, %v921
        %v1396 = vmul.f32 %v1377, %v921
        %v1397 = vmul.f32 %v1379, %v921
        %v1398 = vmul.f32 %v1381, %v921
        %v1399 = vmul.f32 %v1383, %v921
        %v1400 = vmul.f32 %v1290, %v1290
        %v1401 = vmul.f32 %v1293, %v1293
        %v1402 = vmul.f32 %v1298, %v1298
        %v1403 = vmul.f32 %v1301, %v1301
        %v1404 = vmul.f32 %v1306, %v1306
        %v1405 = vmul.f32 %v1309, %v1309
        %v1406 = vmul.f32 %v1314, %v1314
        %v1407 = vmul.f32 %v1317, %v1317
        %v1408 = vmul.f32 %v1322, %v1322
        %v1409 = vmul.f32 %v1325, %v1325
        %v1410 = vmul.f32 %v1330, %v1330
        %v1411 = vmul.f32 %v1333, %v1333
        %v1412 = vmul.f32 %v1338, %v1338
        %v1413 = vmul.f32 %v1341, %v1341
        %v1414 = vmul.f32 %v1346, %v1346
        %v1415 = vmul.f32 %v1349, %v1349
        %1416 = vadd.xlane.f32.xlu0 %v1400
        %v1417 = vpop.xlane.xlu0 %1416
        %1418 = vadd.xlane.f32.xlu0 %v1401
        %v1419 = vpop.xlane.xlu0 %1418
        %1420 = vadd.xlane.f32.xlu0 %v1402
        %v1421 = vpop.xlane.xlu0 %1420
        %1422 = vadd.xlane.f32.xlu0 %v1403
        %v1423 = vpop.xlane.xlu0 %1422
        %1424 = vadd.xlane.f32.xlu0 %v1404
        %v1425 = vpop.xlane.xlu0 %1424
        %1426 = vadd.xlane.f32.xlu0 %v1405
        %v1427 = vpop.xlane.xlu0 %1426
        %1428 = vadd.xlane.f32.xlu0 %v1406
        %v1429 = vpop.xlane.xlu0 %1428
        %1430 = vadd.xlane.f32.xlu0 %v1407
        %v1431 = vpop.xlane.xlu0 %1430
        %1432 = vadd.xlane.f32.xlu0 %v1408
        %v1433 = vpop.xlane.xlu0 %1432
        %1434 = vadd.xlane.f32.xlu0 %v1409
        %v1435 = vpop.xlane.xlu0 %1434
        %1436 = vadd.xlane.f32.xlu0 %v1410
        %v1437 = vpop.xlane.xlu0 %1436
        %1438 = vadd.xlane.f32.xlu0 %v1411
        %v1439 = vpop.xlane.xlu0 %1438
        %1440 = vadd.xlane.f32.xlu0 %v1412
        %v1441 = vpop.xlane.xlu0 %1440
        %1442 = vadd.xlane.f32.xlu0 %v1413
        %v1443 = vpop.xlane.xlu0 %1442
        %1444 = vadd.xlane.f32.xlu0 %v1414
        %v1445 = vpop.xlane.xlu0 %1444
        %1446 = vadd.xlane.f32.xlu0 %v1415
        %v1447 = vpop.xlane.xlu0 %1446
        %v1448 = vmul.f32 %v1417, %v921
        %v1449 = vmul.f32 %v1419, %v921
        %v1450 = vmul.f32 %v1421, %v921
        %v1451 = vmul.f32 %v1423, %v921
        %v1452 = vmul.f32 %v1425, %v921
        %v1453 = vmul.f32 %v1427, %v921
        %v1454 = vmul.f32 %v1429, %v921
        %v1455 = vmul.f32 %v1431, %v921
        %v1456 = vmul.f32 %v1433, %v921
        %v1457 = vmul.f32 %v1435, %v921
        %v1458 = vmul.f32 %v1437, %v921
        %v1459 = vmul.f32 %v1439, %v921
        %v1460 = vmul.f32 %v1441, %v921
        %v1461 = vmul.f32 %v1443, %v921
        %v1462 = vmul.f32 %v1445, %v921
        %v1463 = vmul.f32 %v1447, %v921
        %v1464 = vmul.f32 %v1384, %v1384
        %v1465 = vmul.f32 %v1385, %v1385
        %v1466 = vmul.f32 %v1386, %v1386
        %v1467 = vmul.f32 %v1387, %v1387
        %v1468 = vmul.f32 %v1388, %v1388
        %v1469 = vmul.f32 %v1389, %v1389
        %v1470 = vmul.f32 %v1390, %v1390
        %v1471 = vmul.f32 %v1391, %v1391
        %v1472 = vmul.f32 %v1392, %v1392
        %v1473 = vmul.f32 %v1393, %v1393
        %v1474 = vmul.f32 %v1394, %v1394
        %v1475 = vmul.f32 %v1395, %v1395
        %v1476 = vmul.f32 %v1396, %v1396
        %v1477 = vmul.f32 %v1397, %v1397
        %v1478 = vmul.f32 %v1398, %v1398
        %v1479 = vmul.f32 %v1399, %v1399
        %v1480 = vsub.f32 %v1448, %v1464
        %v1481 = vsub.f32 %v1449, %v1465
        %v1482 = vsub.f32 %v1450, %v1466
        %v1483 = vsub.f32 %v1451, %v1467
        %v1484 = vsub.f32 %v1452, %v1468
        %v1485 = vsub.f32 %v1453, %v1469
        %v1486 = vsub.f32 %v1454, %v1470
        %v1487 = vsub.f32 %v1455, %v1471
        %v1488 = vsub.f32 %v1456, %v1472
        %v1489 = vsub.f32 %v1457, %v1473
        %v1490 = vsub.f32 %v1458, %v1474
        %v1491 = vsub.f32 %v1459, %v1475
        %v1492 = vsub.f32 %v1460, %v1476
        %v1493 = vsub.f32 %v1461, %v1477
        %v1494 = vsub.f32 %v1462, %v1478
        %v1495 = vsub.f32 %v1463, %v1479
        %v1496 = vmax.f32 %v1480, 0.0
        %v1497 = vmax.f32 %v1481, 0.0
        %v1498 = vmax.f32 %v1482, 0.0
        %v1499 = vmax.f32 %v1483, 0.0
        %v1500 = vmax.f32 %v1484, 0.0
        %v1501 = vmax.f32 %v1485, 0.0
        %v1502 = vmax.f32 %v1486, 0.0
        %v1503 = vmax.f32 %v1487, 0.0
        %v1504 = vmax.f32 %v1488, 0.0
        %v1505 = vmax.f32 %v1489, 0.0
        %v1506 = vmax.f32 %v1490, 0.0
        %v1507 = vmax.f32 %v1491, 0.0
        %v1508 = vmax.f32 %v1492, 0.0
        %v1509 = vmax.f32 %v1493, 0.0
        %v1510 = vmax.f32 %v1494, 0.0
        %v1511 = vmax.f32 %v1495, 0.0
        %v1512 = vsub.f32 %v1290, %v1384
        %v1513 = vsub.f32 %v1293, %v1385
        %v1514 = vsub.f32 %v1298, %v1386
        %v1515 = vsub.f32 %v1301, %v1387
        %v1516 = vsub.f32 %v1306, %v1388
        %v1517 = vsub.f32 %v1309, %v1389
        %v1518 = vsub.f32 %v1314, %v1390
        %v1519 = vsub.f32 %v1317, %v1391
        %v1520 = vsub.f32 %v1322, %v1392
        %v1521 = vsub.f32 %v1325, %v1393
        %v1522 = vsub.f32 %v1330, %v1394
        %v1523 = vsub.f32 %v1333, %v1395
        %v1524 = vsub.f32 %v1338, %v1396
        %v1525 = vsub.f32 %v1341, %v1397
        %v1526 = vsub.f32 %v1346, %v1398
        %v1527 = vsub.f32 %v1349, %v1399
        %v1528 = vadd.f32 %v1496, 1e-05
        %v1529 = vadd.f32 %v1497, 1e-05
        %v1530 = vadd.f32 %v1498, 1e-05
        %v1531 = vadd.f32 %v1499, 1e-05
        %v1532 = vadd.f32 %v1500, 1e-05
        %v1533 = vadd.f32 %v1501, 1e-05
        %v1534 = vadd.f32 %v1502, 1e-05
        %v1535 = vadd.f32 %v1503, 1e-05
        %v1536 = vadd.f32 %v1504, 1e-05
        %v1537 = vadd.f32 %v1505, 1e-05
        %v1538 = vadd.f32 %v1506, 1e-05
        %v1539 = vadd.f32 %v1507, 1e-05
        %v1540 = vadd.f32 %v1508, 1e-05
        %v1541 = vadd.f32 %v1509, 1e-05
        %v1542 = vadd.f32 %v1510, 1e-05
        %v1543 = vadd.f32 %v1511, 1e-05
        %v1544 = vrsqrt.pop %v1528
        %v1545 = vrsqrt.pop %v1529
        %v1546 = vrsqrt.pop %v1530
        %v1547 = vrsqrt.pop %v1531
        %v1548 = vrsqrt.pop %v1532
        %v1549 = vrsqrt.pop %v1533
        %v1550 = vrsqrt.pop %v1534
        %v1551 = vrsqrt.pop %v1535
        %v1552 = vrsqrt.pop %v1536
        %v1553 = vrsqrt.pop %v1537
        %v1554 = vrsqrt.pop %v1538
        %v1555 = vrsqrt.pop %v1539
        %v1556 = vrsqrt.pop %v1540
        %v1557 = vrsqrt.pop %v1541
        %v1558 = vrsqrt.pop %v1542
        %v1559 = vrsqrt.pop %v1543
        %v1560 = vmul.f32 %v1512, %v1544
        %v1561 = vmul.f32 %v1513, %v1545
        %v1562 = vmul.f32 %v1514, %v1546
        %v1563 = vmul.f32 %v1515, %v1547
        %v1564 = vmul.f32 %v1516, %v1548
        %v1565 = vmul.f32 %v1517, %v1549
        %v1566 = vmul.f32 %v1518, %v1550
        %v1567 = vmul.f32 %v1519, %v1551
        %v1568 = vmul.f32 %v1520, %v1552
        %v1569 = vmul.f32 %v1521, %v1553
        %v1570 = vmul.f32 %v1522, %v1554
        %v1571 = vmul.f32 %v1523, %v1555
        %v1572 = vmul.f32 %v1524, %v1556
        %v1573 = vmul.f32 %v1525, %v1557
        %v1574 = vmul.f32 %v1526, %v1558
        %v1575 = vmul.f32 %v1527, %v1559
        %v1576 = vld [vmem:[%s7] sm:$0x1]
        %v1578 = vlaneseq
        %v1579 = vshrl.u32 %v1578, 7
        %v1580 = vsub.s32 0, %v1579
        %v1581 = vrot.slane %v1576, %v1580
        %v1583 = vmul.f32 %v1560, %v1581
        %v1584 = vmul.f32 %v1561, %v1581
        %v1585 = vmul.f32 %v1562, %v1581
        %v1586 = vmul.f32 %v1563, %v1581
        %v1587 = vmul.f32 %v1564, %v1581
        %v1588 = vmul.f32 %v1565, %v1581
        %v1589 = vmul.f32 %v1566, %v1581
        %v1590 = vmul.f32 %v1567, %v1581
        %v1591 = vmul.f32 %v1568, %v1581
        %v1592 = vmul.f32 %v1569, %v1581
        %v1593 = vmul.f32 %v1570, %v1581
        %v1594 = vmul.f32 %v1571, %v1581
        %v1595 = vmul.f32 %v1572, %v1581
        %v1596 = vmul.f32 %v1573, %v1581
        %v1597 = vmul.f32 %v1574, %v1581
        %v1598 = vmul.f32 %v1575, %v1581
        %v1599 = vld [vmem:[%s8] sm:$0x1]
        %v1601 = vlaneseq
        %v1602 = vshrl.u32 %v1601, 7
        %v1603 = vsub.s32 0, %v1602
        %v1604 = vrot.slane %v1599, %v1603
        %v1606 = vadd.f32 %v1583, %v1604
        %v1607 = vadd.f32 %v1584, %v1604
        %v1608 = vadd.f32 %v1585, %v1604
        %v1609 = vadd.f32 %v1586, %v1604
        %v1610 = vadd.f32 %v1587, %v1604
        %v1611 = vadd.f32 %v1588, %v1604
        %v1612 = vadd.f32 %v1589, %v1604
        %v1613 = vadd.f32 %v1590, %v1604
        %v1614 = vadd.f32 %v1591, %v1604
        %v1615 = vadd.f32 %v1592, %v1604
        %v1616 = vadd.f32 %v1593, %v1604
        %v1617 = vadd.f32 %v1594, %v1604
        %v1618 = vadd.f32 %v1595, %v1604
        %v1619 = vadd.f32 %v1596, %v1604
        %v1620 = vadd.f32 %v1597, %v1604
        %v1621 = vadd.f32 %v1598, %v1604
        %v1622 = vmax.f32 %v1606, 0.0
        %v1623 = vmax.f32 %v1607, 0.0
        %v1624 = vmax.f32 %v1608, 0.0
        %v1625 = vmax.f32 %v1609, 0.0
        %v1626 = vmax.f32 %v1610, 0.0
        %v1627 = vmax.f32 %v1611, 0.0
        %v1628 = vmax.f32 %v1612, 0.0
        %v1629 = vmax.f32 %v1613, 0.0
        %v1630 = vmax.f32 %v1614, 0.0
        %v1631 = vmax.f32 %v1615, 0.0
        %v1632 = vmax.f32 %v1616, 0.0
        %v1633 = vmax.f32 %v1617, 0.0
        %v1634 = vmax.f32 %v1618, 0.0
        %v1635 = vmax.f32 %v1619, 0.0
        %v1636 = vmax.f32 %v1620, 0.0
        %v1637 = vmax.f32 %v1621, 0.0
        %v1638 = vpack.c.bf16 %v1623, %v1622
        %v1639 = vpack.c.bf16 %v1625, %v1624
        %v1640 = vpack.c.bf16 %v1627, %v1626
        %v1641 = vpack.c.bf16 %v1629, %v1628
        %v1642 = vpack.c.bf16 %v1631, %v1630
        %v1643 = vpack.c.bf16 %v1633, %v1632
        %v1644 = vpack.c.bf16 %v1635, %v1634
        %v1645 = vpack.c.bf16 %v1637, %v1636
        %v1646 = vld [vmem:[#allocation8] sm:$0xf]
        %v1647 = vld [vmem:[#allocation8 + $0x4] sm:$0xf]
        %v1648 = vld [vmem:[#allocation8 + $0x8] sm:$0xf]
        %v1649 = vld [vmem:[#allocation8 + $0xc] sm:$0xf]
        %v1650 = vld [vmem:[#allocation8 + $0x10] sm:$0xf]
        %v1651 = vld [vmem:[#allocation8 + $0x14] sm:$0xf]
        %v1652 = vld [vmem:[#allocation8 + $0x18] sm:$0xf]
        %v1653 = vld [vmem:[#allocation8 + $0x1c] sm:$0xf]
        %v1654 = vld [vmem:[#allocation8 + $0x20] sm:$0xf]
        %v1655 = vld [vmem:[#allocation8 + $0x24] sm:$0xf]
        %v1656 = vld [vmem:[#allocation8 + $0x28] sm:$0xf]
        %v1657 = vld [vmem:[#allocation8 + $0x2c] sm:$0xf]
        %v1658 = vld [vmem:[#allocation8 + $0x30] sm:$0xf]
        %v1659 = vld [vmem:[#allocation8 + $0x34] sm:$0xf]
        %v1660 = vld [vmem:[#allocation8 + $0x38] sm:$0xf]
        %v1661 = vld [vmem:[#allocation8 + $0x3c] sm:$0xf]
        %v1662 = vld [vmem:[%s10] sm:$0x1]
        %v1664 = vlaneseq
        %v1665 = vshrl.u32 %v1664, 7
        %v1666 = vsub.s32 0, %v1665
        %v1667 = vrot.slane %v1662, %v1666
        %v1685 = vunpack.c.l.b16 %v1646
        %v1686 = vunpack.c.l.b16 %v1647
        %v1687 = vunpack.c.l.b16 %v1648
        %v1688 = vunpack.c.l.b16 %v1649
        %v1689 = vunpack.c.l.b16 %v1650
        %v1690 = vunpack.c.l.b16 %v1651
        %v1691 = vunpack.c.l.b16 %v1652
        %v1692 = vunpack.c.l.b16 %v1653
        %v1693 = vunpack.c.l.b16 %v1654
        %v1694 = vunpack.c.l.b16 %v1655
        %v1695 = vunpack.c.l.b16 %v1656
        %v1696 = vunpack.c.l.b16 %v1657
        %v1697 = vunpack.c.l.b16 %v1658
        %v1698 = vunpack.c.l.b16 %v1659
        %v1699 = vunpack.c.l.b16 %v1660
        %v1700 = vunpack.c.l.b16 %v1661
        %v1701 = vpack.c.b16 %v1686, %v1685
        %v1702 = vpack.c.b16 %v1688, %v1687
        %v1703 = vpack.c.b16 %v1690, %v1689
        %v1704 = vpack.c.b16 %v1692, %v1691
        %v1705 = vpack.c.b16 %v1694, %v1693
        %v1706 = vpack.c.b16 %v1696, %v1695
        %v1707 = vpack.c.b16 %v1698, %v1697
        %v1708 = vpack.c.b16 %v1700, %v1699
        %1717 = vmatprep.subr.bf16.mxu0 0
        %1718 = vmatpush1.bf16.msra.mxu0 %v1708
        %1719 = vmatprep.subr.bf16.mxu0 0
        %1720 = vmatpush1.bf16.msra.mxu0 %v1707
        %1721 = vmatprep.subr.bf16.mxu0 0
        %1722 = vmatpush1.bf16.msra.mxu0 %v1706
        %1723 = vmatprep.subr.bf16.mxu0 0
        %1724 = vmatpush1.bf16.msra.mxu0 %v1705
        %1725 = vmatprep.subr.bf16.mxu0 0
        %1726 = vmatpush1.bf16.msra.mxu0 %v1704
        %1727 = vmatprep.subr.bf16.mxu0 0
        %1728 = vmatpush1.bf16.msra.mxu0 %v1703
        %1729 = vmatprep.subr.bf16.mxu0 0
        %1730 = vmatpush1.bf16.msra.mxu0 %v1702
        %1731 = vmatprep.subr.bf16.mxu0 0
        %1732 = vmatpush1.bf16.msra.mxu0 %v1701
        %1733 = vmatprep.subr.bf16.mxu0 0
        %1734 = vmatpush2.bf16.msra.mxu0 0
        %1735 = vmatprep.subr.bf16.mxu0 0
        %1736 = vmatpush2.bf16.msra.mxu0 0
        %1737 = vmatprep.subr.bf16.mxu0 0
        %1738 = vmatpush2.bf16.msra.mxu0 0
        %1739 = vmatprep.subr.bf16.mxu0 0
        %1740 = vmatpush2.bf16.msra.mxu0 0
        %1741 = vmatprep.subr.bf16.mxu0 0
        %1742 = vmatpush2.bf16.msra.mxu0 0
        %1743 = vmatprep.subr.bf16.mxu0 0
        %1744 = vmatpush2.bf16.msra.mxu0 0
        %1745 = vmatprep.subr.bf16.mxu0 0
        %1746 = vmatpush2.bf16.msra.mxu0 0
        %1747 = vmatprep.subr.bf16.mxu0 0
        %1748 = vmatpush2.bf16.msra.mxu0 0
        %1749 = vmatprep.mubr.bf16.mxu0 0
        %1750 = vmatmul.mubr.bf16.gmra.mxu0 %v1638
        %v1751 = vpop.f32.mrf.mxu0
        %v1752 = vadd.f32 %v1667, %v1751
        %v1753 = vpop.f32.mrf.mxu0
        %v1754 = vpop.f32.mrf.mxu0
        %v1755 = vadd.f32 %v1667, %v1754
        %v1756 = vpop.f32.mrf.mxu0
        %1757 = vmatprep.mubr.bf16.mxu0 0
        %1758 = vmatmul.mubr.bf16.gmra.mxu0 %v1639
        %v1759 = vpop.f32.mrf.mxu0
        %v1760 = vadd.f32 %v1667, %v1759
        %v1761 = vpop.f32.mrf.mxu0
        %v1762 = vpop.f32.mrf.mxu0
        %v1763 = vadd.f32 %v1667, %v1762
        %v1764 = vpop.f32.mrf.mxu0
        %1765 = vmatprep.mubr.bf16.mxu0 0
        %1766 = vmatmul.mubr.bf16.gmra.mxu0 %v1640
        %v1767 = vpop.f32.mrf.mxu0
        %v1768 = vadd.f32 %v1667, %v1767
        %v1769 = vpop.f32.mrf.mxu0
        %v1770 = vpop.f32.mrf.mxu0
        %v1771 = vadd.f32 %v1667, %v1770
        %v1772 = vpop.f32.mrf.mxu0
        %1773 = vmatprep.mubr.bf16.mxu0 0
        %1774 = vmatmul.mubr.bf16.gmra.mxu0 %v1641
        %v1775 = vpop.f32.mrf.mxu0
        %v1776 = vadd.f32 %v1667, %v1775
        %v1777 = vpop.f32.mrf.mxu0
        %v1778 = vpop.f32.mrf.mxu0
        %v1779 = vadd.f32 %v1667, %v1778
        %v1780 = vpop.f32.mrf.mxu0
        %1781 = vmatprep.mubr.bf16.mxu0 0
        %1782 = vmatmul.mubr.bf16.gmra.mxu0 %v1642
        %v1783 = vpop.f32.mrf.mxu0
        %v1784 = vadd.f32 %v1667, %v1783
        %v1785 = vpop.f32.mrf.mxu0
        %v1786 = vpop.f32.mrf.mxu0
        %v1787 = vadd.f32 %v1667, %v1786
        %v1788 = vpop.f32.mrf.mxu0
        %1789 = vmatprep.mubr.bf16.mxu0 0
        %1790 = vmatmul.mubr.bf16.gmra.mxu0 %v1643
        %v1791 = vpop.f32.mrf.mxu0
        %v1792 = vadd.f32 %v1667, %v1791
        %v1793 = vpop.f32.mrf.mxu0
        %v1794 = vpop.f32.mrf.mxu0
        %v1795 = vadd.f32 %v1667, %v1794
        %v1796 = vpop.f32.mrf.mxu0
        %1797 = vmatprep.mubr.bf16.mxu0 0
        %1798 = vmatmul.mubr.bf16.gmra.mxu0 %v1644
        %v1799 = vpop.f32.mrf.mxu0
        %v1800 = vadd.f32 %v1667, %v1799
        %v1801 = vpop.f32.mrf.mxu0
        %v1802 = vpop.f32.mrf.mxu0
        %v1803 = vadd.f32 %v1667, %v1802
        %v1804 = vpop.f32.mrf.mxu0
        %1805 = vmatprep.mubr.bf16.mxu0 0
        %1806 = vmatmul.mubr.bf16.gmra.mxu0 %v1645
        %v1807 = vpop.f32.mrf.mxu0
        %v1808 = vadd.f32 %v1667, %v1807
        %v1809 = vpop.f32.mrf.mxu0
        %v1810 = vpop.f32.mrf.mxu0
        %v1811 = vadd.f32 %v1667, %v1810
        %v1812 = vpop.f32.mrf.mxu0
        %1813 = vdwg.mxu0
        %1814 = vadd.xlane.f32.xlu0 %v1752
        %v1815 = vpop.xlane.xlu0 %1814
        %1816 = vadd.xlane.f32.xlu0 %v1755
        %v1817 = vpop.xlane.xlu0 %1816
        %1818 = vadd.xlane.f32.xlu0 %v1760
        %v1819 = vpop.xlane.xlu0 %1818
        %1820 = vadd.xlane.f32.xlu0 %v1763
        %v1821 = vpop.xlane.xlu0 %1820
        %1822 = vadd.xlane.f32.xlu0 %v1768
        %v1823 = vpop.xlane.xlu0 %1822
        %1824 = vadd.xlane.f32.xlu0 %v1771
        %v1825 = vpop.xlane.xlu0 %1824
        %1826 = vadd.xlane.f32.xlu0 %v1776
        %v1827 = vpop.xlane.xlu0 %1826
        %1828 = vadd.xlane.f32.xlu0 %v1779
        %v1829 = vpop.xlane.xlu0 %1828
        %1830 = vadd.xlane.f32.xlu0 %v1784
        %v1831 = vpop.xlane.xlu0 %1830
        %1832 = vadd.xlane.f32.xlu0 %v1787
        %v1833 = vpop.xlane.xlu0 %1832
        %1834 = vadd.xlane.f32.xlu0 %v1792
        %v1835 = vpop.xlane.xlu0 %1834
        %1836 = vadd.xlane.f32.xlu0 %v1795
        %v1837 = vpop.xlane.xlu0 %1836
        %1838 = vadd.xlane.f32.xlu0 %v1800
        %v1839 = vpop.xlane.xlu0 %1838
        %1840 = vadd.xlane.f32.xlu0 %v1803
        %v1841 = vpop.xlane.xlu0 %1840
        %1842 = vadd.xlane.f32.xlu0 %v1808
        %v1843 = vpop.xlane.xlu0 %1842
        %1844 = vadd.xlane.f32.xlu0 %v1811
        %v1845 = vpop.xlane.xlu0 %1844
        %v1846 = vmul.f32 %v1815, %v921
        %v1847 = vmul.f32 %v1817, %v921
        %v1848 = vmul.f32 %v1819, %v921
        %v1849 = vmul.f32 %v1821, %v921
        %v1850 = vmul.f32 %v1823, %v921
        %v1851 = vmul.f32 %v1825, %v921
        %v1852 = vmul.f32 %v1827, %v921
        %v1853 = vmul.f32 %v1829, %v921
        %v1854 = vmul.f32 %v1831, %v921
        %v1855 = vmul.f32 %v1833, %v921
        %v1856 = vmul.f32 %v1835, %v921
        %v1857 = vmul.f32 %v1837, %v921
        %v1858 = vmul.f32 %v1839, %v921
        %v1859 = vmul.f32 %v1841, %v921
        %v1860 = vmul.f32 %v1843, %v921
        %v1861 = vmul.f32 %v1845, %v921
        %v1862 = vmul.f32 %v1752, %v1752
        %v1863 = vmul.f32 %v1755, %v1755
        %v1864 = vmul.f32 %v1760, %v1760
        %v1865 = vmul.f32 %v1763, %v1763
        %v1866 = vmul.f32 %v1768, %v1768
        %v1867 = vmul.f32 %v1771, %v1771
        %v1868 = vmul.f32 %v1776, %v1776
        %v1869 = vmul.f32 %v1779, %v1779
        %v1870 = vmul.f32 %v1784, %v1784
        %v1871 = vmul.f32 %v1787, %v1787
        %v1872 = vmul.f32 %v1792, %v1792
        %v1873 = vmul.f32 %v1795, %v1795
        %v1874 = vmul.f32 %v1800, %v1800
        %v1875 = vmul.f32 %v1803, %v1803
        %v1876 = vmul.f32 %v1808, %v1808
        %v1877 = vmul.f32 %v1811, %v1811
        %1878 = vadd.xlane.f32.xlu0 %v1862
        %v1879 = vpop.xlane.xlu0 %1878
        %1880 = vadd.xlane.f32.xlu0 %v1863
        %v1881 = vpop.xlane.xlu0 %1880
        %1882 = vadd.xlane.f32.xlu0 %v1864
        %v1883 = vpop.xlane.xlu0 %1882
        %1884 = vadd.xlane.f32.xlu0 %v1865
        %v1885 = vpop.xlane.xlu0 %1884
        %1886 = vadd.xlane.f32.xlu0 %v1866
        %v1887 = vpop.xlane.xlu0 %1886
        %1888 = vadd.xlane.f32.xlu0 %v1867
        %v1889 = vpop.xlane.xlu0 %1888
        %1890 = vadd.xlane.f32.xlu0 %v1868
        %v1891 = vpop.xlane.xlu0 %1890
        %1892 = vadd.xlane.f32.xlu0 %v1869
        %v1893 = vpop.xlane.xlu0 %1892
        %1894 = vadd.xlane.f32.xlu0 %v1870
        %v1895 = vpop.xlane.xlu0 %1894
        %1896 = vadd.xlane.f32.xlu0 %v1871
        %v1897 = vpop.xlane.xlu0 %1896
        %1898 = vadd.xlane.f32.xlu0 %v1872
        %v1899 = vpop.xlane.xlu0 %1898
        %1900 = vadd.xlane.f32.xlu0 %v1873
        %v1901 = vpop.xlane.xlu0 %1900
        %1902 = vadd.xlane.f32.xlu0 %v1874
        %v1903 = vpop.xlane.xlu0 %1902
        %1904 = vadd.xlane.f32.xlu0 %v1875
        %v1905 = vpop.xlane.xlu0 %1904
        %1906 = vadd.xlane.f32.xlu0 %v1876
        %v1907 = vpop.xlane.xlu0 %1906
        %1908 = vadd.xlane.f32.xlu0 %v1877
        %v1909 = vpop.xlane.xlu0 %1908
        %v1910 = vmul.f32 %v1879, %v921
        %v1911 = vmul.f32 %v1881, %v921
        %v1912 = vmul.f32 %v1883, %v921
        %v1913 = vmul.f32 %v1885, %v921
        %v1914 = vmul.f32 %v1887, %v921
        %v1915 = vmul.f32 %v1889, %v921
        %v1916 = vmul.f32 %v1891, %v921
        %v1917 = vmul.f32 %v1893, %v921
        %v1918 = vmul.f32 %v1895, %v921
        %v1919 = vmul.f32 %v1897, %v921
        %v1920 = vmul.f32 %v1899, %v921
        %v1921 = vmul.f32 %v1901, %v921
        %v1922 = vmul.f32 %v1903, %v921
        %v1923 = vmul.f32 %v1905, %v921
        %v1924 = vmul.f32 %v1907, %v921
        %v1925 = vmul.f32 %v1909, %v921
        %v1926 = vmul.f32 %v1846, %v1846
        %v1927 = vmul.f32 %v1847, %v1847
        %v1928 = vmul.f32 %v1848, %v1848
        %v1929 = vmul.f32 %v1849, %v1849
        %v1930 = vmul.f32 %v1850, %v1850
        %v1931 = vmul.f32 %v1851, %v1851
        %v1932 = vmul.f32 %v1852, %v1852
        %v1933 = vmul.f32 %v1853, %v1853
        %v1934 = vmul.f32 %v1854, %v1854
        %v1935 = vmul.f32 %v1855, %v1855
        %v1936 = vmul.f32 %v1856, %v1856
        %v1937 = vmul.f32 %v1857, %v1857
        %v1938 = vmul.f32 %v1858, %v1858
        %v1939 = vmul.f32 %v1859, %v1859
        %v1940 = vmul.f32 %v1860, %v1860
        %v1941 = vmul.f32 %v1861, %v1861
        %v1942 = vsub.f32 %v1910, %v1926
        %v1943 = vsub.f32 %v1911, %v1927
        %v1944 = vsub.f32 %v1912, %v1928
        %v1945 = vsub.f32 %v1913, %v1929
        %v1946 = vsub.f32 %v1914, %v1930
        %v1947 = vsub.f32 %v1915, %v1931
        %v1948 = vsub.f32 %v1916, %v1932
        %v1949 = vsub.f32 %v1917, %v1933
        %v1950 = vsub.f32 %v1918, %v1934
        %v1951 = vsub.f32 %v1919, %v1935
        %v1952 = vsub.f32 %v1920, %v1936
        %v1953 = vsub.f32 %v1921, %v1937
        %v1954 = vsub.f32 %v1922, %v1938
        %v1955 = vsub.f32 %v1923, %v1939
        %v1956 = vsub.f32 %v1924, %v1940
        %v1957 = vsub.f32 %v1925, %v1941
        %v1958 = vmax.f32 %v1942, 0.0
        %v1959 = vmax.f32 %v1943, 0.0
        %v1960 = vmax.f32 %v1944, 0.0
        %v1961 = vmax.f32 %v1945, 0.0
        %v1962 = vmax.f32 %v1946, 0.0
        %v1963 = vmax.f32 %v1947, 0.0
        %v1964 = vmax.f32 %v1948, 0.0
        %v1965 = vmax.f32 %v1949, 0.0
        %v1966 = vmax.f32 %v1950, 0.0
        %v1967 = vmax.f32 %v1951, 0.0
        %v1968 = vmax.f32 %v1952, 0.0
        %v1969 = vmax.f32 %v1953, 0.0
        %v1970 = vmax.f32 %v1954, 0.0
        %v1971 = vmax.f32 %v1955, 0.0
        %v1972 = vmax.f32 %v1956, 0.0
        %v1973 = vmax.f32 %v1957, 0.0
        %v1974 = vsub.f32 %v1752, %v1846
        %v1975 = vsub.f32 %v1755, %v1847
        %v1976 = vsub.f32 %v1760, %v1848
        %v1977 = vsub.f32 %v1763, %v1849
        %v1978 = vsub.f32 %v1768, %v1850
        %v1979 = vsub.f32 %v1771, %v1851
        %v1980 = vsub.f32 %v1776, %v1852
        %v1981 = vsub.f32 %v1779, %v1853
        %v1982 = vsub.f32 %v1784, %v1854
        %v1983 = vsub.f32 %v1787, %v1855
        %v1984 = vsub.f32 %v1792, %v1856
        %v1985 = vsub.f32 %v1795, %v1857
        %v1986 = vsub.f32 %v1800, %v1858
        %v1987 = vsub.f32 %v1803, %v1859
        %v1988 = vsub.f32 %v1808, %v1860
        %v1989 = vsub.f32 %v1811, %v1861
        %v1990 = vadd.f32 %v1958, 1e-05
        %v1991 = vadd.f32 %v1959, 1e-05
        %v1992 = vadd.f32 %v1960, 1e-05
        %v1993 = vadd.f32 %v1961, 1e-05
        %v1994 = vadd.f32 %v1962, 1e-05
        %v1995 = vadd.f32 %v1963, 1e-05
        %v1996 = vadd.f32 %v1964, 1e-05
        %v1997 = vadd.f32 %v1965, 1e-05
        %v1998 = vadd.f32 %v1966, 1e-05
        %v1999 = vadd.f32 %v1967, 1e-05
        %v2000 = vadd.f32 %v1968, 1e-05
        %v2001 = vadd.f32 %v1969, 1e-05
        %v2002 = vadd.f32 %v1970, 1e-05
        %v2003 = vadd.f32 %v1971, 1e-05
        %v2004 = vadd.f32 %v1972, 1e-05
        %v2005 = vadd.f32 %v1973, 1e-05
        %v2006 = vrsqrt.pop %v1990
        %v2007 = vrsqrt.pop %v1991
        %v2008 = vrsqrt.pop %v1992
        %v2009 = vrsqrt.pop %v1993
        %v2010 = vrsqrt.pop %v1994
        %v2011 = vrsqrt.pop %v1995
        %v2012 = vrsqrt.pop %v1996
        %v2013 = vrsqrt.pop %v1997
        %v2014 = vrsqrt.pop %v1998
        %v2015 = vrsqrt.pop %v1999
        %v2016 = vrsqrt.pop %v2000
        %v2017 = vrsqrt.pop %v2001
        %v2018 = vrsqrt.pop %v2002
        %v2019 = vrsqrt.pop %v2003
        %v2020 = vrsqrt.pop %v2004
        %v2021 = vrsqrt.pop %v2005
        %v2022 = vmul.f32 %v1974, %v2006
        %v2023 = vmul.f32 %v1975, %v2007
        %v2024 = vmul.f32 %v1976, %v2008
        %v2025 = vmul.f32 %v1977, %v2009
        %v2026 = vmul.f32 %v1978, %v2010
        %v2027 = vmul.f32 %v1979, %v2011
        %v2028 = vmul.f32 %v1980, %v2012
        %v2029 = vmul.f32 %v1981, %v2013
        %v2030 = vmul.f32 %v1982, %v2014
        %v2031 = vmul.f32 %v1983, %v2015
        %v2032 = vmul.f32 %v1984, %v2016
        %v2033 = vmul.f32 %v1985, %v2017
        %v2034 = vmul.f32 %v1986, %v2018
        %v2035 = vmul.f32 %v1987, %v2019
        %v2036 = vmul.f32 %v1988, %v2020
        %v2037 = vmul.f32 %v1989, %v2021
        %v2038 = vld [vmem:[%s11] sm:$0x1]
        %v2040 = vlaneseq
        %v2041 = vshrl.u32 %v2040, 7
        %v2042 = vsub.s32 0, %v2041
        %v2043 = vrot.slane %v2038, %v2042
        %v2045 = vmul.f32 %v2022, %v2043
        %v2046 = vmul.f32 %v2023, %v2043
        %v2047 = vmul.f32 %v2024, %v2043
        %v2048 = vmul.f32 %v2025, %v2043
        %v2049 = vmul.f32 %v2026, %v2043
        %v2050 = vmul.f32 %v2027, %v2043
        %v2051 = vmul.f32 %v2028, %v2043
        %v2052 = vmul.f32 %v2029, %v2043
        %v2053 = vmul.f32 %v2030, %v2043
        %v2054 = vmul.f32 %v2031, %v2043
        %v2055 = vmul.f32 %v2032, %v2043
        %v2056 = vmul.f32 %v2033, %v2043
        %v2057 = vmul.f32 %v2034, %v2043
        %v2058 = vmul.f32 %v2035, %v2043
        %v2059 = vmul.f32 %v2036, %v2043
        %v2060 = vmul.f32 %v2037, %v2043
        %v2061 = vld [vmem:[%s12] sm:$0x1]
        %v2063 = vlaneseq
        %v2064 = vshrl.u32 %v2063, 7
        %v2065 = vsub.s32 0, %v2064
        %v2066 = vrot.slane %v2061, %v2065
        %v2068 = vadd.f32 %v2045, %v2066
        %v2069 = vadd.f32 %v2046, %v2066
        %v2070 = vadd.f32 %v2047, %v2066
        %v2071 = vadd.f32 %v2048, %v2066
        %v2072 = vadd.f32 %v2049, %v2066
        %v2073 = vadd.f32 %v2050, %v2066
        %v2074 = vadd.f32 %v2051, %v2066
        %v2075 = vadd.f32 %v2052, %v2066
        %v2076 = vadd.f32 %v2053, %v2066
        %v2077 = vadd.f32 %v2054, %v2066
        %v2078 = vadd.f32 %v2055, %v2066
        %v2079 = vadd.f32 %v2056, %v2066
        %v2080 = vadd.f32 %v2057, %v2066
        %v2081 = vadd.f32 %v2058, %v2066
        %v2082 = vadd.f32 %v2059, %v2066
        %v2083 = vadd.f32 %v2060, %v2066
        %v2084 = vmax.f32 %v2068, 0.0
        %v2085 = vmax.f32 %v2069, 0.0
        %v2086 = vmax.f32 %v2070, 0.0
        %v2087 = vmax.f32 %v2071, 0.0
        %v2088 = vmax.f32 %v2072, 0.0
        %v2089 = vmax.f32 %v2073, 0.0
        %v2090 = vmax.f32 %v2074, 0.0
        %v2091 = vmax.f32 %v2075, 0.0
        %v2092 = vmax.f32 %v2076, 0.0
        %v2093 = vmax.f32 %v2077, 0.0
        %v2094 = vmax.f32 %v2078, 0.0
        %v2095 = vmax.f32 %v2079, 0.0
        %v2096 = vmax.f32 %v2080, 0.0
        %v2097 = vmax.f32 %v2081, 0.0
        %v2098 = vmax.f32 %v2082, 0.0
        %v2099 = vmax.f32 %v2083, 0.0
        %v2100 = vpack.c.bf16 %v2085, %v2084
        %v2101 = vpack.c.bf16 %v2087, %v2086
        %v2102 = vpack.c.bf16 %v2089, %v2088
        %v2103 = vpack.c.bf16 %v2091, %v2090
        %v2104 = vpack.c.bf16 %v2093, %v2092
        %v2105 = vpack.c.bf16 %v2095, %v2094
        %v2106 = vpack.c.bf16 %v2097, %v2096
        %v2107 = vpack.c.bf16 %v2099, %v2098
        %v2108 = vld [vmem:[#allocation10] sm:$0xf]
        %v2109 = vld [vmem:[#allocation10 + $0x4] sm:$0xf]
        %v2110 = vld [vmem:[#allocation10 + $0x8] sm:$0xf]
        %v2111 = vld [vmem:[#allocation10 + $0xc] sm:$0xf]
        %v2112 = vld [vmem:[#allocation10 + $0x10] sm:$0xf]
        %v2113 = vld [vmem:[#allocation10 + $0x14] sm:$0xf]
        %v2114 = vld [vmem:[#allocation10 + $0x18] sm:$0xf]
        %v2115 = vld [vmem:[#allocation10 + $0x1c] sm:$0xf]
        %v2116 = vld [vmem:[#allocation10 + $0x20] sm:$0xf]
        %v2117 = vld [vmem:[#allocation10 + $0x24] sm:$0xf]
        %v2118 = vld [vmem:[#allocation10 + $0x28] sm:$0xf]
        %v2119 = vld [vmem:[#allocation10 + $0x2c] sm:$0xf]
        %v2120 = vld [vmem:[#allocation10 + $0x30] sm:$0xf]
        %v2121 = vld [vmem:[#allocation10 + $0x34] sm:$0xf]
        %v2122 = vld [vmem:[#allocation10 + $0x38] sm:$0xf]
        %v2123 = vld [vmem:[#allocation10 + $0x3c] sm:$0xf]
        %v2124 = vld [vmem:[%s14] sm:$0x1]
        %v2126 = vlaneseq
        %v2127 = vshrl.u32 %v2126, 7
        %v2128 = vsub.s32 0, %v2127
        %v2129 = vrot.slane %v2124, %v2128
        %v2147 = vunpack.c.l.b16 %v2108
        %v2148 = vunpack.c.l.b16 %v2109
        %v2149 = vunpack.c.l.b16 %v2110
        %v2150 = vunpack.c.l.b16 %v2111
        %v2151 = vunpack.c.l.b16 %v2112
        %v2152 = vunpack.c.l.b16 %v2113
        %v2153 = vunpack.c.l.b16 %v2114
        %v2154 = vunpack.c.l.b16 %v2115
        %v2155 = vunpack.c.l.b16 %v2116
        %v2156 = vunpack.c.l.b16 %v2117
        %v2157 = vunpack.c.l.b16 %v2118
        %v2158 = vunpack.c.l.b16 %v2119
        %v2159 = vunpack.c.l.b16 %v2120
        %v2160 = vunpack.c.l.b16 %v2121
        %v2161 = vunpack.c.l.b16 %v2122
        %v2162 = vunpack.c.l.b16 %v2123
        %v2163 = vpack.c.b16 %v2148, %v2147
        %v2164 = vpack.c.b16 %v2150, %v2149
        %v2165 = vpack.c.b16 %v2152, %v2151
        %v2166 = vpack.c.b16 %v2154, %v2153
        %v2167 = vpack.c.b16 %v2156, %v2155
        %v2168 = vpack.c.b16 %v2158, %v2157
        %v2169 = vpack.c.b16 %v2160, %v2159
        %v2170 = vpack.c.b16 %v2162, %v2161
        %2179 = vmatprep.subr.bf16.mxu0 0
        %2180 = vmatpush1.bf16.msra.mxu0 %v2170
        %2181 = vmatprep.subr.bf16.mxu0 0
        %2182 = vmatpush1.bf16.msra.mxu0 %v2169
        %2183 = vmatprep.subr.bf16.mxu0 0
        %2184 = vmatpush1.bf16.msra.mxu0 %v2168
        %2185 = vmatprep.subr.bf16.mxu0 0
        %2186 = vmatpush1.bf16.msra.mxu0 %v2167
        %2187 = vmatprep.subr.bf16.mxu0 0
        %2188 = vmatpush1.bf16.msra.mxu0 %v2166
        %2189 = vmatprep.subr.bf16.mxu0 0
        %2190 = vmatpush1.bf16.msra.mxu0 %v2165
        %2191 = vmatprep.subr.bf16.mxu0 0
        %2192 = vmatpush1.bf16.msra.mxu0 %v2164
        %2193 = vmatprep.subr.bf16.mxu0 0
        %2194 = vmatpush1.bf16.msra.mxu0 %v2163
        %2195 = vmatprep.subr.bf16.mxu0 0
        %2196 = vmatpush2.bf16.msra.mxu0 0
        %2197 = vmatprep.subr.bf16.mxu0 0
        %2198 = vmatpush2.bf16.msra.mxu0 0
        %2199 = vmatprep.subr.bf16.mxu0 0
        %2200 = vmatpush2.bf16.msra.mxu0 0
        %2201 = vmatprep.subr.bf16.mxu0 0
        %2202 = vmatpush2.bf16.msra.mxu0 0
        %2203 = vmatprep.subr.bf16.mxu0 0
        %2204 = vmatpush2.bf16.msra.mxu0 0
        %2205 = vmatprep.subr.bf16.mxu0 0
        %2206 = vmatpush2.bf16.msra.mxu0 0
        %2207 = vmatprep.subr.bf16.mxu0 0
        %2208 = vmatpush2.bf16.msra.mxu0 0
        %2209 = vmatprep.subr.bf16.mxu0 0
        %2210 = vmatpush2.bf16.msra.mxu0 0
        %2211 = vmatprep.mubr.bf16.mxu0 0
        %2212 = vmatmul.mubr.bf16.gmra.mxu0 %v2100
        %v2213 = vpop.f32.mrf.mxu0
        %v2214 = vadd.f32 %v2129, %v2213
        %v2215 = vpop.f32.mrf.mxu0
        %v2216 = vpop.f32.mrf.mxu0
        %v2217 = vadd.f32 %v2129, %v2216
        %v2218 = vpop.f32.mrf.mxu0
        %2219 = vmatprep.mubr.bf16.mxu0 0
        %2220 = vmatmul.mubr.bf16.gmra.mxu0 %v2101
        %v2221 = vpop.f32.mrf.mxu0
        %v2222 = vadd.f32 %v2129, %v2221
        %v2223 = vpop.f32.mrf.mxu0
        %v2224 = vpop.f32.mrf.mxu0
        %v2225 = vadd.f32 %v2129, %v2224
        %v2226 = vpop.f32.mrf.mxu0
        %2227 = vmatprep.mubr.bf16.mxu0 0
        %2228 = vmatmul.mubr.bf16.gmra.mxu0 %v2102
        %v2229 = vpop.f32.mrf.mxu0
        %v2230 = vadd.f32 %v2129, %v2229
        %v2231 = vpop.f32.mrf.mxu0
        %v2232 = vpop.f32.mrf.mxu0
        %v2233 = vadd.f32 %v2129, %v2232
        %v2234 = vpop.f32.mrf.mxu0
        %2235 = vmatprep.mubr.bf16.mxu0 0
        %2236 = vmatmul.mubr.bf16.gmra.mxu0 %v2103
        %v2237 = vpop.f32.mrf.mxu0
        %v2238 = vadd.f32 %v2129, %v2237
        %v2239 = vpop.f32.mrf.mxu0
        %v2240 = vpop.f32.mrf.mxu0
        %v2241 = vadd.f32 %v2129, %v2240
        %v2242 = vpop.f32.mrf.mxu0
        %2243 = vmatprep.mubr.bf16.mxu0 0
        %2244 = vmatmul.mubr.bf16.gmra.mxu0 %v2104
        %v2245 = vpop.f32.mrf.mxu0
        %v2246 = vadd.f32 %v2129, %v2245
        %v2247 = vpop.f32.mrf.mxu0
        %v2248 = vpop.f32.mrf.mxu0
        %v2249 = vadd.f32 %v2129, %v2248
        %v2250 = vpop.f32.mrf.mxu0
        %2251 = vmatprep.mubr.bf16.mxu0 0
        %2252 = vmatmul.mubr.bf16.gmra.mxu0 %v2105
        %v2253 = vpop.f32.mrf.mxu0
        %v2254 = vadd.f32 %v2129, %v2253
        %v2255 = vpop.f32.mrf.mxu0
        %v2256 = vpop.f32.mrf.mxu0
        %v2257 = vadd.f32 %v2129, %v2256
        %v2258 = vpop.f32.mrf.mxu0
        %2259 = vmatprep.mubr.bf16.mxu0 0
        %2260 = vmatmul.mubr.bf16.gmra.mxu0 %v2106
        %v2261 = vpop.f32.mrf.mxu0
        %v2262 = vadd.f32 %v2129, %v2261
        %v2263 = vpop.f32.mrf.mxu0
        %v2264 = vpop.f32.mrf.mxu0
        %v2265 = vadd.f32 %v2129, %v2264
        %v2266 = vpop.f32.mrf.mxu0
        %2267 = vmatprep.mubr.bf16.mxu0 0
        %2268 = vmatmul.mubr.bf16.gmra.mxu0 %v2107
        %v2269 = vpop.f32.mrf.mxu0
        %v2270 = vadd.f32 %v2129, %v2269
        %v2271 = vpop.f32.mrf.mxu0
        %v2272 = vpop.f32.mrf.mxu0
        %v2273 = vadd.f32 %v2129, %v2272
        %v2274 = vpop.f32.mrf.mxu0
        %2275 = vdwg.mxu0
        %2276 = vadd.xlane.f32.xlu0 %v2214
        %v2277 = vpop.xlane.xlu0 %2276
        %2278 = vadd.xlane.f32.xlu0 %v2217
        %v2279 = vpop.xlane.xlu0 %2278
        %2280 = vadd.xlane.f32.xlu0 %v2222
        %v2281 = vpop.xlane.xlu0 %2280
        %2282 = vadd.xlane.f32.xlu0 %v2225
        %v2283 = vpop.xlane.xlu0 %2282
        %2284 = vadd.xlane.f32.xlu0 %v2230
        %v2285 = vpop.xlane.xlu0 %2284
        %2286 = vadd.xlane.f32.xlu0 %v2233
        %v2287 = vpop.xlane.xlu0 %2286
        %2288 = vadd.xlane.f32.xlu0 %v2238
        %v2289 = vpop.xlane.xlu0 %2288
        %2290 = vadd.xlane.f32.xlu0 %v2241
        %v2291 = vpop.xlane.xlu0 %2290
        %2292 = vadd.xlane.f32.xlu0 %v2246
        %v2293 = vpop.xlane.xlu0 %2292
        %2294 = vadd.xlane.f32.xlu0 %v2249
        %v2295 = vpop.xlane.xlu0 %2294
        %2296 = vadd.xlane.f32.xlu0 %v2254
        %v2297 = vpop.xlane.xlu0 %2296
        %2298 = vadd.xlane.f32.xlu0 %v2257
        %v2299 = vpop.xlane.xlu0 %2298
        %2300 = vadd.xlane.f32.xlu0 %v2262
        %v2301 = vpop.xlane.xlu0 %2300
        %2302 = vadd.xlane.f32.xlu0 %v2265
        %v2303 = vpop.xlane.xlu0 %2302
        %2304 = vadd.xlane.f32.xlu0 %v2270
        %v2305 = vpop.xlane.xlu0 %2304
        %2306 = vadd.xlane.f32.xlu0 %v2273
        %v2307 = vpop.xlane.xlu0 %2306
        %v2308 = vmul.f32 %v2277, %v921
        %v2309 = vmul.f32 %v2279, %v921
        %v2310 = vmul.f32 %v2281, %v921
        %v2311 = vmul.f32 %v2283, %v921
        %v2312 = vmul.f32 %v2285, %v921
        %v2313 = vmul.f32 %v2287, %v921
        %v2314 = vmul.f32 %v2289, %v921
        %v2315 = vmul.f32 %v2291, %v921
        %v2316 = vmul.f32 %v2293, %v921
        %v2317 = vmul.f32 %v2295, %v921
        %v2318 = vmul.f32 %v2297, %v921
        %v2319 = vmul.f32 %v2299, %v921
        %v2320 = vmul.f32 %v2301, %v921
        %v2321 = vmul.f32 %v2303, %v921
        %v2322 = vmul.f32 %v2305, %v921
        %v2323 = vmul.f32 %v2307, %v921
        %v2324 = vmul.f32 %v2214, %v2214
        %v2325 = vmul.f32 %v2217, %v2217
        %v2326 = vmul.f32 %v2222, %v2222
        %v2327 = vmul.f32 %v2225, %v2225
        %v2328 = vmul.f32 %v2230, %v2230
        %v2329 = vmul.f32 %v2233, %v2233
        %v2330 = vmul.f32 %v2238, %v2238
        %v2331 = vmul.f32 %v2241, %v2241
        %v2332 = vmul.f32 %v2246, %v2246
        %v2333 = vmul.f32 %v2249, %v2249
        %v2334 = vmul.f32 %v2254, %v2254
        %v2335 = vmul.f32 %v2257, %v2257
        %v2336 = vmul.f32 %v2262, %v2262
        %v2337 = vmul.f32 %v2265, %v2265
        %v2338 = vmul.f32 %v2270, %v2270
        %v2339 = vmul.f32 %v2273, %v2273
        %2340 = vadd.xlane.f32.xlu0 %v2324
        %v2341 = vpop.xlane.xlu0 %2340
        %2342 = vadd.xlane.f32.xlu0 %v2325
        %v2343 = vpop.xlane.xlu0 %2342
        %2344 = vadd.xlane.f32.xlu0 %v2326
        %v2345 = vpop.xlane.xlu0 %2344
        %2346 = vadd.xlane.f32.xlu0 %v2327
        %v2347 = vpop.xlane.xlu0 %2346
        %2348 = vadd.xlane.f32.xlu0 %v2328
        %v2349 = vpop.xlane.xlu0 %2348
        %2350 = vadd.xlane.f32.xlu0 %v2329
        %v2351 = vpop.xlane.xlu0 %2350
        %2352 = vadd.xlane.f32.xlu0 %v2330
        %v2353 = vpop.xlane.xlu0 %2352
        %2354 = vadd.xlane.f32.xlu0 %v2331
        %v2355 = vpop.xlane.xlu0 %2354
        %2356 = vadd.xlane.f32.xlu0 %v2332
        %v2357 = vpop.xlane.xlu0 %2356
        %2358 = vadd.xlane.f32.xlu0 %v2333
        %v2359 = vpop.xlane.xlu0 %2358
        %2360 = vadd.xlane.f32.xlu0 %v2334
        %v2361 = vpop.xlane.xlu0 %2360
        %2362 = vadd.xlane.f32.xlu0 %v2335
        %v2363 = vpop.xlane.xlu0 %2362
        %2364 = vadd.xlane.f32.xlu0 %v2336
        %v2365 = vpop.xlane.xlu0 %2364
        %2366 = vadd.xlane.f32.xlu0 %v2337
        %v2367 = vpop.xlane.xlu0 %2366
        %2368 = vadd.xlane.f32.xlu0 %v2338
        %v2369 = vpop.xlane.xlu0 %2368
        %2370 = vadd.xlane.f32.xlu0 %v2339
        %v2371 = vpop.xlane.xlu0 %2370
        %v2372 = vmul.f32 %v2341, %v921
        %v2373 = vmul.f32 %v2343, %v921
        %v2374 = vmul.f32 %v2345, %v921
        %v2375 = vmul.f32 %v2347, %v921
        %v2376 = vmul.f32 %v2349, %v921
        %v2377 = vmul.f32 %v2351, %v921
        %v2378 = vmul.f32 %v2353, %v921
        %v2379 = vmul.f32 %v2355, %v921
        %v2380 = vmul.f32 %v2357, %v921
        %v2381 = vmul.f32 %v2359, %v921
        %v2382 = vmul.f32 %v2361, %v921
        %v2383 = vmul.f32 %v2363, %v921
        %v2384 = vmul.f32 %v2365, %v921
        %v2385 = vmul.f32 %v2367, %v921
        %v2386 = vmul.f32 %v2369, %v921
        %v2387 = vmul.f32 %v2371, %v921
        %v2388 = vmul.f32 %v2308, %v2308
        %v2389 = vmul.f32 %v2309, %v2309
        %v2390 = vmul.f32 %v2310, %v2310
        %v2391 = vmul.f32 %v2311, %v2311
        %v2392 = vmul.f32 %v2312, %v2312
        %v2393 = vmul.f32 %v2313, %v2313
        %v2394 = vmul.f32 %v2314, %v2314
        %v2395 = vmul.f32 %v2315, %v2315
        %v2396 = vmul.f32 %v2316, %v2316
        %v2397 = vmul.f32 %v2317, %v2317
        %v2398 = vmul.f32 %v2318, %v2318
        %v2399 = vmul.f32 %v2319, %v2319
        %v2400 = vmul.f32 %v2320, %v2320
        %v2401 = vmul.f32 %v2321, %v2321
        %v2402 = vmul.f32 %v2322, %v2322
        %v2403 = vmul.f32 %v2323, %v2323
        %v2404 = vsub.f32 %v2372, %v2388
        %v2405 = vsub.f32 %v2373, %v2389
        %v2406 = vsub.f32 %v2374, %v2390
        %v2407 = vsub.f32 %v2375, %v2391
        %v2408 = vsub.f32 %v2376, %v2392
        %v2409 = vsub.f32 %v2377, %v2393
        %v2410 = vsub.f32 %v2378, %v2394
        %v2411 = vsub.f32 %v2379, %v2395
        %v2412 = vsub.f32 %v2380, %v2396
        %v2413 = vsub.f32 %v2381, %v2397
        %v2414 = vsub.f32 %v2382, %v2398
        %v2415 = vsub.f32 %v2383, %v2399
        %v2416 = vsub.f32 %v2384, %v2400
        %v2417 = vsub.f32 %v2385, %v2401
        %v2418 = vsub.f32 %v2386, %v2402
        %v2419 = vsub.f32 %v2387, %v2403
        %v2420 = vmax.f32 %v2404, 0.0
        %v2421 = vmax.f32 %v2405, 0.0
        %v2422 = vmax.f32 %v2406, 0.0
        %v2423 = vmax.f32 %v2407, 0.0
        %v2424 = vmax.f32 %v2408, 0.0
        %v2425 = vmax.f32 %v2409, 0.0
        %v2426 = vmax.f32 %v2410, 0.0
        %v2427 = vmax.f32 %v2411, 0.0
        %v2428 = vmax.f32 %v2412, 0.0
        %v2429 = vmax.f32 %v2413, 0.0
        %v2430 = vmax.f32 %v2414, 0.0
        %v2431 = vmax.f32 %v2415, 0.0
        %v2432 = vmax.f32 %v2416, 0.0
        %v2433 = vmax.f32 %v2417, 0.0
        %v2434 = vmax.f32 %v2418, 0.0
        %v2435 = vmax.f32 %v2419, 0.0
        %v2436 = vsub.f32 %v2214, %v2308
        %v2437 = vsub.f32 %v2217, %v2309
        %v2438 = vsub.f32 %v2222, %v2310
        %v2439 = vsub.f32 %v2225, %v2311
        %v2440 = vsub.f32 %v2230, %v2312
        %v2441 = vsub.f32 %v2233, %v2313
        %v2442 = vsub.f32 %v2238, %v2314
        %v2443 = vsub.f32 %v2241, %v2315
        %v2444 = vsub.f32 %v2246, %v2316
        %v2445 = vsub.f32 %v2249, %v2317
        %v2446 = vsub.f32 %v2254, %v2318
        %v2447 = vsub.f32 %v2257, %v2319
        %v2448 = vsub.f32 %v2262, %v2320
        %v2449 = vsub.f32 %v2265, %v2321
        %v2450 = vsub.f32 %v2270, %v2322
        %v2451 = vsub.f32 %v2273, %v2323
        %v2452 = vadd.f32 %v2420, 1e-05
        %v2453 = vadd.f32 %v2421, 1e-05
        %v2454 = vadd.f32 %v2422, 1e-05
        %v2455 = vadd.f32 %v2423, 1e-05
        %v2456 = vadd.f32 %v2424, 1e-05
        %v2457 = vadd.f32 %v2425, 1e-05
        %v2458 = vadd.f32 %v2426, 1e-05
        %v2459 = vadd.f32 %v2427, 1e-05
        %v2460 = vadd.f32 %v2428, 1e-05
        %v2461 = vadd.f32 %v2429, 1e-05
        %v2462 = vadd.f32 %v2430, 1e-05
        %v2463 = vadd.f32 %v2431, 1e-05
        %v2464 = vadd.f32 %v2432, 1e-05
        %v2465 = vadd.f32 %v2433, 1e-05
        %v2466 = vadd.f32 %v2434, 1e-05
        %v2467 = vadd.f32 %v2435, 1e-05
        %v2468 = vrsqrt.pop %v2452
        %v2469 = vrsqrt.pop %v2453
        %v2470 = vrsqrt.pop %v2454
        %v2471 = vrsqrt.pop %v2455
        %v2472 = vrsqrt.pop %v2456
        %v2473 = vrsqrt.pop %v2457
        %v2474 = vrsqrt.pop %v2458
        %v2475 = vrsqrt.pop %v2459
        %v2476 = vrsqrt.pop %v2460
        %v2477 = vrsqrt.pop %v2461
        %v2478 = vrsqrt.pop %v2462
        %v2479 = vrsqrt.pop %v2463
        %v2480 = vrsqrt.pop %v2464
        %v2481 = vrsqrt.pop %v2465
        %v2482 = vrsqrt.pop %v2466
        %v2483 = vrsqrt.pop %v2467
        %v2484 = vmul.f32 %v2436, %v2468
        %v2485 = vmul.f32 %v2437, %v2469
        %v2486 = vmul.f32 %v2438, %v2470
        %v2487 = vmul.f32 %v2439, %v2471
        %v2488 = vmul.f32 %v2440, %v2472
        %v2489 = vmul.f32 %v2441, %v2473
        %v2490 = vmul.f32 %v2442, %v2474
        %v2491 = vmul.f32 %v2443, %v2475
        %v2492 = vmul.f32 %v2444, %v2476
        %v2493 = vmul.f32 %v2445, %v2477
        %v2494 = vmul.f32 %v2446, %v2478
        %v2495 = vmul.f32 %v2447, %v2479
        %v2496 = vmul.f32 %v2448, %v2480
        %v2497 = vmul.f32 %v2449, %v2481
        %v2498 = vmul.f32 %v2450, %v2482
        %v2499 = vmul.f32 %v2451, %v2483
        %v2500 = vld [vmem:[%s15] sm:$0x1]
        %v2502 = vlaneseq
        %v2503 = vshrl.u32 %v2502, 7
        %v2504 = vsub.s32 0, %v2503
        %v2505 = vrot.slane %v2500, %v2504
        %v2507 = vmul.f32 %v2484, %v2505
        %v2508 = vmul.f32 %v2485, %v2505
        %v2509 = vmul.f32 %v2486, %v2505
        %v2510 = vmul.f32 %v2487, %v2505
        %v2511 = vmul.f32 %v2488, %v2505
        %v2512 = vmul.f32 %v2489, %v2505
        %v2513 = vmul.f32 %v2490, %v2505
        %v2514 = vmul.f32 %v2491, %v2505
        %v2515 = vmul.f32 %v2492, %v2505
        %v2516 = vmul.f32 %v2493, %v2505
        %v2517 = vmul.f32 %v2494, %v2505
        %v2518 = vmul.f32 %v2495, %v2505
        %v2519 = vmul.f32 %v2496, %v2505
        %v2520 = vmul.f32 %v2497, %v2505
        %v2521 = vmul.f32 %v2498, %v2505
        %v2522 = vmul.f32 %v2499, %v2505
        %v2523 = vld [vmem:[%s16] sm:$0x1]
        %v2525 = vlaneseq
        %v2526 = vshrl.u32 %v2525, 7
        %v2527 = vsub.s32 0, %v2526
        %v2528 = vrot.slane %v2523, %v2527
        %v2530 = vadd.f32 %v2507, %v2528
        %v2531 = vadd.f32 %v2508, %v2528
        %v2532 = vadd.f32 %v2509, %v2528
        %v2533 = vadd.f32 %v2510, %v2528
        %v2534 = vadd.f32 %v2511, %v2528
        %v2535 = vadd.f32 %v2512, %v2528
        %v2536 = vadd.f32 %v2513, %v2528
        %v2537 = vadd.f32 %v2514, %v2528
        %v2538 = vadd.f32 %v2515, %v2528
        %v2539 = vadd.f32 %v2516, %v2528
        %v2540 = vadd.f32 %v2517, %v2528
        %v2541 = vadd.f32 %v2518, %v2528
        %v2542 = vadd.f32 %v2519, %v2528
        %v2543 = vadd.f32 %v2520, %v2528
        %v2544 = vadd.f32 %v2521, %v2528
        %v2545 = vadd.f32 %v2522, %v2528
        %v2546 = vmax.f32 %v2530, 0.0
        %v2547 = vmax.f32 %v2531, 0.0
        %v2548 = vmax.f32 %v2532, 0.0
        %v2549 = vmax.f32 %v2533, 0.0
        %v2550 = vmax.f32 %v2534, 0.0
        %v2551 = vmax.f32 %v2535, 0.0
        %v2552 = vmax.f32 %v2536, 0.0
        %v2553 = vmax.f32 %v2537, 0.0
        %v2554 = vmax.f32 %v2538, 0.0
        %v2555 = vmax.f32 %v2539, 0.0
        %v2556 = vmax.f32 %v2540, 0.0
        %v2557 = vmax.f32 %v2541, 0.0
        %v2558 = vmax.f32 %v2542, 0.0
        %v2559 = vmax.f32 %v2543, 0.0
        %v2560 = vmax.f32 %v2544, 0.0
        %v2561 = vmax.f32 %v2545, 0.0
        %v2562 = vpack.c.bf16 %v2547, %v2546
        %v2563 = vpack.c.bf16 %v2549, %v2548
        %v2564 = vpack.c.bf16 %v2551, %v2550
        %v2565 = vpack.c.bf16 %v2553, %v2552
        %v2566 = vpack.c.bf16 %v2555, %v2554
        %v2567 = vpack.c.bf16 %v2557, %v2556
        %v2568 = vpack.c.bf16 %v2559, %v2558
        %v2569 = vpack.c.bf16 %v2561, %v2560
        %v2570 = vld [vmem:[#allocation11] sm:$0xf]
        %v2571 = vld [vmem:[#allocation11 + $0x4] sm:$0xf]
        %v2572 = vld [vmem:[#allocation11 + $0x8] sm:$0xf]
        %v2573 = vld [vmem:[#allocation11 + $0xc] sm:$0xf]
        %v2574 = vld [vmem:[#allocation11 + $0x10] sm:$0xf]
        %v2575 = vld [vmem:[#allocation11 + $0x14] sm:$0xf]
        %v2576 = vld [vmem:[#allocation11 + $0x18] sm:$0xf]
        %v2577 = vld [vmem:[#allocation11 + $0x1c] sm:$0xf]
        %v2578 = vld [vmem:[#allocation11 + $0x20] sm:$0xf]
        %v2579 = vld [vmem:[#allocation11 + $0x24] sm:$0xf]
        %v2580 = vld [vmem:[#allocation11 + $0x28] sm:$0xf]
        %v2581 = vld [vmem:[#allocation11 + $0x2c] sm:$0xf]
        %v2582 = vld [vmem:[#allocation11 + $0x30] sm:$0xf]
        %v2583 = vld [vmem:[#allocation11 + $0x34] sm:$0xf]
        %v2584 = vld [vmem:[#allocation11 + $0x38] sm:$0xf]
        %v2585 = vld [vmem:[#allocation11 + $0x3c] sm:$0xf]
        %v2586 = vld [vmem:[%s18] sm:$0x1]
        %v2588 = vlaneseq
        %v2589 = vshrl.u32 %v2588, 7
        %v2590 = vsub.s32 0, %v2589
        %v2591 = vrot.slane %v2586, %v2590
        %v2609 = vunpack.c.l.b16 %v2570
        %v2610 = vunpack.c.l.b16 %v2571
        %v2611 = vunpack.c.l.b16 %v2572
        %v2612 = vunpack.c.l.b16 %v2573
        %v2613 = vunpack.c.l.b16 %v2574
        %v2614 = vunpack.c.l.b16 %v2575
        %v2615 = vunpack.c.l.b16 %v2576
        %v2616 = vunpack.c.l.b16 %v2577
        %v2617 = vunpack.c.l.b16 %v2578
        %v2618 = vunpack.c.l.b16 %v2579
        %v2619 = vunpack.c.l.b16 %v2580
        %v2620 = vunpack.c.l.b16 %v2581
        %v2621 = vunpack.c.l.b16 %v2582
        %v2622 = vunpack.c.l.b16 %v2583
        %v2623 = vunpack.c.l.b16 %v2584
        %v2624 = vunpack.c.l.b16 %v2585
        %v2625 = vpack.c.b16 %v2610, %v2609
        %v2626 = vpack.c.b16 %v2612, %v2611
        %v2627 = vpack.c.b16 %v2614, %v2613
        %v2628 = vpack.c.b16 %v2616, %v2615
        %v2629 = vpack.c.b16 %v2618, %v2617
        %v2630 = vpack.c.b16 %v2620, %v2619
        %v2631 = vpack.c.b16 %v2622, %v2621
        %v2632 = vpack.c.b16 %v2624, %v2623
        %2641 = vmatprep.subr.bf16.mxu0 0
        %2642 = vmatpush1.bf16.msra.mxu0 %v2632
        %2643 = vmatprep.subr.bf16.mxu0 0
        %2644 = vmatpush1.bf16.msra.mxu0 %v2631
        %2645 = vmatprep.subr.bf16.mxu0 0
        %2646 = vmatpush1.bf16.msra.mxu0 %v2630
        %2647 = vmatprep.subr.bf16.mxu0 0
        %2648 = vmatpush1.bf16.msra.mxu0 %v2629
        %2649 = vmatprep.subr.bf16.mxu0 0
        %2650 = vmatpush1.bf16.msra.mxu0 %v2628
        %2651 = vmatprep.subr.bf16.mxu0 0
        %2652 = vmatpush1.bf16.msra.mxu0 %v2627
        %2653 = vmatprep.subr.bf16.mxu0 0
        %2654 = vmatpush1.bf16.msra.mxu0 %v2626
        %2655 = vmatprep.subr.bf16.mxu0 0
        %2656 = vmatpush1.bf16.msra.mxu0 %v2625
        %2657 = vmatprep.subr.bf16.mxu0 0
        %2658 = vmatpush2.bf16.msra.mxu0 0
        %2659 = vmatprep.subr.bf16.mxu0 0
        %2660 = vmatpush2.bf16.msra.mxu0 0
        %2661 = vmatprep.subr.bf16.mxu0 0
        %2662 = vmatpush2.bf16.msra.mxu0 0
        %2663 = vmatprep.subr.bf16.mxu0 0
        %2664 = vmatpush2.bf16.msra.mxu0 0
        %2665 = vmatprep.subr.bf16.mxu0 0
        %2666 = vmatpush2.bf16.msra.mxu0 0
        %2667 = vmatprep.subr.bf16.mxu0 0
        %2668 = vmatpush2.bf16.msra.mxu0 0
        %2669 = vmatprep.subr.bf16.mxu0 0
        %2670 = vmatpush2.bf16.msra.mxu0 0
        %2671 = vmatprep.subr.bf16.mxu0 0
        %2672 = vmatpush2.bf16.msra.mxu0 0
        %2673 = vmatprep.mubr.bf16.mxu0 0
        %2674 = vmatmul.mubr.bf16.gmra.mxu0 %v2562
        %v2675 = vpop.f32.mrf.mxu0
        %v2676 = vadd.f32 %v2591, %v2675
        %v2677 = vpop.f32.mrf.mxu0
        %v2678 = vpop.f32.mrf.mxu0
        %v2679 = vadd.f32 %v2591, %v2678
        %v2680 = vpop.f32.mrf.mxu0
        %2681 = vmatprep.mubr.bf16.mxu0 0
        %2682 = vmatmul.mubr.bf16.gmra.mxu0 %v2563
        %v2683 = vpop.f32.mrf.mxu0
        %v2684 = vadd.f32 %v2591, %v2683
        %v2685 = vpop.f32.mrf.mxu0
        %v2686 = vpop.f32.mrf.mxu0
        %v2687 = vadd.f32 %v2591, %v2686
        %v2688 = vpop.f32.mrf.mxu0
        %2689 = vmatprep.mubr.bf16.mxu0 0
        %2690 = vmatmul.mubr.bf16.gmra.mxu0 %v2564
        %v2691 = vpop.f32.mrf.mxu0
        %v2692 = vadd.f32 %v2591, %v2691
        %v2693 = vpop.f32.mrf.mxu0
        %v2694 = vpop.f32.mrf.mxu0
        %v2695 = vadd.f32 %v2591, %v2694
        %v2696 = vpop.f32.mrf.mxu0
        %2697 = vmatprep.mubr.bf16.mxu0 0
        %2698 = vmatmul.mubr.bf16.gmra.mxu0 %v2565
        %v2699 = vpop.f32.mrf.mxu0
        %v2700 = vadd.f32 %v2591, %v2699
        %v2701 = vpop.f32.mrf.mxu0
        %v2702 = vpop.f32.mrf.mxu0
        %v2703 = vadd.f32 %v2591, %v2702
        %v2704 = vpop.f32.mrf.mxu0
        %2705 = vmatprep.mubr.bf16.mxu0 0
        %2706 = vmatmul.mubr.bf16.gmra.mxu0 %v2566
        %v2707 = vpop.f32.mrf.mxu0
        %v2708 = vadd.f32 %v2591, %v2707
        %v2709 = vpop.f32.mrf.mxu0
        %v2710 = vpop.f32.mrf.mxu0
        %v2711 = vadd.f32 %v2591, %v2710
        %v2712 = vpop.f32.mrf.mxu0
        %2713 = vmatprep.mubr.bf16.mxu0 0
        %2714 = vmatmul.mubr.bf16.gmra.mxu0 %v2567
        %v2715 = vpop.f32.mrf.mxu0
        %v2716 = vadd.f32 %v2591, %v2715
        %v2717 = vpop.f32.mrf.mxu0
        %v2718 = vpop.f32.mrf.mxu0
        %v2719 = vadd.f32 %v2591, %v2718
        %v2720 = vpop.f32.mrf.mxu0
        %2721 = vmatprep.mubr.bf16.mxu0 0
        %2722 = vmatmul.mubr.bf16.gmra.mxu0 %v2568
        %v2723 = vpop.f32.mrf.mxu0
        %v2724 = vadd.f32 %v2591, %v2723
        %v2725 = vpop.f32.mrf.mxu0
        %v2726 = vpop.f32.mrf.mxu0
        %v2727 = vadd.f32 %v2591, %v2726
        %v2728 = vpop.f32.mrf.mxu0
        %2729 = vmatprep.mubr.bf16.mxu0 0
        %2730 = vmatmul.mubr.bf16.gmra.mxu0 %v2569
        %v2731 = vpop.f32.mrf.mxu0
        %v2732 = vadd.f32 %v2591, %v2731
        %v2733 = vpop.f32.mrf.mxu0
        %v2734 = vpop.f32.mrf.mxu0
        %v2735 = vadd.f32 %v2591, %v2734
        %v2736 = vpop.f32.mrf.mxu0
        %2737 = vdwg.mxu0
        %v2738 = vlaneseq
        %v2739 = vand.u32 %v2738, 127
        %vm2740 = vcmp.ge.s32.totalorder %v2739, 4
        %vm2741 = vcmp.lt.s32.totalorder %v2739, 8
        %vm2742 = vmand %vm2740, %vm2741
        %v2743 = vmax.f32 %v2676, -10.0
        %v2744 = vmax.f32 %v2679, -10.0
        %v2745 = vmax.f32 %v2684, -10.0
        %v2746 = vmax.f32 %v2687, -10.0
        %v2747 = vmax.f32 %v2692, -10.0
        %v2748 = vmax.f32 %v2695, -10.0
        %v2749 = vmax.f32 %v2700, -10.0
        %v2750 = vmax.f32 %v2703, -10.0
        %v2751 = vmax.f32 %v2708, -10.0
        %v2752 = vmax.f32 %v2711, -10.0
        %v2753 = vmax.f32 %v2716, -10.0
        %v2754 = vmax.f32 %v2719, -10.0
        %v2755 = vmax.f32 %v2724, -10.0
        %v2756 = vmax.f32 %v2727, -10.0
        %v2757 = vmax.f32 %v2732, -10.0
        %v2758 = vmax.f32 %v2735, -10.0
        %v2759 = vmin.f32 %v2743, 2.0
        %v2760 = vmin.f32 %v2744, 2.0
        %v2761 = vmin.f32 %v2745, 2.0
        %v2762 = vmin.f32 %v2746, 2.0
        %v2763 = vmin.f32 %v2747, 2.0
        %v2764 = vmin.f32 %v2748, 2.0
        %v2765 = vmin.f32 %v2749, 2.0
        %v2766 = vmin.f32 %v2750, 2.0
        %v2767 = vmin.f32 %v2751, 2.0
        %v2768 = vmin.f32 %v2752, 2.0
        %v2769 = vmin.f32 %v2753, 2.0
        %v2770 = vmin.f32 %v2754, 2.0
        %v2771 = vmin.f32 %v2755, 2.0
        %v2772 = vmin.f32 %v2756, 2.0
        %v2773 = vmin.f32 %v2757, 2.0
        %v2774 = vmin.f32 %v2758, 2.0
        %v2775 = vsel %vm2742, %v2759, %v2676
        %v2776 = vsel %vm2742, %v2760, %v2679
        %v2777 = vsel %vm2742, %v2761, %v2684
        %v2778 = vsel %vm2742, %v2762, %v2687
        %v2779 = vsel %vm2742, %v2763, %v2692
        %v2780 = vsel %vm2742, %v2764, %v2695
        %v2781 = vsel %vm2742, %v2765, %v2700
        %v2782 = vsel %vm2742, %v2766, %v2703
        %v2783 = vsel %vm2742, %v2767, %v2708
        %v2784 = vsel %vm2742, %v2768, %v2711
        %v2785 = vsel %vm2742, %v2769, %v2716
        %v2786 = vsel %vm2742, %v2770, %v2719
        %v2787 = vsel %vm2742, %v2771, %v2724
        %v2788 = vsel %vm2742, %v2772, %v2727
        %v2789 = vsel %vm2742, %v2773, %v2732
        %v2790 = vsel %vm2742, %v2774, %v2735
        %2791 = vst [vmem:[%s693] sm:$0xff] %v2775
        %2792 = vst [vmem:[%s693 + $0x8] sm:$0xff] %v2776
        %2793 = vst [vmem:[%s693 + $0x10] sm:$0xff] %v2777
        %2794 = vst [vmem:[%s693 + $0x18] sm:$0xff] %v2778
        %2795 = vst [vmem:[%s693 + $0x20] sm:$0xff] %v2779
        %2796 = vst [vmem:[%s693 + $0x28] sm:$0xff] %v2780
        %2797 = vst [vmem:[%s693 + $0x30] sm:$0xff] %v2781
        %2798 = vst [vmem:[%s693 + $0x38] sm:$0xff] %v2782
        %2799 = vst [vmem:[%s693 + $0x40] sm:$0xff] %v2783
        %2800 = vst [vmem:[%s693 + $0x48] sm:$0xff] %v2784
        %2801 = vst [vmem:[%s693 + $0x50] sm:$0xff] %v2785
        %2802 = vst [vmem:[%s693 + $0x58] sm:$0xff] %v2786
        %2803 = vst [vmem:[%s693 + $0x60] sm:$0xff] %v2787
        %2804 = vst [vmem:[%s693 + $0x68] sm:$0xff] %v2788
        %2805 = vst [vmem:[%s693 + $0x70] sm:$0xff] %v2789
        %2806 = vst [vmem:[%s693 + $0x78] sm:$0xff] %v2790
        %s2807 = sand.u32 %s451, 1
        %s2808 = scalar_lea.sflag [#allocation4], %s2807
        %s2809 = sand.u32 %s451, 1
        %s2810 = smul.addr %s2809, 128
        %s2811 = scalar_lea.vmem [#allocation13], %s2810
        // Predicated region
        $region121: #{tpu_custom_call.1} parent=95 // pred_check
          %p2812 = pneg %p461
        $region122: #{tpu_custom_call.1} parent=95 // pred_check_branch
          %2814 = sbr.rel (%p2812) target = $region124
        $region123: #{tpu_custom_call.1} parent=95 // pred_region
          %s2815 = smul.u32 16, %s39
          %s2817 = ssub.s32 2048, 2048
          %2818 = vsyncadd %s2808, %s2817
          %s2819 = smul.addr %s2815, 128
          %s2820 = scalar_lea.hbm %s19, %s2819
          %s2821 = sshll.u32 %s2811, 4
          %s2822 = int_to_ptr.vmem [resolvable:$true] %s2821
          %2827 = dma.vmem_to_hbm [thread:$0]  %s2822, 2048, %s2820, %s2808, 128, 128, 8
        $region124: #{tpu_custom_call.1} parent=95 // pred_fallthru
          _
      $region96: #{tpu_custom_call.1} parent=5 // pred_fallthru
        _
      %p2828 = scmp.le.s32.totalorder 2, %s34
      // Predicated region
      $region125: #{tpu_custom_call.1} parent=5 // pred_check
        %p2829 = pneg %p2828
      $region126: #{tpu_custom_call.1} parent=5 // pred_check_branch
        %2831 = sbr.rel (%p2829) target = $region128
      $region127: #{tpu_custom_call.1} parent=5 // pred_region
        %s2832 = ssub.s32 %s34, 2
        // Predicated region
        $region129: #{tpu_custom_call.1} parent=127 // pred_check
          %p2833 = pneg %p467
        $region130: #{tpu_custom_call.1} parent=127 // pred_check_branch
          %2835 = sbr.rel (%p2833) target = $region132
        $region131: #{tpu_custom_call.1} parent=127 // pred_region
          %s2836 = sand.u32 %s452, 1
          %s2837 = scalar_lea.sflag [#allocation4], %s2836
          %s2838 = sand.u32 %s452, 1
          %s2839 = smul.addr %s2838, 128
          %s2840 = scalar_lea.vmem [#allocation13], %s2839
          %2841 = dma.done %s2837, 2048
        $region132: #{tpu_custom_call.1} parent=127 // pred_fallthru
          _
      $region128: #{tpu_custom_call.1} parent=5 // pred_fallthru
        _
    $region6: #{tpu_custom_call.1} parent=1 // loop_footer
      %s38 = sadd.s32 1, %s34
    $region7: #{tpu_custom_call.1} parent=1 // loop_footer_branch
      %33 = sbr.rel target = $region3
    $region8: #{tpu_custom_call.1} parent=1 // loop_exit
      _
    %2842 = vsyncpa [#allocation3], 1
    %s2843 = scalar_lea.sflag [#allocation3], 1
    %2844 = vsyncpa %s2843, 1
    %2845 = vsyncpa [#allocation6], 1
    %2846 = vsyncpa [#allocation9], 1
    %2847 = vsyncpa [#allocation12], 1
    %2848 = vsyncpa [#allocation4], 1
    %s2849 = scalar_lea.sflag [#allocation4], 1
    %2850 = vsyncpa %s2849, 1

</llo_original>
